<compile_context>
chip_gen: v7x
topology: tpu7x:2x2x1
jax: 0.10.0
libtpu: 0.0.40
codegen_flags: <defaults>
</compile_context>

<pallas_src>
import functools

import jax
import jax.numpy as jnp
from jax.experimental import pallas as pl
from jax.experimental.pallas import tpu as pltpu

# dtype used for the MXU matmuls (accumulation is always f32).  bfloat16 is native
# on v6e/v7x MXUs and halves weight bytes; set to jnp.float32 for exact-f32 math.
MATMUL_DTYPE = jnp.bfloat16


# ----------------------------------------------------------------------------
# Shared GRU recurrence body (all refs are 2-D, time-major flattened: row = t*B + b)
#   x_ref    : (T*B, D)         w_ih_ref : (3, D, H)      w_hh_ref : (3, H, H)
#   b_*_ref  : (3, 1, H)        h_out_ref / gi_*_ref : (T*B, H)
# ----------------------------------------------------------------------------
def _gru_recurrence(x_ref, w_ih_ref, w_hh_ref, b_ih_ref, b_hh_ref,
                    h_out_ref, gi_r_ref, gi_z_ref, gi_n_ref,
                    seq_len, batch):
    hid = h_out_ref.shape[-1]
    cdt = w_ih_ref.dtype                         # MXU matmul dtype (bf16 by default)

    # --- Hoisted input projection: one MXU-friendly batched matmul per gate. ---
    x2d = x_ref[...].astype(cdt)                 # (T*B, D)
    gi_r_ref[...] = jnp.dot(x2d, w_ih_ref[0], preferred_element_type=jnp.float32) + b_ih_ref[0]
    gi_z_ref[...] = jnp.dot(x2d, w_ih_ref[1], preferred_element_type=jnp.float32) + b_ih_ref[1]
    gi_n_ref[...] = jnp.dot(x2d, w_ih_ref[2], preferred_element_type=jnp.float32) + b_ih_ref[2]

    # --- Sequential part: only the tiny (B,H) @ (H,H) hidden matmuls remain. ---
    def step(t, h):
        row = t * batch
        hb = h.astype(cdt)
        gh_r = jnp.dot(hb, w_hh_ref[0], preferred_element_type=jnp.float32) + b_hh_ref[0]
        gh_z = jnp.dot(hb, w_hh_ref[1], preferred_element_type=jnp.float32) + b_hh_ref[1]
        gh_n = jnp.dot(hb, w_hh_ref[2], preferred_element_type=jnp.float32) + b_hh_ref[2]
        # sigmoid/tanh go to the EUP slot, effectively free next to the matmuls.
        r = jax.nn.sigmoid(gi_r_ref[pl.ds(row, batch), :] + gh_r)
        z = jax.nn.sigmoid(gi_z_ref[pl.ds(row, batch), :] + gh_z)
        n = jnp.tanh(gi_n_ref[pl.ds(row, batch), :] + r * gh_n)
        h_new = (1.0 - z) * n + z * h
        h_out_ref[pl.ds(row, batch), :] = h_new.astype(h_out_ref.dtype)
        return h_new

    h0 = jnp.zeros((batch, hid), jnp.float32)
    jax.lax.fori_loop(0, seq_len, step, h0, unroll=min(seq_len, 8))


def _gru_kernel(x_ref, w_ih_ref, w_hh_ref, b_ih_ref, b_hh_ref,
                h_out_ref, gi_r_ref, gi_z_ref, gi_n_ref, *, seq_len, batch):
    _gru_recurrence(x_ref, w_ih_ref, w_hh_ref, b_ih_ref, b_hh_ref,
                    h_out_ref, gi_r_ref, gi_z_ref, gi_n_ref, seq_len, batch)


def _gru_heads_kernel(x_ref, w_ih_ref, w_hh_ref, b_ih_ref, b_hh_ref,
                      w_head_ref, b_head_ref,
                      h_out_ref, head_out_ref,
                      gi_r_ref, gi_z_ref, gi_n_ref, *, seq_len, batch):
    _gru_recurrence(x_ref, w_ih_ref, w_hh_ref, b_ih_ref, b_hh_ref,
                    h_out_ref, gi_r_ref, gi_z_ref, gi_n_ref, seq_len, batch)
    # Fused, lane-padded output heads: the hidden sequence is consumed straight from
    # VMEM (no HBM round-trip) and the (T*B, F_pad) store is fully lane-dense.
    h_all = h_out_ref[...].astype(w_head_ref.dtype)
    head_out_ref[...] = (
        jnp.dot(h_all, w_head_ref[...], preferred_element_type=jnp.float32)
        + b_head_ref[...]
    ).astype(head_out_ref.dtype)


def _compiler_params():
    return pltpu.CompilerParams(
        dimension_semantics=("arbitrary",),      # single sequential invocation
        vmem_limit_bytes=64 * 1024 * 1024,       # explicit budget (fits v7x's 64 MiB)
    )


# ----------------------------------------------------------------------------
# pallas_call wrappers
# ----------------------------------------------------------------------------
def gru_layer(x2d, layer_params, *, seq_len, batch):
    """One GRU layer over the whole sequence in a single kernel invocation.

    x2d: (T*B, D) time-major flattened input. Returns (T*B, H) float32.
    """
    n_rows, d_in = x2d.shape
    hid = layer_params["w_hh"].shape[-1]
    kernel = functools.partial(_gru_kernel, seq_len=seq_len, batch=batch)
    return pl.pallas_call(
        kernel,
        out_shape=jax.ShapeDtypeStruct((n_rows, hid), jnp.float32),
        grid_spec=pltpu.PrefetchScalarGridSpec(
            num_scalar_prefetch=0,
            grid=(1,),
            in_specs=[
                pl.BlockSpec((n_rows, d_in), lambda i: (0, 0)),
                pl.BlockSpec((3, d_in, hid), lambda i: (0, 0, 0)),
                pl.BlockSpec((3, hid, hid), lambda i: (0, 0, 0)),
                pl.BlockSpec((3, 1, hid), lambda i: (0, 0, 0)),
                pl.BlockSpec((3, 1, hid), lambda i: (0, 0, 0)),
            ],
            out_specs=pl.BlockSpec((n_rows, hid), lambda i: (0, 0)),
            scratch_shapes=[
                pltpu.VMEM((n_rows, hid), jnp.float32),
                pltpu.VMEM((n_rows, hid), jnp.float32),
                pltpu.VMEM((n_rows, hid), jnp.float32),
            ],
        ),
        compiler_params=_compiler_params(),
    )(x2d, layer_params["w_ih"], layer_params["w_hh"],
      layer_params["b_ih"], layer_params["b_hh"])


def gru_layer_with_heads(x2d, layer_params, w_head, b_head, *, seq_len, batch):
    """Last GRU layer fused with the concatenated (class ++ pose) output heads.

    Returns (hidden (T*B, H) float32, head_out (T*B, F_pad) float32).
    """
    n_rows, d_in = x2d.shape
    hid = layer_params["w_hh"].shape[-1]
    f_pad = w_head.shape[-1]
    kernel = functools.partial(_gru_heads_kernel, seq_len=seq_len, batch=batch)
    return pl.pallas_call(
        kernel,
        out_shape=(jax.ShapeDtypeStruct((n_rows, hid), jnp.float32),
                   jax.ShapeDtypeStruct((n_rows, f_pad), jnp.float32)),
        grid_spec=pltpu.PrefetchScalarGridSpec(
            num_scalar_prefetch=0,
            grid=(1,),
            in_specs=[
                pl.BlockSpec((n_rows, d_in), lambda i: (0, 0)),
                pl.BlockSpec((3, d_in, hid), lambda i: (0, 0, 0)),
                pl.BlockSpec((3, hid, hid), lambda i: (0, 0, 0)),
                pl.BlockSpec((3, 1, hid), lambda i: (0, 0, 0)),
                pl.BlockSpec((3, 1, hid), lambda i: (0, 0, 0)),
                pl.BlockSpec((hid, f_pad), lambda i: (0, 0)),
                pl.BlockSpec((1, f_pad), lambda i: (0, 0)),
            ],
            out_specs=(pl.BlockSpec((n_rows, hid), lambda i: (0, 0)),
                       pl.BlockSpec((n_rows, f_pad), lambda i: (0, 0))),
            scratch_shapes=[
                pltpu.VMEM((n_rows, hid), jnp.float32),
                pltpu.VMEM((n_rows, hid), jnp.float32),
                pltpu.VMEM((n_rows, hid), jnp.float32),
            ],
        ),
        compiler_params=_compiler_params(),
    )(x2d, layer_params["w_ih"], layer_params["w_hh"],
      layer_params["b_ih"], layer_params["b_hh"], w_head, b_head)


# ----------------------------------------------------------------------------
# Parameters + forward, mirroring the PyTorch decoder used by Seq2Seq.
# ----------------------------------------------------------------------------
def init_decoder_params(key, input_size, hid_dim, n_class, n_layers, n_pose,
                        matmul_dtype=MATMUL_DTYPE):
    bound = 1.0 / (hid_dim ** 0.5)
    keys = jax.random.split(key, 4 * n_layers + 4)
    ki = 0
    layers = []
    for layer in range(n_layers):
        d_in = input_size if layer == 0 else hid_dim
        w_ih = jax.random.uniform(keys[ki], (3 * hid_dim, d_in), jnp.float32, -bound, bound); ki += 1
        w_hh = jax.random.uniform(keys[ki], (3 * hid_dim, hid_dim), jnp.float32, -bound, bound); ki += 1
        b_ih = jax.random.uniform(keys[ki], (3 * hid_dim,), jnp.float32, -bound, bound); ki += 1
        b_hh = jax.random.uniform(keys[ki], (3 * hid_dim,), jnp.float32, -bound, bound); ki += 1
        # PyTorch gate order (r, z, n).  Store per-gate and transposed so the MXU
        # matmul is (rows, D) @ (D, H) and gate slices never cut a vreg mid-lane.
        layers.append({
            "w_ih": jnp.transpose(w_ih.reshape(3, hid_dim, d_in), (0, 2, 1)).astype(matmul_dtype),
            "w_hh": jnp.transpose(w_hh.reshape(3, hid_dim, hid_dim), (0, 2, 1)).astype(matmul_dtype),
            "b_ih": b_ih.reshape(3, 1, hid_dim),
            "b_hh": b_hh.reshape(3, 1, hid_dim),
        })
    # Fused output heads: concat (class, pose) along features, pad to a multiple of
    # 128 lanes so the head store is fully lane-dense (no masked vst).
    w_c = jax.random.uniform(keys[ki], (n_class, hid_dim), jnp.float32, -bound, bound); ki += 1
    b_c = jax.random.uniform(keys[ki], (n_class,), jnp.float32, -bound, bound); ki += 1
    w_p = jax.random.uniform(keys[ki], (n_pose, hid_dim), jnp.float32, -bound, bound); ki += 1
    b_p = jax.random.uniform(keys[ki], (n_pose,), jnp.float32, -bound, bound); ki += 1
    n_out = n_class + n_pose
    f_pad = ((n_out + 127) // 128) * 128
    w_head = jnp.zeros((hid_dim, f_pad), jnp.float32)
    w_head = w_head.at[:, :n_class].set(w_c.T)
    w_head = w_head.at[:, n_class:n_out].set(w_p.T)
    b_head = jnp.zeros((1, f_pad), jnp.float32)
    b_head = b_head.at[0, :n_class].set(b_c)
    b_head = b_head.at[0, n_class:n_out].set(b_p)
    return {"gru": layers, "head": {"w": w_head.astype(matmul_dtype), "b": b_head}}


@functools.partial(jax.jit, static_argnums=(2, 3))
def decoder_forward(params, x, n_class, n_pose, hidden=None):
    """Matches Decoder.forward: (x, hidden) -> (class_out, pose_out, hidden).

    `hidden` is accepted but ignored (the PyTorch forward passes None to the GRU);
    the returned `hidden` is the full per-timestep GRU output, as in the module.
    """
    del hidden
    seq_len, batch, d_in = x.shape
    h2d = x.reshape(seq_len * batch, d_in)          # time-major flatten (free in XLA)
    for layer_params in params["gru"][:-1]:
        h2d = gru_layer(h2d, layer_params, seq_len=seq_len, batch=batch)
    h2d, head = gru_layer_with_heads(h2d, params["gru"][-1],
                                     params["head"]["w"], params["head"]["b"],
                                     seq_len=seq_len, batch=batch)
    hid = h2d.shape[-1]
    class_out = head[:, :n_class].reshape(seq_len, batch, n_class)
    pose_out = head[:, n_class:n_class + n_pose].reshape(seq_len, batch, n_pose)
    return class_out, pose_out, h2d.reshape(seq_len, batch, hid)


# ----------------------------------------------------------------------------
# Pure-JAX reference (same per-gate / bf16-cast math, no Pallas) for sanity checks.
# ----------------------------------------------------------------------------
def decoder_forward_ref(params, x, n_class, n_pose):
    seq_len, batch, _ = x.shape
    h_seq = x
    for lp in params["gru"]:
        w_ih, w_hh, b_ih, b_hh = lp["w_ih"], lp["w_hh"], lp["b_ih"], lp["b_hh"]
        hid = w_hh.shape[-1]
        cdt = w_ih.dtype

        def step(h, x_t, w_ih=w_ih, w_hh=w_hh, b_ih=b_ih, b_hh=b_hh, cdt=cdt):
            xb = x_t.astype(cdt)
            hb = h.astype(cdt)
            gi = [jnp.dot(xb, w_ih[g], preferred_element_type=jnp.float32) + b_ih[g]
                  for g in range(3)]
            gh = [jnp.dot(hb, w_hh[g], preferred_element_type=jnp.float32) + b_hh[g]
                  for g in range(3)]
            r = jax.nn.sigmoid(gi[0] + gh[0])
            z = jax.nn.sigmoid(gi[1] + gh[1])
            n = jnp.tanh(gi[2] + r * gh[2])
            h_new = (1.0 - z) * n + z * h
            return h_new, h_new

        h0 = jnp.zeros((batch, hid), jnp.float32)
        _, h_seq = jax.lax.scan(step, h0, h_seq)
    hid = h_seq.shape[-1]
    flat = h_seq.reshape(seq_len * batch, hid).astype(params["head"]["w"].dtype)
    head = jnp.dot(flat, params["head"]["w"],
                   preferred_element_type=jnp.float32) + params["head"]["b"]
    class_out = head[:, :n_class].reshape(seq_len, batch, n_class)
    pose_out = head[:, n_class:n_class + n_pose].reshape(seq_len, batch, n_pose)
    return class_out, pose_out, h_seq


if __name__ == "__main__":
    # Small shapes consistent with the module's decoder forward.
    T, B = 8, 2
    input_size, hid_dim, n_class, n_layers, n_pose = 16, 32, 8, 2, 12

    key = jax.random.PRNGKey(0)
    kp, kx = jax.random.split(key)
    params = init_decoder_params(kp, input_size, hid_dim, n_class, n_layers, n_pose)
    x = jax.random.normal(kx, (T, B, input_size), jnp.float32)

    class_out, pose_out, hidden = decoder_forward(params, x, n_class, n_pose)
    jax.block_until_ready((class_out, pose_out, hidden))

    # Sanity check against a pure-JAX reference doing the same (bf16-weight) math.
    c_ref, p_ref, h_ref = decoder_forward_ref(params, x, n_class, n_pose)
    assert class_out.shape == (T, B, n_class)
    assert pose_out.shape == (T, B, n_pose)
    assert hidden.shape == (T, B, hid_dim)
    tol = dict(atol=1e-2, rtol=1e-2)
    assert jnp.allclose(hidden, h_ref, **tol), "GRU hidden mismatch"
    assert jnp.allclose(class_out, c_ref, **tol), "class head mismatch"
    assert jnp.allclose(pose_out, p_ref, **tol), "pose head mismatch"

    print("KERNEL_OK")
</pallas_src>

<mosaic_0001>
module attributes {stable_mosaic.version = 11 : i64} {
  func.func @_gru_heads_kernel(%arg0: i32, %arg1: memref<16x32xf32, #tpu.memory_space<vmem>>, %arg2: memref<3x32x32xbf16, #tpu.memory_space<vmem>>, %arg3: memref<3x32x32xbf16, #tpu.memory_space<vmem>>, %arg4: memref<3x1x32xf32, #tpu.memory_space<vmem>>, %arg5: memref<3x1x32xf32, #tpu.memory_space<vmem>>, %arg6: memref<32x128xbf16, #tpu.memory_space<vmem>>, %arg7: memref<1x128xf32, #tpu.memory_space<vmem>>, %arg8: memref<16x32xf32, #tpu.memory_space<vmem>>, %arg9: memref<16x128xf32, #tpu.memory_space<vmem>>, %arg10: memref<16x32xf32, #tpu.memory_space<vmem>>, %arg11: memref<16x32xf32, #tpu.memory_space<vmem>>, %arg12: memref<16x32xf32, #tpu.memory_space<vmem>>) attributes {dimension_semantics = [#tpu.dimension_semantics<arbitrary>], iteration_bounds = array<i64: 1>, scalar_prefetch = 0 : i64, scratch_operands = 3 : i64, tpu.core_type = #tpu.core_type<tc>, window_params = [{pipeline_mode = #tpu.pipeline_mode<synchronous>, transform_indices = @transform_0, window_bounds = array<i64: 16, 32>}, {pipeline_mode = #tpu.pipeline_mode<synchronous>, transform_indices = @transform_1, window_bounds = array<i64: 3, 32, 32>}, {pipeline_mode = #tpu.pipeline_mode<synchronous>, transform_indices = @transform_2, window_bounds = array<i64: 3, 32, 32>}, {pipeline_mode = #tpu.pipeline_mode<synchronous>, transform_indices = @transform_3, window_bounds = array<i64: 3, 1, 32>}, {pipeline_mode = #tpu.pipeline_mode<synchronous>, transform_indices = @transform_4, window_bounds = array<i64: 3, 1, 32>}, {pipeline_mode = #tpu.pipeline_mode<synchronous>, transform_indices = @transform_5, window_bounds = array<i64: 32, 128>}, {pipeline_mode = #tpu.pipeline_mode<synchronous>, transform_indices = @transform_6, window_bounds = array<i64: 1, 128>}, {pipeline_mode = #tpu.pipeline_mode<synchronous>, transform_indices = @transform_7, window_bounds = array<i64: 16, 32>}, {pipeline_mode = #tpu.pipeline_mode<synchronous>, transform_indices = @transform_8, window_bounds = array<i64: 16, 128>}]} {
    %c0 = arith.constant 0 : index
    %c0_0 = arith.constant 0 : index
    %0 = vector.load %arg1[%c0, %c0_0] : memref<16x32xf32, #tpu.memory_space<vmem>>, vector<16x32xf32>
    %1 = arith.truncf %0 : vector<16x32xf32> to vector<16x32xbf16>
    %c0_1 = arith.constant 0 : index
    %c0_2 = arith.constant 0 : index
    %c0_3 = arith.constant 0 : index
    %2 = vector.load %arg2[%c0_1, %c0_2, %c0_3] : memref<3x32x32xbf16, #tpu.memory_space<vmem>>, vector<1x32x32xbf16>
    %3 = vector.shape_cast %2 : vector<1x32x32xbf16> to vector<32x32xbf16>
    %cst = arith.constant dense<0.000000e+00> : vector<16x32xf32>
    %4 = tpu.matmul %1, %3, %cst {dimension_numbers = #tpu.dot_dimension_numbers<[1], [0], [0], [1], [0, 0, 1, 1], [], []>} : vector<16x32xbf16>, vector<32x32xbf16>, vector<16x32xf32> -> vector<16x32xf32>
    %c0_4 = arith.constant 0 : index
    %c0_5 = arith.constant 0 : index
    %c0_6 = arith.constant 0 : index
    %5 = vector.load %arg4[%c0_4, %c0_5, %c0_6] : memref<3x1x32xf32, #tpu.memory_space<vmem>>, vector<1x1x32xf32>
    %6 = vector.shape_cast %5 : vector<1x1x32xf32> to vector<1x32xf32>
    %7 = vector.broadcast %6 : vector<1x32xf32> to vector<16x32xf32>
    %8 = arith.addf %4, %7 : vector<16x32xf32>
    %c0_7 = arith.constant 0 : index
    %c0_8 = arith.constant 0 : index
    %9 = vector.load %arg10[%c0_7, %c0_8] : memref<16x32xf32, #tpu.memory_space<vmem>>, vector<16x32xf32>
    tpu.vector_store %arg10[%c0_7, %c0_8], %8 {strides = array<i32>} : memref<16x32xf32, #tpu.memory_space<vmem>>, vector<16x32xf32>,
    %c1 = arith.constant 1 : index
    %c0_9 = arith.constant 0 : index
    %c0_10 = arith.constant 0 : index
    %10 = vector.load %arg2[%c1, %c0_9, %c0_10] : memref<3x32x32xbf16, #tpu.memory_space<vmem>>, vector<1x32x32xbf16>
    %11 = vector.shape_cast %10 : vector<1x32x32xbf16> to vector<32x32xbf16>
    %cst_11 = arith.constant dense<0.000000e+00> : vector<16x32xf32>
    %12 = tpu.matmul %1, %11, %cst_11 {dimension_numbers = #tpu.dot_dimension_numbers<[1], [0], [0], [1], [0, 0, 1, 1], [], []>} : vector<16x32xbf16>, vector<32x32xbf16>, vector<16x32xf32> -> vector<16x32xf32>
    %c1_12 = arith.constant 1 : index
    %c0_13 = arith.constant 0 : index
    %c0_14 = arith.constant 0 : index
    %13 = vector.load %arg4[%c1_12, %c0_13, %c0_14] : memref<3x1x32xf32, #tpu.memory_space<vmem>>, vector<1x1x32xf32>
    %14 = vector.shape_cast %13 : vector<1x1x32xf32> to vector<1x32xf32>
    %15 = vector.broadcast %14 : vector<1x32xf32> to vector<16x32xf32>
    %16 = arith.addf %12, %15 : vector<16x32xf32>
    %c0_15 = arith.constant 0 : index
    %c0_16 = arith.constant 0 : index
    %17 = vector.load %arg11[%c0_15, %c0_16] : memref<16x32xf32, #tpu.memory_space<vmem>>, vector<16x32xf32>
    tpu.vector_store %arg11[%c0_15, %c0_16], %16 {strides = array<i32>} : memref<16x32xf32, #tpu.memory_space<vmem>>, vector<16x32xf32>,
    %c2 = arith.constant 2 : index
    %c0_17 = arith.constant 0 : index
    %c0_18 = arith.constant 0 : index
    %18 = vector.load %arg2[%c2, %c0_17, %c0_18] : memref<3x32x32xbf16, #tpu.memory_space<vmem>>, vector<1x32x32xbf16>
    %19 = vector.shape_cast %18 : vector<1x32x32xbf16> to vector<32x32xbf16>
    %cst_19 = arith.constant dense<0.000000e+00> : vector<16x32xf32>
    %20 = tpu.matmul %1, %19, %cst_19 {dimension_numbers = #tpu.dot_dimension_numbers<[1], [0], [0], [1], [0, 0, 1, 1], [], []>} : vector<16x32xbf16>, vector<32x32xbf16>, vector<16x32xf32> -> vector<16x32xf32>
    %c2_20 = arith.constant 2 : index
    %c0_21 = arith.constant 0 : index
    %c0_22 = arith.constant 0 : index
    %21 = vector.load %arg4[%c2_20, %c0_21, %c0_22] : memref<3x1x32xf32, #tpu.memory_space<vmem>>, vector<1x1x32xf32>
    %22 = vector.shape_cast %21 : vector<1x1x32xf32> to vector<1x32xf32>
    %23 = vector.broadcast %22 : vector<1x32xf32> to vector<16x32xf32>
    %24 = arith.addf %20, %23 : vector<16x32xf32>
    %c0_23 = arith.constant 0 : index
    %c0_24 = arith.constant 0 : index
    %25 = vector.load %arg12[%c0_23, %c0_24] : memref<16x32xf32, #tpu.memory_space<vmem>>, vector<16x32xf32>
    tpu.vector_store %arg12[%c0_23, %c0_24], %24 {strides = array<i32>} : memref<16x32xf32, #tpu.memory_space<vmem>>, vector<16x32xf32>,
    %cst_25 = arith.constant 0.000000e+00 : f32
    %26 = vector.broadcast %cst_25 : f32 to vector<2x32xf32>
    %c0_i32 = arith.constant 0 : i32
    %c2_i32 = arith.constant 2 : i32
    %27 = arith.muli %c0_i32, %c2_i32 : i32
    %28 = arith.truncf %26 : vector<2x32xf32> to vector<2x32xbf16>
    %c0_26 = arith.constant 0 : index
    %c0_27 = arith.constant 0 : index
    %c0_28 = arith.constant 0 : index
    %29 = vector.load %arg3[%c0_26, %c0_27, %c0_28] : memref<3x32x32xbf16, #tpu.memory_space<vmem>>, vector<1x32x32xbf16>
    %30 = vector.shape_cast %29 : vector<1x32x32xbf16> to vector<32x32xbf16>
    %cst_29 = arith.constant dense<0.000000e+00> : vector<2x32xf32>
    %31 = tpu.matmul %28, %30, %cst_29 {dimension_numbers = #tpu.dot_dimension_numbers<[1], [0], [0], [1], [0, 0, 1, 1], [], []>} : vector<2x32xbf16>, vector<32x32xbf16>, vector<2x32xf32> -> vector<2x32xf32>
    %c0_30 = arith.constant 0 : index
    %c0_31 = arith.constant 0 : index
    %c0_32 = arith.constant 0 : index
    %32 = vector.load %arg5[%c0_30, %c0_31, %c0_32] : memref<3x1x32xf32, #tpu.memory_space<vmem>>, vector<1x1x32xf32>
    %33 = vector.shape_cast %32 : vector<1x1x32xf32> to vector<1x32xf32>
    %34 = vector.broadcast %33 : vector<1x32xf32> to vector<2x32xf32>
    %35 = arith.addf %31, %34 : vector<2x32xf32>
    %c1_33 = arith.constant 1 : index
    %c0_34 = arith.constant 0 : index
    %c0_35 = arith.constant 0 : index
    %36 = vector.load %arg3[%c1_33, %c0_34, %c0_35] : memref<3x32x32xbf16, #tpu.memory_space<vmem>>, vector<1x32x32xbf16>
    %37 = vector.shape_cast %36 : vector<1x32x32xbf16> to vector<32x32xbf16>
    %cst_36 = arith.constant dense<0.000000e+00> : vector<2x32xf32>
    %38 = tpu.matmul %28, %37, %cst_36 {dimension_numbers = #tpu.dot_dimension_numbers<[1], [0], [0], [1], [0, 0, 1, 1], [], []>} : vector<2x32xbf16>, vector<32x32xbf16>, vector<2x32xf32> -> vector<2x32xf32>
    %c1_37 = arith.constant 1 : index
    %c0_38 = arith.constant 0 : index
    %c0_39 = arith.constant 0 : index
    %39 = vector.load %arg5[%c1_37, %c0_38, %c0_39] : memref<3x1x32xf32, #tpu.memory_space<vmem>>, vector<1x1x32xf32>
    %40 = vector.shape_cast %39 : vector<1x1x32xf32> to vector<1x32xf32>
    %41 = vector.broadcast %40 : vector<1x32xf32> to vector<2x32xf32>
    %42 = arith.addf %38, %41 : vector<2x32xf32>
    %c2_40 = arith.constant 2 : index
    %c0_41 = arith.constant 0 : index
    %c0_42 = arith.constant 0 : index
    %43 = vector.load %arg3[%c2_40, %c0_41, %c0_42] : memref<3x32x32xbf16, #tpu.memory_space<vmem>>, vector<1x32x32xbf16>
    %44 = vector.shape_cast %43 : vector<1x32x32xbf16> to vector<32x32xbf16>
    %cst_43 = arith.constant dense<0.000000e+00> : vector<2x32xf32>
    %45 = tpu.matmul %28, %44, %cst_43 {dimension_numbers = #tpu.dot_dimension_numbers<[1], [0], [0], [1], [0, 0, 1, 1], [], []>} : vector<2x32xbf16>, vector<32x32xbf16>, vector<2x32xf32> -> vector<2x32xf32>
    %c2_44 = arith.constant 2 : index
    %c0_45 = arith.constant 0 : index
    %c0_46 = arith.constant 0 : index
    %46 = vector.load %arg5[%c2_44, %c0_45, %c0_46] : memref<3x1x32xf32, #tpu.memory_space<vmem>>, vector<1x1x32xf32>
    %47 = vector.shape_cast %46 : vector<1x1x32xf32> to vector<1x32xf32>
    %48 = vector.broadcast %47 : vector<1x32xf32> to vector<2x32xf32>
    %49 = arith.addf %45, %48 : vector<2x32xf32>
    %50 = arith.index_cast %27 : i32 to index
    %c0_47 = arith.constant 0 : index
    %51 = vector.load %arg10[%50, %c0_47] : memref<16x32xf32, #tpu.memory_space<vmem>>, vector<2x32xf32>
    %52 = arith.addf %51, %35 : vector<2x32xf32>
    %53 = arith.negf %52 : vector<2x32xf32>
    %54 = math.exp %53 : vector<2x32xf32>
    %cst_48 = arith.constant 1.000000e+00 : f32
    %55 = vector.broadcast %cst_48 : f32 to vector<2x32xf32>
    %56 = arith.addf %55, %54 : vector<2x32xf32>
    %57 = arith.divf %55, %56 : vector<2x32xf32>
    %58 = arith.index_cast %27 : i32 to index
    %c0_49 = arith.constant 0 : index
    %59 = vector.load %arg11[%58, %c0_49] : memref<16x32xf32, #tpu.memory_space<vmem>>, vector<2x32xf32>
    %60 = arith.addf %59, %42 : vector<2x32xf32>
    %61 = arith.negf %60 : vector<2x32xf32>
    %62 = math.exp %61 : vector<2x32xf32>
    %cst_50 = arith.constant 1.000000e+00 : f32
    %63 = vector.broadcast %cst_50 : f32 to vector<2x32xf32>
    %64 = arith.addf %63, %62 : vector<2x32xf32>
    %65 = arith.divf %63, %64 : vector<2x32xf32>
    %66 = arith.index_cast %27 : i32 to index
    %c0_51 = arith.constant 0 : index
    %67 = vector.load %arg12[%66, %c0_51] : memref<16x32xf32, #tpu.memory_space<vmem>>, vector<2x32xf32>
    %68 = arith.mulf %57, %49 : vector<2x32xf32>
    %69 = arith.addf %67, %68 : vector<2x32xf32>
    %70 = math.tanh %69 : vector<2x32xf32>
    %cst_52 = arith.constant 1.000000e+00 : f32
    %71 = vector.broadcast %cst_52 : f32 to vector<2x32xf32>
    %72 = arith.subf %71, %65 : vector<2x32xf32>
    %73 = arith.mulf %72, %70 : vector<2x32xf32>
    %74 = arith.mulf %65, %26 : vector<2x32xf32>
    %75 = arith.addf %73, %74 : vector<2x32xf32>
    %76 = arith.index_cast %27 : i32 to index
    %c0_53 = arith.constant 0 : index
    %77 = vector.load %arg8[%76, %c0_53] : memref<16x32xf32, #tpu.memory_space<vmem>>, vector<2x32xf32>
    tpu.vector_store %arg8[%76, %c0_53], %75 {strides = array<i32>} : memref<16x32xf32, #tpu.memory_space<vmem>>, vector<2x32xf32>,
    %c1_i32 = arith.constant 1 : i32
    %c2_i32_54 = arith.constant 2 : i32
    %78 = arith.muli %c1_i32, %c2_i32_54 : i32
    %79 = arith.truncf %75 : vector<2x32xf32> to vector<2x32xbf16>
    %c0_55 = arith.constant 0 : index
    %c0_56 = arith.constant 0 : index
    %c0_57 = arith.constant 0 : index
    %80 = vector.load %arg3[%c0_55, %c0_56, %c0_57] : memref<3x32x32xbf16, #tpu.memory_space<vmem>>, vector<1x32x32xbf16>
    %81 = vector.shape_cast %80 : vector<1x32x32xbf16> to vector<32x32xbf16>
    %cst_58 = arith.constant dense<0.000000e+00> : vector<2x32xf32>
    %82 = tpu.matmul %79, %81, %cst_58 {dimension_numbers = #tpu.dot_dimension_numbers<[1], [0], [0], [1], [0, 0, 1, 1], [], []>} : vector<2x32xbf16>, vector<32x32xbf16>, vector<2x32xf32> -> vector<2x32xf32>
    %c0_59 = arith.constant 0 : index
    %c0_60 = arith.constant 0 : index
    %c0_61 = arith.constant 0 : index
    %83 = vector.load %arg5[%c0_59, %c0_60, %c0_61] : memref<3x1x32xf32, #tpu.memory_space<vmem>>, vector<1x1x32xf32>
    %84 = vector.shape_cast %83 : vector<1x1x32xf32> to vector<1x32xf32>
    %85 = vector.broadcast %84 : vector<1x32xf32> to vector<2x32xf32>
    %86 = arith.addf %82, %85 : vector<2x32xf32>
    %c1_62 = arith.constant 1 : index
    %c0_63 = arith.constant 0 : index
    %c0_64 = arith.constant 0 : index
    %87 = vector.load %arg3[%c1_62, %c0_63, %c0_64] : memref<3x32x32xbf16, #tpu.memory_space<vmem>>, vector<1x32x32xbf16>
    %88 = vector.shape_cast %87 : vector<1x32x32xbf16> to vector<32x32xbf16>
    %cst_65 = arith.constant dense<0.000000e+00> : vector<2x32xf32>
    %89 = tpu.matmul %79, %88, %cst_65 {dimension_numbers = #tpu.dot_dimension_numbers<[1], [0], [0], [1], [0, 0, 1, 1], [], []>} : vector<2x32xbf16>, vector<32x32xbf16>, vector<2x32xf32> -> vector<2x32xf32>
    %c1_66 = arith.constant 1 : index
    %c0_67 = arith.constant 0 : index
    %c0_68 = arith.constant 0 : index
    %90 = vector.load %arg5[%c1_66, %c0_67, %c0_68] : memref<3x1x32xf32, #tpu.memory_space<vmem>>, vector<1x1x32xf32>
    %91 = vector.shape_cast %90 : vector<1x1x32xf32> to vector<1x32xf32>
    %92 = vector.broadcast %91 : vector<1x32xf32> to vector<2x32xf32>
    %93 = arith.addf %89, %92 : vector<2x32xf32>
    %c2_69 = arith.constant 2 : index
    %c0_70 = arith.constant 0 : index
    %c0_71 = arith.constant 0 : index
    %94 = vector.load %arg3[%c2_69, %c0_70, %c0_71] : memref<3x32x32xbf16, #tpu.memory_space<vmem>>, vector<1x32x32xbf16>
    %95 = vector.shape_cast %94 : vector<1x32x32xbf16> to vector<32x32xbf16>
    %cst_72 = arith.constant dense<0.000000e+00> : vector<2x32xf32>
    %96 = tpu.matmul %79, %95, %cst_72 {dimension_numbers = #tpu.dot_dimension_numbers<[1], [0], [0], [1], [0, 0, 1, 1], [], []>} : vector<2x32xbf16>, vector<32x32xbf16>, vector<2x32xf32> -> vector<2x32xf32>
    %c2_73 = arith.constant 2 : index
    %c0_74 = arith.constant 0 : index
    %c0_75 = arith.constant 0 : index
    %97 = vector.load %arg5[%c2_73, %c0_74, %c0_75] : memref<3x1x32xf32, #tpu.memory_space<vmem>>, vector<1x1x32xf32>
    %98 = vector.shape_cast %97 : vector<1x1x32xf32> to vector<1x32xf32>
    %99 = vector.broadcast %98 : vector<1x32xf32> to vector<2x32xf32>
    %100 = arith.addf %96, %99 : vector<2x32xf32>
    %101 = arith.index_cast %78 : i32 to index
    %c0_76 = arith.constant 0 : index
    %102 = vector.load %arg10[%101, %c0_76] : memref<16x32xf32, #tpu.memory_space<vmem>>, vector<2x32xf32>
    %103 = arith.addf %102, %86 : vector<2x32xf32>
    %104 = arith.negf %103 : vector<2x32xf32>
    %105 = math.exp %104 : vector<2x32xf32>
    %cst_77 = arith.constant 1.000000e+00 : f32
    %106 = vector.broadcast %cst_77 : f32 to vector<2x32xf32>
    %107 = arith.addf %106, %105 : vector<2x32xf32>
    %108 = arith.divf %106, %107 : vector<2x32xf32>
    %109 = arith.index_cast %78 : i32 to index
    %c0_78 = arith.constant 0 : index
    %110 = vector.load %arg11[%109, %c0_78] : memref<16x32xf32, #tpu.memory_space<vmem>>, vector<2x32xf32>
    %111 = arith.addf %110, %93 : vector<2x32xf32>
    %112 = arith.negf %111 : vector<2x32xf32>
    %113 = math.exp %112 : vector<2x32xf32>
    %cst_79 = arith.constant 1.000000e+00 : f32
    %114 = vector.broadcast %cst_79 : f32 to vector<2x32xf32>
    %115 = arith.addf %114, %113 : vector<2x32xf32>
    %116 = arith.divf %114, %115 : vector<2x32xf32>
    %117 = arith.index_cast %78 : i32 to index
    %c0_80 = arith.constant 0 : index
    %118 = vector.load %arg12[%117, %c0_80] : memref<16x32xf32, #tpu.memory_space<vmem>>, vector<2x32xf32>
    %119 = arith.mulf %108, %100 : vector<2x32xf32>
    %120 = arith.addf %118, %119 : vector<2x32xf32>
    %121 = math.tanh %120 : vector<2x32xf32>
    %cst_81 = arith.constant 1.000000e+00 : f32
    %122 = vector.broadcast %cst_81 : f32 to vector<2x32xf32>
    %123 = arith.subf %122, %116 : vector<2x32xf32>
    %124 = arith.mulf %123, %121 : vector<2x32xf32>
    %125 = arith.mulf %116, %75 : vector<2x32xf32>
    %126 = arith.addf %124, %125 : vector<2x32xf32>
    %127 = arith.index_cast %78 : i32 to index
    %c0_82 = arith.constant 0 : index
    %128 = vector.load %arg8[%127, %c0_82] : memref<16x32xf32, #tpu.memory_space<vmem>>, vector<2x32xf32>
    tpu.vector_store %arg8[%127, %c0_82], %126 {strides = array<i32>} : memref<16x32xf32, #tpu.memory_space<vmem>>, vector<2x32xf32>,
    %c2_i32_83 = arith.constant 2 : i32
    %c2_i32_84 = arith.constant 2 : i32
    %129 = arith.muli %c2_i32_83, %c2_i32_84 : i32
    %130 = arith.truncf %126 : vector<2x32xf32> to vector<2x32xbf16>
    %c0_85 = arith.constant 0 : index
    %c0_86 = arith.constant 0 : index
    %c0_87 = arith.constant 0 : index
    %131 = vector.load %arg3[%c0_85, %c0_86, %c0_87] : memref<3x32x32xbf16, #tpu.memory_space<vmem>>, vector<1x32x32xbf16>
    %132 = vector.shape_cast %131 : vector<1x32x32xbf16> to vector<32x32xbf16>
    %cst_88 = arith.constant dense<0.000000e+00> : vector<2x32xf32>
    %133 = tpu.matmul %130, %132, %cst_88 {dimension_numbers = #tpu.dot_dimension_numbers<[1], [0], [0], [1], [0, 0, 1, 1], [], []>} : vector<2x32xbf16>, vector<32x32xbf16>, vector<2x32xf32> -> vector<2x32xf32>
    %c0_89 = arith.constant 0 : index
    %c0_90 = arith.constant 0 : index
    %c0_91 = arith.constant 0 : index
    %134 = vector.load %arg5[%c0_89, %c0_90, %c0_91] : memref<3x1x32xf32, #tpu.memory_space<vmem>>, vector<1x1x32xf32>
    %135 = vector.shape_cast %134 : vector<1x1x32xf32> to vector<1x32xf32>
    %136 = vector.broadcast %135 : vector<1x32xf32> to vector<2x32xf32>
    %137 = arith.addf %133, %136 : vector<2x32xf32>
    %c1_92 = arith.constant 1 : index
    %c0_93 = arith.constant 0 : index
    %c0_94 = arith.constant 0 : index
    %138 = vector.load %arg3[%c1_92, %c0_93, %c0_94] : memref<3x32x32xbf16, #tpu.memory_space<vmem>>, vector<1x32x32xbf16>
    %139 = vector.shape_cast %138 : vector<1x32x32xbf16> to vector<32x32xbf16>
    %cst_95 = arith.constant dense<0.000000e+00> : vector<2x32xf32>
    %140 = tpu.matmul %130, %139, %cst_95 {dimension_numbers = #tpu.dot_dimension_numbers<[1], [0], [0], [1], [0, 0, 1, 1], [], []>} : vector<2x32xbf16>, vector<32x32xbf16>, vector<2x32xf32> -> vector<2x32xf32>
    %c1_96 = arith.constant 1 : index
    %c0_97 = arith.constant 0 : index
    %c0_98 = arith.constant 0 : index
    %141 = vector.load %arg5[%c1_96, %c0_97, %c0_98] : memref<3x1x32xf32, #tpu.memory_space<vmem>>, vector<1x1x32xf32>
    %142 = vector.shape_cast %141 : vector<1x1x32xf32> to vector<1x32xf32>
    %143 = vector.broadcast %142 : vector<1x32xf32> to vector<2x32xf32>
    %144 = arith.addf %140, %143 : vector<2x32xf32>
    %c2_99 = arith.constant 2 : index
    %c0_100 = arith.constant 0 : index
    %c0_101 = arith.constant 0 : index
    %145 = vector.load %arg3[%c2_99, %c0_100, %c0_101] : memref<3x32x32xbf16, #tpu.memory_space<vmem>>, vector<1x32x32xbf16>
    %146 = vector.shape_cast %145 : vector<1x32x32xbf16> to vector<32x32xbf16>
    %cst_102 = arith.constant dense<0.000000e+00> : vector<2x32xf32>
    %147 = tpu.matmul %130, %146, %cst_102 {dimension_numbers = #tpu.dot_dimension_numbers<[1], [0], [0], [1], [0, 0, 1, 1], [], []>} : vector<2x32xbf16>, vector<32x32xbf16>, vector<2x32xf32> -> vector<2x32xf32>
    %c2_103 = arith.constant 2 : index
    %c0_104 = arith.constant 0 : index
    %c0_105 = arith.constant 0 : index
    %148 = vector.load %arg5[%c2_103, %c0_104, %c0_105] : memref<3x1x32xf32, #tpu.memory_space<vmem>>, vector<1x1x32xf32>
    %149 = vector.shape_cast %148 : vector<1x1x32xf32> to vector<1x32xf32>
    %150 = vector.broadcast %149 : vector<1x32xf32> to vector<2x32xf32>
    %151 = arith.addf %147, %150 : vector<2x32xf32>
    %152 = arith.index_cast %129 : i32 to index
    %c0_106 = arith.constant 0 : index
    %153 = vector.load %arg10[%152, %c0_106] : memref<16x32xf32, #tpu.memory_space<vmem>>, vector<2x32xf32>
    %154 = arith.addf %153, %137 : vector<2x32xf32>
    %155 = arith.negf %154 : vector<2x32xf32>
    %156 = math.exp %155 : vector<2x32xf32>
    %cst_107 = arith.constant 1.000000e+00 : f32
    %157 = vector.broadcast %cst_107 : f32 to vector<2x32xf32>
    %158 = arith.addf %157, %156 : vector<2x32xf32>
    %159 = arith.divf %157, %158 : vector<2x32xf32>
    %160 = arith.index_cast %129 : i32 to index
    %c0_108 = arith.constant 0 : index
    %161 = vector.load %arg11[%160, %c0_108] : memref<16x32xf32, #tpu.memory_space<vmem>>, vector<2x32xf32>
    %162 = arith.addf %161, %144 : vector<2x32xf32>
    %163 = arith.negf %162 : vector<2x32xf32>
    %164 = math.exp %163 : vector<2x32xf32>
    %cst_109 = arith.constant 1.000000e+00 : f32
    %165 = vector.broadcast %cst_109 : f32 to vector<2x32xf32>
    %166 = arith.addf %165, %164 : vector<2x32xf32>
    %167 = arith.divf %165, %166 : vector<2x32xf32>
    %168 = arith.index_cast %129 : i32 to index
    %c0_110 = arith.constant 0 : index
    %169 = vector.load %arg12[%168, %c0_110] : memref<16x32xf32, #tpu.memory_space<vmem>>, vector<2x32xf32>
    %170 = arith.mulf %159, %151 : vector<2x32xf32>
    %171 = arith.addf %169, %170 : vector<2x32xf32>
    %172 = math.tanh %171 : vector<2x32xf32>
    %cst_111 = arith.constant 1.000000e+00 : f32
    %173 = vector.broadcast %cst_111 : f32 to vector<2x32xf32>
    %174 = arith.subf %173, %167 : vector<2x32xf32>
    %175 = arith.mulf %174, %172 : vector<2x32xf32>
    %176 = arith.mulf %167, %126 : vector<2x32xf32>
    %177 = arith.addf %175, %176 : vector<2x32xf32>
    %178 = arith.index_cast %129 : i32 to index
    %c0_112 = arith.constant 0 : index
    %179 = vector.load %arg8[%178, %c0_112] : memref<16x32xf32, #tpu.memory_space<vmem>>, vector<2x32xf32>
    tpu.vector_store %arg8[%178, %c0_112], %177 {strides = array<i32>} : memref<16x32xf32, #tpu.memory_space<vmem>>, vector<2x32xf32>,
    %c3_i32 = arith.constant 3 : i32
    %c2_i32_113 = arith.constant 2 : i32
    %180 = arith.muli %c3_i32, %c2_i32_113 : i32
    %181 = arith.truncf %177 : vector<2x32xf32> to vector<2x32xbf16>
    %c0_114 = arith.constant 0 : index
    %c0_115 = arith.constant 0 : index
    %c0_116 = arith.constant 0 : index
    %182 = vector.load %arg3[%c0_114, %c0_115, %c0_116] : memref<3x32x32xbf16, #tpu.memory_space<vmem>>, vector<1x32x32xbf16>
    %183 = vector.shape_cast %182 : vector<1x32x32xbf16> to vector<32x32xbf16>
    %cst_117 = arith.constant dense<0.000000e+00> : vector<2x32xf32>
    %184 = tpu.matmul %181, %183, %cst_117 {dimension_numbers = #tpu.dot_dimension_numbers<[1], [0], [0], [1], [0, 0, 1, 1], [], []>} : vector<2x32xbf16>, vector<32x32xbf16>, vector<2x32xf32> -> vector<2x32xf32>
    %c0_118 = arith.constant 0 : index
    %c0_119 = arith.constant 0 : index
    %c0_120 = arith.constant 0 : index
    %185 = vector.load %arg5[%c0_118, %c0_119, %c0_120] : memref<3x1x32xf32, #tpu.memory_space<vmem>>, vector<1x1x32xf32>
    %186 = vector.shape_cast %185 : vector<1x1x32xf32> to vector<1x32xf32>
    %187 = vector.broadcast %186 : vector<1x32xf32> to vector<2x32xf32>
    %188 = arith.addf %184, %187 : vector<2x32xf32>
    %c1_121 = arith.constant 1 : index
    %c0_122 = arith.constant 0 : index
    %c0_123 = arith.constant 0 : index
    %189 = vector.load %arg3[%c1_121, %c0_122, %c0_123] : memref<3x32x32xbf16, #tpu.memory_space<vmem>>, vector<1x32x32xbf16>
    %190 = vector.shape_cast %189 : vector<1x32x32xbf16> to vector<32x32xbf16>
    %cst_124 = arith.constant dense<0.000000e+00> : vector<2x32xf32>
    %191 = tpu.matmul %181, %190, %cst_124 {dimension_numbers = #tpu.dot_dimension_numbers<[1], [0], [0], [1], [0, 0, 1, 1], [], []>} : vector<2x32xbf16>, vector<32x32xbf16>, vector<2x32xf32> -> vector<2x32xf32>
    %c1_125 = arith.constant 1 : index
    %c0_126 = arith.constant 0 : index
    %c0_127 = arith.constant 0 : index
    %192 = vector.load %arg5[%c1_125, %c0_126, %c0_127] : memref<3x1x32xf32, #tpu.memory_space<vmem>>, vector<1x1x32xf32>
    %193 = vector.shape_cast %192 : vector<1x1x32xf32> to vector<1x32xf32>
    %194 = vector.broadcast %193 : vector<1x32xf32> to vector<2x32xf32>
    %195 = arith.addf %191, %194 : vector<2x32xf32>
    %c2_128 = arith.constant 2 : index
    %c0_129 = arith.constant 0 : index
    %c0_130 = arith.constant 0 : index
    %196 = vector.load %arg3[%c2_128, %c0_129, %c0_130] : memref<3x32x32xbf16, #tpu.memory_space<vmem>>, vector<1x32x32xbf16>
    %197 = vector.shape_cast %196 : vector<1x32x32xbf16> to vector<32x32xbf16>
    %cst_131 = arith.constant dense<0.000000e+00> : vector<2x32xf32>
    %198 = tpu.matmul %181, %197, %cst_131 {dimension_numbers = #tpu.dot_dimension_numbers<[1], [0], [0], [1], [0, 0, 1, 1], [], []>} : vector<2x32xbf16>, vector<32x32xbf16>, vector<2x32xf32> -> vector<2x32xf32>
    %c2_132 = arith.constant 2 : index
    %c0_133 = arith.constant 0 : index
    %c0_134 = arith.constant 0 : index
    %199 = vector.load %arg5[%c2_132, %c0_133, %c0_134] : memref<3x1x32xf32, #tpu.memory_space<vmem>>, vector<1x1x32xf32>
    %200 = vector.shape_cast %199 : vector<1x1x32xf32> to vector<1x32xf32>
    %201 = vector.broadcast %200 : vector<1x32xf32> to vector<2x32xf32>
    %202 = arith.addf %198, %201 : vector<2x32xf32>
    %203 = arith.index_cast %180 : i32 to index
    %c0_135 = arith.constant 0 : index
    %204 = vector.load %arg10[%203, %c0_135] : memref<16x32xf32, #tpu.memory_space<vmem>>, vector<2x32xf32>
    %205 = arith.addf %204, %188 : vector<2x32xf32>
    %206 = arith.negf %205 : vector<2x32xf32>
    %207 = math.exp %206 : vector<2x32xf32>
    %cst_136 = arith.constant 1.000000e+00 : f32
    %208 = vector.broadcast %cst_136 : f32 to vector<2x32xf32>
    %209 = arith.addf %208, %207 : vector<2x32xf32>
    %210 = arith.divf %208, %209 : vector<2x32xf32>
    %211 = arith.index_cast %180 : i32 to index
    %c0_137 = arith.constant 0 : index
    %212 = vector.load %arg11[%211, %c0_137] : memref<16x32xf32, #tpu.memory_space<vmem>>, vector<2x32xf32>
    %213 = arith.addf %212, %195 : vector<2x32xf32>
    %214 = arith.negf %213 : vector<2x32xf32>
    %215 = math.exp %214 : vector<2x32xf32>
    %cst_138 = arith.constant 1.000000e+00 : f32
    %216 = vector.broadcast %cst_138 : f32 to vector<2x32xf32>
    %217 = arith.addf %216, %215 : vector<2x32xf32>
    %218 = arith.divf %216, %217 : vector<2x32xf32>
    %219 = arith.index_cast %180 : i32 to index
    %c0_139 = arith.constant 0 : index
    %220 = vector.load %arg12[%219, %c0_139] : memref<16x32xf32, #tpu.memory_space<vmem>>, vector<2x32xf32>
    %221 = arith.mulf %210, %202 : vector<2x32xf32>
    %222 = arith.addf %220, %221 : vector<2x32xf32>
    %223 = math.tanh %222 : vector<2x32xf32>
    %cst_140 = arith.constant 1.000000e+00 : f32
    %224 = vector.broadcast %cst_140 : f32 to vector<2x32xf32>
    %225 = arith.subf %224, %218 : vector<2x32xf32>
    %226 = arith.mulf %225, %223 : vector<2x32xf32>
    %227 = arith.mulf %218, %177 : vector<2x32xf32>
    %228 = arith.addf %226, %227 : vector<2x32xf32>
    %229 = arith.index_cast %180 : i32 to index
    %c0_141 = arith.constant 0 : index
    %230 = vector.load %arg8[%229, %c0_141] : memref<16x32xf32, #tpu.memory_space<vmem>>, vector<2x32xf32>
    tpu.vector_store %arg8[%229, %c0_141], %228 {strides = array<i32>} : memref<16x32xf32, #tpu.memory_space<vmem>>, vector<2x32xf32>,
    %c4_i32 = arith.constant 4 : i32
    %c2_i32_142 = arith.constant 2 : i32
    %231 = arith.muli %c4_i32, %c2_i32_142 : i32
    %232 = arith.truncf %228 : vector<2x32xf32> to vector<2x32xbf16>
    %c0_143 = arith.constant 0 : index
    %c0_144 = arith.constant 0 : index
    %c0_145 = arith.constant 0 : index
    %233 = vector.load %arg3[%c0_143, %c0_144, %c0_145] : memref<3x32x32xbf16, #tpu.memory_space<vmem>>, vector<1x32x32xbf16>
    %234 = vector.shape_cast %233 : vector<1x32x32xbf16> to vector<32x32xbf16>
    %cst_146 = arith.constant dense<0.000000e+00> : vector<2x32xf32>
    %235 = tpu.matmul %232, %234, %cst_146 {dimension_numbers = #tpu.dot_dimension_numbers<[1], [0], [0], [1], [0, 0, 1, 1], [], []>} : vector<2x32xbf16>, vector<32x32xbf16>, vector<2x32xf32> -> vector<2x32xf32>
    %c0_147 = arith.constant 0 : index
    %c0_148 = arith.constant 0 : index
    %c0_149 = arith.constant 0 : index
    %236 = vector.load %arg5[%c0_147, %c0_148, %c0_149] : memref<3x1x32xf32, #tpu.memory_space<vmem>>, vector<1x1x32xf32>
    %237 = vector.shape_cast %236 : vector<1x1x32xf32> to vector<1x32xf32>
    %238 = vector.broadcast %237 : vector<1x32xf32> to vector<2x32xf32>
    %239 = arith.addf %235, %238 : vector<2x32xf32>
    %c1_150 = arith.constant 1 : index
    %c0_151 = arith.constant 0 : index
    %c0_152 = arith.constant 0 : index
    %240 = vector.load %arg3[%c1_150, %c0_151, %c0_152] : memref<3x32x32xbf16, #tpu.memory_space<vmem>>, vector<1x32x32xbf16>
    %241 = vector.shape_cast %240 : vector<1x32x32xbf16> to vector<32x32xbf16>
    %cst_153 = arith.constant dense<0.000000e+00> : vector<2x32xf32>
    %242 = tpu.matmul %232, %241, %cst_153 {dimension_numbers = #tpu.dot_dimension_numbers<[1], [0], [0], [1], [0, 0, 1, 1], [], []>} : vector<2x32xbf16>, vector<32x32xbf16>, vector<2x32xf32> -> vector<2x32xf32>
    %c1_154 = arith.constant 1 : index
    %c0_155 = arith.constant 0 : index
    %c0_156 = arith.constant 0 : index
    %243 = vector.load %arg5[%c1_154, %c0_155, %c0_156] : memref<3x1x32xf32, #tpu.memory_space<vmem>>, vector<1x1x32xf32>
    %244 = vector.shape_cast %243 : vector<1x1x32xf32> to vector<1x32xf32>
    %245 = vector.broadcast %244 : vector<1x32xf32> to vector<2x32xf32>
    %246 = arith.addf %242, %245 : vector<2x32xf32>
    %c2_157 = arith.constant 2 : index
    %c0_158 = arith.constant 0 : index
    %c0_159 = arith.constant 0 : index
    %247 = vector.load %arg3[%c2_157, %c0_158, %c0_159] : memref<3x32x32xbf16, #tpu.memory_space<vmem>>, vector<1x32x32xbf16>
    %248 = vector.shape_cast %247 : vector<1x32x32xbf16> to vector<32x32xbf16>
    %cst_160 = arith.constant dense<0.000000e+00> : vector<2x32xf32>
    %249 = tpu.matmul %232, %248, %cst_160 {dimension_numbers = #tpu.dot_dimension_numbers<[1], [0], [0], [1], [0, 0, 1, 1], [], []>} : vector<2x32xbf16>, vector<32x32xbf16>, vector<2x32xf32> -> vector<2x32xf32>
    %c2_161 = arith.constant 2 : index
    %c0_162 = arith.constant 0 : index
    %c0_163 = arith.constant 0 : index
    %250 = vector.load %arg5[%c2_161, %c0_162, %c0_163] : memref<3x1x32xf32, #tpu.memory_space<vmem>>, vector<1x1x32xf32>
    %251 = vector.shape_cast %250 : vector<1x1x32xf32> to vector<1x32xf32>
    %252 = vector.broadcast %251 : vector<1x32xf32> to vector<2x32xf32>
    %253 = arith.addf %249, %252 : vector<2x32xf32>
    %254 = arith.index_cast %231 : i32 to index
    %c0_164 = arith.constant 0 : index
    %255 = vector.load %arg10[%254, %c0_164] : memref<16x32xf32, #tpu.memory_space<vmem>>, vector<2x32xf32>
    %256 = arith.addf %255, %239 : vector<2x32xf32>
    %257 = arith.negf %256 : vector<2x32xf32>
    %258 = math.exp %257 : vector<2x32xf32>
    %cst_165 = arith.constant 1.000000e+00 : f32
    %259 = vector.broadcast %cst_165 : f32 to vector<2x32xf32>
    %260 = arith.addf %259, %258 : vector<2x32xf32>
    %261 = arith.divf %259, %260 : vector<2x32xf32>
    %262 = arith.index_cast %231 : i32 to index
    %c0_166 = arith.constant 0 : index
    %263 = vector.load %arg11[%262, %c0_166] : memref<16x32xf32, #tpu.memory_space<vmem>>, vector<2x32xf32>
    %264 = arith.addf %263, %246 : vector<2x32xf32>
    %265 = arith.negf %264 : vector<2x32xf32>
    %266 = math.exp %265 : vector<2x32xf32>
    %cst_167 = arith.constant 1.000000e+00 : f32
    %267 = vector.broadcast %cst_167 : f32 to vector<2x32xf32>
    %268 = arith.addf %267, %266 : vector<2x32xf32>
    %269 = arith.divf %267, %268 : vector<2x32xf32>
    %270 = arith.index_cast %231 : i32 to index
    %c0_168 = arith.constant 0 : index
    %271 = vector.load %arg12[%270, %c0_168] : memref<16x32xf32, #tpu.memory_space<vmem>>, vector<2x32xf32>
    %272 = arith.mulf %261, %253 : vector<2x32xf32>
    %273 = arith.addf %271, %272 : vector<2x32xf32>
    %274 = math.tanh %273 : vector<2x32xf32>
    %cst_169 = arith.constant 1.000000e+00 : f32
    %275 = vector.broadcast %cst_169 : f32 to vector<2x32xf32>
    %276 = arith.subf %275, %269 : vector<2x32xf32>
    %277 = arith.mulf %276, %274 : vector<2x32xf32>
    %278 = arith.mulf %269, %228 : vector<2x32xf32>
    %279 = arith.addf %277, %278 : vector<2x32xf32>
    %280 = arith.index_cast %231 : i32 to index
    %c0_170 = arith.constant 0 : index
    %281 = vector.load %arg8[%280, %c0_170] : memref<16x32xf32, #tpu.memory_space<vmem>>, vector<2x32xf32>
    tpu.vector_store %arg8[%280, %c0_170], %279 {strides = array<i32>} : memref<16x32xf32, #tpu.memory_space<vmem>>, vector<2x32xf32>,
    %c5_i32 = arith.constant 5 : i32
    %c2_i32_171 = arith.constant 2 : i32
    %282 = arith.muli %c5_i32, %c2_i32_171 : i32
    %283 = arith.truncf %279 : vector<2x32xf32> to vector<2x32xbf16>
    %c0_172 = arith.constant 0 : index
    %c0_173 = arith.constant 0 : index
    %c0_174 = arith.constant 0 : index
    %284 = vector.load %arg3[%c0_172, %c0_173, %c0_174] : memref<3x32x32xbf16, #tpu.memory_space<vmem>>, vector<1x32x32xbf16>
    %285 = vector.shape_cast %284 : vector<1x32x32xbf16> to vector<32x32xbf16>
    %cst_175 = arith.constant dense<0.000000e+00> : vector<2x32xf32>
    %286 = tpu.matmul %283, %285, %cst_175 {dimension_numbers = #tpu.dot_dimension_numbers<[1], [0], [0], [1], [0, 0, 1, 1], [], []>} : vector<2x32xbf16>, vector<32x32xbf16>, vector<2x32xf32> -> vector<2x32xf32>
    %c0_176 = arith.constant 0 : index
    %c0_177 = arith.constant 0 : index
    %c0_178 = arith.constant 0 : index
    %287 = vector.load %arg5[%c0_176, %c0_177, %c0_178] : memref<3x1x32xf32, #tpu.memory_space<vmem>>, vector<1x1x32xf32>
    %288 = vector.shape_cast %287 : vector<1x1x32xf32> to vector<1x32xf32>
    %289 = vector.broadcast %288 : vector<1x32xf32> to vector<2x32xf32>
    %290 = arith.addf %286, %289 : vector<2x32xf32>
    %c1_179 = arith.constant 1 : index
    %c0_180 = arith.constant 0 : index
    %c0_181 = arith.constant 0 : index
    %291 = vector.load %arg3[%c1_179, %c0_180, %c0_181] : memref<3x32x32xbf16, #tpu.memory_space<vmem>>, vector<1x32x32xbf16>
    %292 = vector.shape_cast %291 : vector<1x32x32xbf16> to vector<32x32xbf16>
    %cst_182 = arith.constant dense<0.000000e+00> : vector<2x32xf32>
    %293 = tpu.matmul %283, %292, %cst_182 {dimension_numbers = #tpu.dot_dimension_numbers<[1], [0], [0], [1], [0, 0, 1, 1], [], []>} : vector<2x32xbf16>, vector<32x32xbf16>, vector<2x32xf32> -> vector<2x32xf32>
    %c1_183 = arith.constant 1 : index
    %c0_184 = arith.constant 0 : index
    %c0_185 = arith.constant 0 : index
    %294 = vector.load %arg5[%c1_183, %c0_184, %c0_185] : memref<3x1x32xf32, #tpu.memory_space<vmem>>, vector<1x1x32xf32>
    %295 = vector.shape_cast %294 : vector<1x1x32xf32> to vector<1x32xf32>
    %296 = vector.broadcast %295 : vector<1x32xf32> to vector<2x32xf32>
    %297 = arith.addf %293, %296 : vector<2x32xf32>
    %c2_186 = arith.constant 2 : index
    %c0_187 = arith.constant 0 : index
    %c0_188 = arith.constant 0 : index
    %298 = vector.load %arg3[%c2_186, %c0_187, %c0_188] : memref<3x32x32xbf16, #tpu.memory_space<vmem>>, vector<1x32x32xbf16>
    %299 = vector.shape_cast %298 : vector<1x32x32xbf16> to vector<32x32xbf16>
    %cst_189 = arith.constant dense<0.000000e+00> : vector<2x32xf32>
    %300 = tpu.matmul %283, %299, %cst_189 {dimension_numbers = #tpu.dot_dimension_numbers<[1], [0], [0], [1], [0, 0, 1, 1], [], []>} : vector<2x32xbf16>, vector<32x32xbf16>, vector<2x32xf32> -> vector<2x32xf32>
    %c2_190 = arith.constant 2 : index
    %c0_191 = arith.constant 0 : index
    %c0_192 = arith.constant 0 : index
    %301 = vector.load %arg5[%c2_190, %c0_191, %c0_192] : memref<3x1x32xf32, #tpu.memory_space<vmem>>, vector<1x1x32xf32>
    %302 = vector.shape_cast %301 : vector<1x1x32xf32> to vector<1x32xf32>
    %303 = vector.broadcast %302 : vector<1x32xf32> to vector<2x32xf32>
    %304 = arith.addf %300, %303 : vector<2x32xf32>
    %305 = arith.index_cast %282 : i32 to index
    %c0_193 = arith.constant 0 : index
    %306 = vector.load %arg10[%305, %c0_193] : memref<16x32xf32, #tpu.memory_space<vmem>>, vector<2x32xf32>
    %307 = arith.addf %306, %290 : vector<2x32xf32>
    %308 = arith.negf %307 : vector<2x32xf32>
    %309 = math.exp %308 : vector<2x32xf32>
    %cst_194 = arith.constant 1.000000e+00 : f32
    %310 = vector.broadcast %cst_194 : f32 to vector<2x32xf32>
    %311 = arith.addf %310, %309 : vector<2x32xf32>
    %312 = arith.divf %310, %311 : vector<2x32xf32>
    %313 = arith.index_cast %282 : i32 to index
    %c0_195 = arith.constant 0 : index
    %314 = vector.load %arg11[%313, %c0_195] : memref<16x32xf32, #tpu.memory_space<vmem>>, vector<2x32xf32>
    %315 = arith.addf %314, %297 : vector<2x32xf32>
    %316 = arith.negf %315 : vector<2x32xf32>
    %317 = math.exp %316 : vector<2x32xf32>
    %cst_196 = arith.constant 1.000000e+00 : f32
    %318 = vector.broadcast %cst_196 : f32 to vector<2x32xf32>
    %319 = arith.addf %318, %317 : vector<2x32xf32>
    %320 = arith.divf %318, %319 : vector<2x32xf32>
    %321 = arith.index_cast %282 : i32 to index
    %c0_197 = arith.constant 0 : index
    %322 = vector.load %arg12[%321, %c0_197] : memref<16x32xf32, #tpu.memory_space<vmem>>, vector<2x32xf32>
    %323 = arith.mulf %312, %304 : vector<2x32xf32>
    %324 = arith.addf %322, %323 : vector<2x32xf32>
    %325 = math.tanh %324 : vector<2x32xf32>
    %cst_198 = arith.constant 1.000000e+00 : f32
    %326 = vector.broadcast %cst_198 : f32 to vector<2x32xf32>
    %327 = arith.subf %326, %320 : vector<2x32xf32>
    %328 = arith.mulf %327, %325 : vector<2x32xf32>
    %329 = arith.mulf %320, %279 : vector<2x32xf32>
    %330 = arith.addf %328, %329 : vector<2x32xf32>
    %331 = arith.index_cast %282 : i32 to index
    %c0_199 = arith.constant 0 : index
    %332 = vector.load %arg8[%331, %c0_199] : memref<16x32xf32, #tpu.memory_space<vmem>>, vector<2x32xf32>
    tpu.vector_store %arg8[%331, %c0_199], %330 {strides = array<i32>} : memref<16x32xf32, #tpu.memory_space<vmem>>, vector<2x32xf32>,
    %c6_i32 = arith.constant 6 : i32
    %c2_i32_200 = arith.constant 2 : i32
    %333 = arith.muli %c6_i32, %c2_i32_200 : i32
    %334 = arith.truncf %330 : vector<2x32xf32> to vector<2x32xbf16>
    %c0_201 = arith.constant 0 : index
    %c0_202 = arith.constant 0 : index
    %c0_203 = arith.constant 0 : index
    %335 = vector.load %arg3[%c0_201, %c0_202, %c0_203] : memref<3x32x32xbf16, #tpu.memory_space<vmem>>, vector<1x32x32xbf16>
    %336 = vector.shape_cast %335 : vector<1x32x32xbf16> to vector<32x32xbf16>
    %cst_204 = arith.constant dense<0.000000e+00> : vector<2x32xf32>
    %337 = tpu.matmul %334, %336, %cst_204 {dimension_numbers = #tpu.dot_dimension_numbers<[1], [0], [0], [1], [0, 0, 1, 1], [], []>} : vector<2x32xbf16>, vector<32x32xbf16>, vector<2x32xf32> -> vector<2x32xf32>
    %c0_205 = arith.constant 0 : index
    %c0_206 = arith.constant 0 : index
    %c0_207 = arith.constant 0 : index
    %338 = vector.load %arg5[%c0_205, %c0_206, %c0_207] : memref<3x1x32xf32, #tpu.memory_space<vmem>>, vector<1x1x32xf32>
    %339 = vector.shape_cast %338 : vector<1x1x32xf32> to vector<1x32xf32>
    %340 = vector.broadcast %339 : vector<1x32xf32> to vector<2x32xf32>
    %341 = arith.addf %337, %340 : vector<2x32xf32>
    %c1_208 = arith.constant 1 : index
    %c0_209 = arith.constant 0 : index
    %c0_210 = arith.constant 0 : index
    %342 = vector.load %arg3[%c1_208, %c0_209, %c0_210] : memref<3x32x32xbf16, #tpu.memory_space<vmem>>, vector<1x32x32xbf16>
    %343 = vector.shape_cast %342 : vector<1x32x32xbf16> to vector<32x32xbf16>
    %cst_211 = arith.constant dense<0.000000e+00> : vector<2x32xf32>
    %344 = tpu.matmul %334, %343, %cst_211 {dimension_numbers = #tpu.dot_dimension_numbers<[1], [0], [0], [1], [0, 0, 1, 1], [], []>} : vector<2x32xbf16>, vector<32x32xbf16>, vector<2x32xf32> -> vector<2x32xf32>
    %c1_212 = arith.constant 1 : index
    %c0_213 = arith.constant 0 : index
    %c0_214 = arith.constant 0 : index
    %345 = vector.load %arg5[%c1_212, %c0_213, %c0_214] : memref<3x1x32xf32, #tpu.memory_space<vmem>>, vector<1x1x32xf32>
    %346 = vector.shape_cast %345 : vector<1x1x32xf32> to vector<1x32xf32>
    %347 = vector.broadcast %346 : vector<1x32xf32> to vector<2x32xf32>
    %348 = arith.addf %344, %347 : vector<2x32xf32>
    %c2_215 = arith.constant 2 : index
    %c0_216 = arith.constant 0 : index
    %c0_217 = arith.constant 0 : index
    %349 = vector.load %arg3[%c2_215, %c0_216, %c0_217] : memref<3x32x32xbf16, #tpu.memory_space<vmem>>, vector<1x32x32xbf16>
    %350 = vector.shape_cast %349 : vector<1x32x32xbf16> to vector<32x32xbf16>
    %cst_218 = arith.constant dense<0.000000e+00> : vector<2x32xf32>
    %351 = tpu.matmul %334, %350, %cst_218 {dimension_numbers = #tpu.dot_dimension_numbers<[1], [0], [0], [1], [0, 0, 1, 1], [], []>} : vector<2x32xbf16>, vector<32x32xbf16>, vector<2x32xf32> -> vector<2x32xf32>
    %c2_219 = arith.constant 2 : index
    %c0_220 = arith.constant 0 : index
    %c0_221 = arith.constant 0 : index
    %352 = vector.load %arg5[%c2_219, %c0_220, %c0_221] : memref<3x1x32xf32, #tpu.memory_space<vmem>>, vector<1x1x32xf32>
    %353 = vector.shape_cast %352 : vector<1x1x32xf32> to vector<1x32xf32>
    %354 = vector.broadcast %353 : vector<1x32xf32> to vector<2x32xf32>
    %355 = arith.addf %351, %354 : vector<2x32xf32>
    %356 = arith.index_cast %333 : i32 to index
    %c0_222 = arith.constant 0 : index
    %357 = vector.load %arg10[%356, %c0_222] : memref<16x32xf32, #tpu.memory_space<vmem>>, vector<2x32xf32>
    %358 = arith.addf %357, %341 : vector<2x32xf32>
    %359 = arith.negf %358 : vector<2x32xf32>
    %360 = math.exp %359 : vector<2x32xf32>
    %cst_223 = arith.constant 1.000000e+00 : f32
    %361 = vector.broadcast %cst_223 : f32 to vector<2x32xf32>
    %362 = arith.addf %361, %360 : vector<2x32xf32>
    %363 = arith.divf %361, %362 : vector<2x32xf32>
    %364 = arith.index_cast %333 : i32 to index
    %c0_224 = arith.constant 0 : index
    %365 = vector.load %arg11[%364, %c0_224] : memref<16x32xf32, #tpu.memory_space<vmem>>, vector<2x32xf32>
    %366 = arith.addf %365, %348 : vector<2x32xf32>
    %367 = arith.negf %366 : vector<2x32xf32>
    %368 = math.exp %367 : vector<2x32xf32>
    %cst_225 = arith.constant 1.000000e+00 : f32
    %369 = vector.broadcast %cst_225 : f32 to vector<2x32xf32>
    %370 = arith.addf %369, %368 : vector<2x32xf32>
    %371 = arith.divf %369, %370 : vector<2x32xf32>
    %372 = arith.index_cast %333 : i32 to index
    %c0_226 = arith.constant 0 : index
    %373 = vector.load %arg12[%372, %c0_226] : memref<16x32xf32, #tpu.memory_space<vmem>>, vector<2x32xf32>
    %374 = arith.mulf %363, %355 : vector<2x32xf32>
    %375 = arith.addf %373, %374 : vector<2x32xf32>
    %376 = math.tanh %375 : vector<2x32xf32>
    %cst_227 = arith.constant 1.000000e+00 : f32
    %377 = vector.broadcast %cst_227 : f32 to vector<2x32xf32>
    %378 = arith.subf %377, %371 : vector<2x32xf32>
    %379 = arith.mulf %378, %376 : vector<2x32xf32>
    %380 = arith.mulf %371, %330 : vector<2x32xf32>
    %381 = arith.addf %379, %380 : vector<2x32xf32>
    %382 = arith.index_cast %333 : i32 to index
    %c0_228 = arith.constant 0 : index
    %383 = vector.load %arg8[%382, %c0_228] : memref<16x32xf32, #tpu.memory_space<vmem>>, vector<2x32xf32>
    tpu.vector_store %arg8[%382, %c0_228], %381 {strides = array<i32>} : memref<16x32xf32, #tpu.memory_space<vmem>>, vector<2x32xf32>,
    %c7_i32 = arith.constant 7 : i32
    %c2_i32_229 = arith.constant 2 : i32
    %384 = arith.muli %c7_i32, %c2_i32_229 : i32
    %385 = arith.truncf %381 : vector<2x32xf32> to vector<2x32xbf16>
    %c0_230 = arith.constant 0 : index
    %c0_231 = arith.constant 0 : index
    %c0_232 = arith.constant 0 : index
    %386 = vector.load %arg3[%c0_230, %c0_231, %c0_232] : memref<3x32x32xbf16, #tpu.memory_space<vmem>>, vector<1x32x32xbf16>
    %387 = vector.shape_cast %386 : vector<1x32x32xbf16> to vector<32x32xbf16>
    %cst_233 = arith.constant dense<0.000000e+00> : vector<2x32xf32>
    %388 = tpu.matmul %385, %387, %cst_233 {dimension_numbers = #tpu.dot_dimension_numbers<[1], [0], [0], [1], [0, 0, 1, 1], [], []>} : vector<2x32xbf16>, vector<32x32xbf16>, vector<2x32xf32> -> vector<2x32xf32>
    %c0_234 = arith.constant 0 : index
    %c0_235 = arith.constant 0 : index
    %c0_236 = arith.constant 0 : index
    %389 = vector.load %arg5[%c0_234, %c0_235, %c0_236] : memref<3x1x32xf32, #tpu.memory_space<vmem>>, vector<1x1x32xf32>
    %390 = vector.shape_cast %389 : vector<1x1x32xf32> to vector<1x32xf32>
    %391 = vector.broadcast %390 : vector<1x32xf32> to vector<2x32xf32>
    %392 = arith.addf %388, %391 : vector<2x32xf32>
    %c1_237 = arith.constant 1 : index
    %c0_238 = arith.constant 0 : index
    %c0_239 = arith.constant 0 : index
    %393 = vector.load %arg3[%c1_237, %c0_238, %c0_239] : memref<3x32x32xbf16, #tpu.memory_space<vmem>>, vector<1x32x32xbf16>
    %394 = vector.shape_cast %393 : vector<1x32x32xbf16> to vector<32x32xbf16>
    %cst_240 = arith.constant dense<0.000000e+00> : vector<2x32xf32>
    %395 = tpu.matmul %385, %394, %cst_240 {dimension_numbers = #tpu.dot_dimension_numbers<[1], [0], [0], [1], [0, 0, 1, 1], [], []>} : vector<2x32xbf16>, vector<32x32xbf16>, vector<2x32xf32> -> vector<2x32xf32>
    %c1_241 = arith.constant 1 : index
    %c0_242 = arith.constant 0 : index
    %c0_243 = arith.constant 0 : index
    %396 = vector.load %arg5[%c1_241, %c0_242, %c0_243] : memref<3x1x32xf32, #tpu.memory_space<vmem>>, vector<1x1x32xf32>
    %397 = vector.shape_cast %396 : vector<1x1x32xf32> to vector<1x32xf32>
    %398 = vector.broadcast %397 : vector<1x32xf32> to vector<2x32xf32>
    %399 = arith.addf %395, %398 : vector<2x32xf32>
    %c2_244 = arith.constant 2 : index
    %c0_245 = arith.constant 0 : index
    %c0_246 = arith.constant 0 : index
    %400 = vector.load %arg3[%c2_244, %c0_245, %c0_246] : memref<3x32x32xbf16, #tpu.memory_space<vmem>>, vector<1x32x32xbf16>
    %401 = vector.shape_cast %400 : vector<1x32x32xbf16> to vector<32x32xbf16>
    %cst_247 = arith.constant dense<0.000000e+00> : vector<2x32xf32>
    %402 = tpu.matmul %385, %401, %cst_247 {dimension_numbers = #tpu.dot_dimension_numbers<[1], [0], [0], [1], [0, 0, 1, 1], [], []>} : vector<2x32xbf16>, vector<32x32xbf16>, vector<2x32xf32> -> vector<2x32xf32>
    %c2_248 = arith.constant 2 : index
    %c0_249 = arith.constant 0 : index
    %c0_250 = arith.constant 0 : index
    %403 = vector.load %arg5[%c2_248, %c0_249, %c0_250] : memref<3x1x32xf32, #tpu.memory_space<vmem>>, vector<1x1x32xf32>
    %404 = vector.shape_cast %403 : vector<1x1x32xf32> to vector<1x32xf32>
    %405 = vector.broadcast %404 : vector<1x32xf32> to vector<2x32xf32>
    %406 = arith.addf %402, %405 : vector<2x32xf32>
    %407 = arith.index_cast %384 : i32 to index
    %c0_251 = arith.constant 0 : index
    %408 = vector.load %arg10[%407, %c0_251] : memref<16x32xf32, #tpu.memory_space<vmem>>, vector<2x32xf32>
    %409 = arith.addf %408, %392 : vector<2x32xf32>
    %410 = arith.negf %409 : vector<2x32xf32>
    %411 = math.exp %410 : vector<2x32xf32>
    %cst_252 = arith.constant 1.000000e+00 : f32
    %412 = vector.broadcast %cst_252 : f32 to vector<2x32xf32>
    %413 = arith.addf %412, %411 : vector<2x32xf32>
    %414 = arith.divf %412, %413 : vector<2x32xf32>
    %415 = arith.index_cast %384 : i32 to index
    %c0_253 = arith.constant 0 : index
    %416 = vector.load %arg11[%415, %c0_253] : memref<16x32xf32, #tpu.memory_space<vmem>>, vector<2x32xf32>
    %417 = arith.addf %416, %399 : vector<2x32xf32>
    %418 = arith.negf %417 : vector<2x32xf32>
    %419 = math.exp %418 : vector<2x32xf32>
    %cst_254 = arith.constant 1.000000e+00 : f32
    %420 = vector.broadcast %cst_254 : f32 to vector<2x32xf32>
    %421 = arith.addf %420, %419 : vector<2x32xf32>
    %422 = arith.divf %420, %421 : vector<2x32xf32>
    %423 = arith.index_cast %384 : i32 to index
    %c0_255 = arith.constant 0 : index
    %424 = vector.load %arg12[%423, %c0_255] : memref<16x32xf32, #tpu.memory_space<vmem>>, vector<2x32xf32>
    %425 = arith.mulf %414, %406 : vector<2x32xf32>
    %426 = arith.addf %424, %425 : vector<2x32xf32>
    %427 = math.tanh %426 : vector<2x32xf32>
    %cst_256 = arith.constant 1.000000e+00 : f32
    %428 = vector.broadcast %cst_256 : f32 to vector<2x32xf32>
    %429 = arith.subf %428, %422 : vector<2x32xf32>
    %430 = arith.mulf %429, %427 : vector<2x32xf32>
    %431 = arith.mulf %422, %381 : vector<2x32xf32>
    %432 = arith.addf %430, %431 : vector<2x32xf32>
    %433 = arith.index_cast %384 : i32 to index
    %c0_257 = arith.constant 0 : index
    %434 = vector.load %arg8[%433, %c0_257] : memref<16x32xf32, #tpu.memory_space<vmem>>, vector<2x32xf32>
    tpu.vector_store %arg8[%433, %c0_257], %432 {strides = array<i32>} : memref<16x32xf32, #tpu.memory_space<vmem>>, vector<2x32xf32>,
    %c8_i32 = arith.constant 8 : i32
    %c0_258 = arith.constant 0 : index
    %c0_259 = arith.constant 0 : index
    %435 = vector.load %arg8[%c0_258, %c0_259] : memref<16x32xf32, #tpu.memory_space<vmem>>, vector<16x32xf32>
    %436 = arith.truncf %435 : vector<16x32xf32> to vector<16x32xbf16>
    %c0_260 = arith.constant 0 : index
    %c0_261 = arith.constant 0 : index
    %437 = vector.load %arg6[%c0_260, %c0_261] : memref<32x128xbf16, #tpu.memory_space<vmem>>, vector<32x128xbf16>
    %cst_262 = arith.constant dense<0.000000e+00> : vector<16x128xf32>
    %438 = tpu.matmul %436, %437, %cst_262 {dimension_numbers = #tpu.dot_dimension_numbers<[1], [0], [0], [1], [0, 0, 1, 1], [], []>} : vector<16x32xbf16>, vector<32x128xbf16>, vector<16x128xf32> -> vector<16x128xf32>
    %c0_263 = arith.constant 0 : index
    %c0_264 = arith.constant 0 : index
    %439 = vector.load %arg7[%c0_263, %c0_264] : memref<1x128xf32, #tpu.memory_space<vmem>>, vector<1x128xf32>
    %440 = vector.broadcast %439 : vector<1x128xf32> to vector<16x128xf32>
    %441 = arith.addf %438, %440 : vector<16x128xf32>
    %c0_265 = arith.constant 0 : index
    %c0_266 = arith.constant 0 : index
    %442 = vector.load %arg9[%c0_265, %c0_266] : memref<16x128xf32, #tpu.memory_space<vmem>>, vector<16x128xf32>
    tpu.vector_store %arg9[%c0_265, %c0_266], %441 {strides = array<i32>} : memref<16x128xf32, #tpu.memory_space<vmem>>, vector<16x128xf32>,
    return
  }
  func.func @transform_0(%arg0: i32) -> (i32, i32) {
    %c0_i32 = arith.constant 0 : i32
    %c0_i32_0 = arith.constant 0 : i32
    %c0_i32_1 = arith.constant 0 : i32
    return %c0_i32, %c0_i32_0 : i32, i32
  }
  func.func @transform_1(%arg0: i32) -> (i32, i32, i32) {
    %c0_i32 = arith.constant 0 : i32
    %c0_i32_0 = arith.constant 0 : i32
    %c0_i32_1 = arith.constant 0 : i32
    %c0_i32_2 = arith.constant 0 : i32
    return %c0_i32, %c0_i32_0, %c0_i32_1 : i32, i32, i32
  }
  func.func @transform_2(%arg0: i32) -> (i32, i32, i32) {
    %c0_i32 = arith.constant 0 : i32
    %c0_i32_0 = arith.constant 0 : i32
    %c0_i32_1 = arith.constant 0 : i32
    %c0_i32_2 = arith.constant 0 : i32
    return %c0_i32, %c0_i32_0, %c0_i32_1 : i32, i32, i32
  }
  func.func @transform_3(%arg0: i32) -> (i32, i32, i32) {
    %c0_i32 = arith.constant 0 : i32
    %c0_i32_0 = arith.constant 0 : i32
    %c0_i32_1 = arith.constant 0 : i32
    %c0_i32_2 = arith.constant 0 : i32
    return %c0_i32, %c0_i32_0, %c0_i32_1 : i32, i32, i32
  }
  func.func @transform_4(%arg0: i32) -> (i32, i32, i32) {
    %c0_i32 = arith.constant 0 : i32
    %c0_i32_0 = arith.constant 0 : i32
    %c0_i32_1 = arith.constant 0 : i32
    %c0_i32_2 = arith.constant 0 : i32
    return %c0_i32, %c0_i32_0, %c0_i32_1 : i32, i32, i32
  }
  func.func @transform_5(%arg0: i32) -> (i32, i32) {
    %c0_i32 = arith.constant 0 : i32
    %c0_i32_0 = arith.constant 0 : i32
    %c0_i32_1 = arith.constant 0 : i32
    return %c0_i32, %c0_i32_0 : i32, i32
  }
  func.func @transform_6(%arg0: i32) -> (i32, i32) {
    %c0_i32 = arith.constant 0 : i32
    %c0_i32_0 = arith.constant 0 : i32
    %c0_i32_1 = arith.constant 0 : i32
    return %c0_i32, %c0_i32_0 : i32, i32
  }
  func.func @transform_7(%arg0: i32) -> (i32, i32) {
    %c0_i32 = arith.constant 0 : i32
    %c0_i32_0 = arith.constant 0 : i32
    %c0_i32_1 = arith.constant 0 : i32
    return %c0_i32, %c0_i32_0 : i32, i32
  }
  func.func @transform_8(%arg0: i32) -> (i32, i32) {
    %c0_i32 = arith.constant 0 : i32
    %c0_i32_0 = arith.constant 0 : i32
    %c0_i32_1 = arith.constant 0 : i32
    return %c0_i32, %c0_i32_0 : i32, i32
  }
}

module attributes {stable_mosaic.version = 11 : i64} {
  func.func @_gru_kernel(%arg0: i32, %arg1: memref<16x16xf32, #tpu.memory_space<vmem>>, %arg2: memref<3x16x32xbf16, #tpu.memory_space<vmem>>, %arg3: memref<3x32x32xbf16, #tpu.memory_space<vmem>>, %arg4: memref<3x1x32xf32, #tpu.memory_space<vmem>>, %arg5: memref<3x1x32xf32, #tpu.memory_space<vmem>>, %arg6: memref<16x32xf32, #tpu.memory_space<vmem>>, %arg7: memref<16x32xf32, #tpu.memory_space<vmem>>, %arg8: memref<16x32xf32, #tpu.memory_space<vmem>>, %arg9: memref<16x32xf32, #tpu.memory_space<vmem>>) attributes {dimension_semantics = [#tpu.dimension_semantics<arbitrary>], iteration_bounds = array<i64: 1>, scalar_prefetch = 0 : i64, scratch_operands = 3 : i64, tpu.core_type = #tpu.core_type<tc>, window_params = [{pipeline_mode = #tpu.pipeline_mode<synchronous>, transform_indices = @transform_0, window_bounds = array<i64: 16, 16>}, {pipeline_mode = #tpu.pipeline_mode<synchronous>, transform_indices = @transform_1, window_bounds = array<i64: 3, 16, 32>}, {pipeline_mode = #tpu.pipeline_mode<synchronous>, transform_indices = @transform_2, window_bounds = array<i64: 3, 32, 32>}, {pipeline_mode = #tpu.pipeline_mode<synchronous>, transform_indices = @transform_3, window_bounds = array<i64: 3, 1, 32>}, {pipeline_mode = #tpu.pipeline_mode<synchronous>, transform_indices = @transform_4, window_bounds = array<i64: 3, 1, 32>}, {pipeline_mode = #tpu.pipeline_mode<synchronous>, transform_indices = @transform_5, window_bounds = array<i64: 16, 32>}]} {
    %c0 = arith.constant 0 : index
    %c0_0 = arith.constant 0 : index
    %0 = vector.load %arg1[%c0, %c0_0] : memref<16x16xf32, #tpu.memory_space<vmem>>, vector<16x16xf32>
    %1 = arith.truncf %0 : vector<16x16xf32> to vector<16x16xbf16>
    %c0_1 = arith.constant 0 : index
    %c0_2 = arith.constant 0 : index
    %c0_3 = arith.constant 0 : index
    %2 = vector.load %arg2[%c0_1, %c0_2, %c0_3] : memref<3x16x32xbf16, #tpu.memory_space<vmem>>, vector<1x16x32xbf16>
    %3 = vector.shape_cast %2 : vector<1x16x32xbf16> to vector<16x32xbf16>
    %cst = arith.constant dense<0.000000e+00> : vector<16x32xf32>
    %4 = tpu.matmul %1, %3, %cst {dimension_numbers = #tpu.dot_dimension_numbers<[1], [0], [0], [1], [0, 0, 1, 1], [], []>} : vector<16x16xbf16>, vector<16x32xbf16>, vector<16x32xf32> -> vector<16x32xf32>
    %c0_4 = arith.constant 0 : index
    %c0_5 = arith.constant 0 : index
    %c0_6 = arith.constant 0 : index
    %5 = vector.load %arg4[%c0_4, %c0_5, %c0_6] : memref<3x1x32xf32, #tpu.memory_space<vmem>>, vector<1x1x32xf32>
    %6 = vector.shape_cast %5 : vector<1x1x32xf32> to vector<1x32xf32>
    %7 = vector.broadcast %6 : vector<1x32xf32> to vector<16x32xf32>
    %8 = arith.addf %4, %7 : vector<16x32xf32>
    %c0_7 = arith.constant 0 : index
    %c0_8 = arith.constant 0 : index
    %9 = vector.load %arg7[%c0_7, %c0_8] : memref<16x32xf32, #tpu.memory_space<vmem>>, vector<16x32xf32>
    tpu.vector_store %arg7[%c0_7, %c0_8], %8 {strides = array<i32>} : memref<16x32xf32, #tpu.memory_space<vmem>>, vector<16x32xf32>,
    %c1 = arith.constant 1 : index
    %c0_9 = arith.constant 0 : index
    %c0_10 = arith.constant 0 : index
    %10 = vector.load %arg2[%c1, %c0_9, %c0_10] : memref<3x16x32xbf16, #tpu.memory_space<vmem>>, vector<1x16x32xbf16>
    %11 = vector.shape_cast %10 : vector<1x16x32xbf16> to vector<16x32xbf16>
    %cst_11 = arith.constant dense<0.000000e+00> : vector<16x32xf32>
    %12 = tpu.matmul %1, %11, %cst_11 {dimension_numbers = #tpu.dot_dimension_numbers<[1], [0], [0], [1], [0, 0, 1, 1], [], []>} : vector<16x16xbf16>, vector<16x32xbf16>, vector<16x32xf32> -> vector<16x32xf32>
    %c1_12 = arith.constant 1 : index
    %c0_13 = arith.constant 0 : index
    %c0_14 = arith.constant 0 : index
    %13 = vector.load %arg4[%c1_12, %c0_13, %c0_14] : memref<3x1x32xf32, #tpu.memory_space<vmem>>, vector<1x1x32xf32>
    %14 = vector.shape_cast %13 : vector<1x1x32xf32> to vector<1x32xf32>
    %15 = vector.broadcast %14 : vector<1x32xf32> to vector<16x32xf32>
    %16 = arith.addf %12, %15 : vector<16x32xf32>
    %c0_15 = arith.constant 0 : index
    %c0_16 = arith.constant 0 : index
    %17 = vector.load %arg8[%c0_15, %c0_16] : memref<16x32xf32, #tpu.memory_space<vmem>>, vector<16x32xf32>
    tpu.vector_store %arg8[%c0_15, %c0_16], %16 {strides = array<i32>} : memref<16x32xf32, #tpu.memory_space<vmem>>, vector<16x32xf32>,
    %c2 = arith.constant 2 : index
    %c0_17 = arith.constant 0 : index
    %c0_18 = arith.constant 0 : index
    %18 = vector.load %arg2[%c2, %c0_17, %c0_18] : memref<3x16x32xbf16, #tpu.memory_space<vmem>>, vector<1x16x32xbf16>
    %19 = vector.shape_cast %18 : vector<1x16x32xbf16> to vector<16x32xbf16>
    %cst_19 = arith.constant dense<0.000000e+00> : vector<16x32xf32>
    %20 = tpu.matmul %1, %19, %cst_19 {dimension_numbers = #tpu.dot_dimension_numbers<[1], [0], [0], [1], [0, 0, 1, 1], [], []>} : vector<16x16xbf16>, vector<16x32xbf16>, vector<16x32xf32> -> vector<16x32xf32>
    %c2_20 = arith.constant 2 : index
    %c0_21 = arith.constant 0 : index
    %c0_22 = arith.constant 0 : index
    %21 = vector.load %arg4[%c2_20, %c0_21, %c0_22] : memref<3x1x32xf32, #tpu.memory_space<vmem>>, vector<1x1x32xf32>
    %22 = vector.shape_cast %21 : vector<1x1x32xf32> to vector<1x32xf32>
    %23 = vector.broadcast %22 : vector<1x32xf32> to vector<16x32xf32>
    %24 = arith.addf %20, %23 : vector<16x32xf32>
    %c0_23 = arith.constant 0 : index
    %c0_24 = arith.constant 0 : index
    %25 = vector.load %arg9[%c0_23, %c0_24] : memref<16x32xf32, #tpu.memory_space<vmem>>, vector<16x32xf32>
    tpu.vector_store %arg9[%c0_23, %c0_24], %24 {strides = array<i32>} : memref<16x32xf32, #tpu.memory_space<vmem>>, vector<16x32xf32>,
    %cst_25 = arith.constant 0.000000e+00 : f32
    %26 = vector.broadcast %cst_25 : f32 to vector<2x32xf32>
    %c0_i32 = arith.constant 0 : i32
    %c2_i32 = arith.constant 2 : i32
    %27 = arith.muli %c0_i32, %c2_i32 : i32
    %28 = arith.truncf %26 : vector<2x32xf32> to vector<2x32xbf16>
    %c0_26 = arith.constant 0 : index
    %c0_27 = arith.constant 0 : index
    %c0_28 = arith.constant 0 : index
    %29 = vector.load %arg3[%c0_26, %c0_27, %c0_28] : memref<3x32x32xbf16, #tpu.memory_space<vmem>>, vector<1x32x32xbf16>
    %30 = vector.shape_cast %29 : vector<1x32x32xbf16> to vector<32x32xbf16>
    %cst_29 = arith.constant dense<0.000000e+00> : vector<2x32xf32>
    %31 = tpu.matmul %28, %30, %cst_29 {dimension_numbers = #tpu.dot_dimension_numbers<[1], [0], [0], [1], [0, 0, 1, 1], [], []>} : vector<2x32xbf16>, vector<32x32xbf16>, vector<2x32xf32> -> vector<2x32xf32>
    %c0_30 = arith.constant 0 : index
    %c0_31 = arith.constant 0 : index
    %c0_32 = arith.constant 0 : index
    %32 = vector.load %arg5[%c0_30, %c0_31, %c0_32] : memref<3x1x32xf32, #tpu.memory_space<vmem>>, vector<1x1x32xf32>
    %33 = vector.shape_cast %32 : vector<1x1x32xf32> to vector<1x32xf32>
    %34 = vector.broadcast %33 : vector<1x32xf32> to vector<2x32xf32>
    %35 = arith.addf %31, %34 : vector<2x32xf32>
    %c1_33 = arith.constant 1 : index
    %c0_34 = arith.constant 0 : index
    %c0_35 = arith.constant 0 : index
    %36 = vector.load %arg3[%c1_33, %c0_34, %c0_35] : memref<3x32x32xbf16, #tpu.memory_space<vmem>>, vector<1x32x32xbf16>
    %37 = vector.shape_cast %36 : vector<1x32x32xbf16> to vector<32x32xbf16>
    %cst_36 = arith.constant dense<0.000000e+00> : vector<2x32xf32>
    %38 = tpu.matmul %28, %37, %cst_36 {dimension_numbers = #tpu.dot_dimension_numbers<[1], [0], [0], [1], [0, 0, 1, 1], [], []>} : vector<2x32xbf16>, vector<32x32xbf16>, vector<2x32xf32> -> vector<2x32xf32>
    %c1_37 = arith.constant 1 : index
    %c0_38 = arith.constant 0 : index
    %c0_39 = arith.constant 0 : index
    %39 = vector.load %arg5[%c1_37, %c0_38, %c0_39] : memref<3x1x32xf32, #tpu.memory_space<vmem>>, vector<1x1x32xf32>
    %40 = vector.shape_cast %39 : vector<1x1x32xf32> to vector<1x32xf32>
    %41 = vector.broadcast %40 : vector<1x32xf32> to vector<2x32xf32>
    %42 = arith.addf %38, %41 : vector<2x32xf32>
    %c2_40 = arith.constant 2 : index
    %c0_41 = arith.constant 0 : index
    %c0_42 = arith.constant 0 : index
    %43 = vector.load %arg3[%c2_40, %c0_41, %c0_42] : memref<3x32x32xbf16, #tpu.memory_space<vmem>>, vector<1x32x32xbf16>
    %44 = vector.shape_cast %43 : vector<1x32x32xbf16> to vector<32x32xbf16>
    %cst_43 = arith.constant dense<0.000000e+00> : vector<2x32xf32>
    %45 = tpu.matmul %28, %44, %cst_43 {dimension_numbers = #tpu.dot_dimension_numbers<[1], [0], [0], [1], [0, 0, 1, 1], [], []>} : vector<2x32xbf16>, vector<32x32xbf16>, vector<2x32xf32> -> vector<2x32xf32>
    %c2_44 = arith.constant 2 : index
    %c0_45 = arith.constant 0 : index
    %c0_46 = arith.constant 0 : index
    %46 = vector.load %arg5[%c2_44, %c0_45, %c0_46] : memref<3x1x32xf32, #tpu.memory_space<vmem>>, vector<1x1x32xf32>
    %47 = vector.shape_cast %46 : vector<1x1x32xf32> to vector<1x32xf32>
    %48 = vector.broadcast %47 : vector<1x32xf32> to vector<2x32xf32>
    %49 = arith.addf %45, %48 : vector<2x32xf32>
    %50 = arith.index_cast %27 : i32 to index
    %c0_47 = arith.constant 0 : index
    %51 = vector.load %arg7[%50, %c0_47] : memref<16x32xf32, #tpu.memory_space<vmem>>, vector<2x32xf32>
    %52 = arith.addf %51, %35 : vector<2x32xf32>
    %53 = arith.negf %52 : vector<2x32xf32>
    %54 = math.exp %53 : vector<2x32xf32>
    %cst_48 = arith.constant 1.000000e+00 : f32
    %55 = vector.broadcast %cst_48 : f32 to vector<2x32xf32>
    %56 = arith.addf %55, %54 : vector<2x32xf32>
    %57 = arith.divf %55, %56 : vector<2x32xf32>
    %58 = arith.index_cast %27 : i32 to index
    %c0_49 = arith.constant 0 : index
    %59 = vector.load %arg8[%58, %c0_49] : memref<16x32xf32, #tpu.memory_space<vmem>>, vector<2x32xf32>
    %60 = arith.addf %59, %42 : vector<2x32xf32>
    %61 = arith.negf %60 : vector<2x32xf32>
    %62 = math.exp %61 : vector<2x32xf32>
    %cst_50 = arith.constant 1.000000e+00 : f32
    %63 = vector.broadcast %cst_50 : f32 to vector<2x32xf32>
    %64 = arith.addf %63, %62 : vector<2x32xf32>
    %65 = arith.divf %63, %64 : vector<2x32xf32>
    %66 = arith.index_cast %27 : i32 to index
    %c0_51 = arith.constant 0 : index
    %67 = vector.load %arg9[%66, %c0_51] : memref<16x32xf32, #tpu.memory_space<vmem>>, vector<2x32xf32>
    %68 = arith.mulf %57, %49 : vector<2x32xf32>
    %69 = arith.addf %67, %68 : vector<2x32xf32>
    %70 = math.tanh %69 : vector<2x32xf32>
    %cst_52 = arith.constant 1.000000e+00 : f32
    %71 = vector.broadcast %cst_52 : f32 to vector<2x32xf32>
    %72 = arith.subf %71, %65 : vector<2x32xf32>
    %73 = arith.mulf %72, %70 : vector<2x32xf32>
    %74 = arith.mulf %65, %26 : vector<2x32xf32>
    %75 = arith.addf %73, %74 : vector<2x32xf32>
    %76 = arith.index_cast %27 : i32 to index
    %c0_53 = arith.constant 0 : index
    %77 = vector.load %arg6[%76, %c0_53] : memref<16x32xf32, #tpu.memory_space<vmem>>, vector<2x32xf32>
    tpu.vector_store %arg6[%76, %c0_53], %75 {strides = array<i32>} : memref<16x32xf32, #tpu.memory_space<vmem>>, vector<2x32xf32>,
    %c1_i32 = arith.constant 1 : i32
    %c2_i32_54 = arith.constant 2 : i32
    %78 = arith.muli %c1_i32, %c2_i32_54 : i32
    %79 = arith.truncf %75 : vector<2x32xf32> to vector<2x32xbf16>
    %c0_55 = arith.constant 0 : index
    %c0_56 = arith.constant 0 : index
    %c0_57 = arith.constant 0 : index
    %80 = vector.load %arg3[%c0_55, %c0_56, %c0_57] : memref<3x32x32xbf16, #tpu.memory_space<vmem>>, vector<1x32x32xbf16>
    %81 = vector.shape_cast %80 : vector<1x32x32xbf16> to vector<32x32xbf16>
    %cst_58 = arith.constant dense<0.000000e+00> : vector<2x32xf32>
    %82 = tpu.matmul %79, %81, %cst_58 {dimension_numbers = #tpu.dot_dimension_numbers<[1], [0], [0], [1], [0, 0, 1, 1], [], []>} : vector<2x32xbf16>, vector<32x32xbf16>, vector<2x32xf32> -> vector<2x32xf32>
    %c0_59 = arith.constant 0 : index
    %c0_60 = arith.constant 0 : index
    %c0_61 = arith.constant 0 : index
    %83 = vector.load %arg5[%c0_59, %c0_60, %c0_61] : memref<3x1x32xf32, #tpu.memory_space<vmem>>, vector<1x1x32xf32>
    %84 = vector.shape_cast %83 : vector<1x1x32xf32> to vector<1x32xf32>
    %85 = vector.broadcast %84 : vector<1x32xf32> to vector<2x32xf32>
    %86 = arith.addf %82, %85 : vector<2x32xf32>
    %c1_62 = arith.constant 1 : index
    %c0_63 = arith.constant 0 : index
    %c0_64 = arith.constant 0 : index
    %87 = vector.load %arg3[%c1_62, %c0_63, %c0_64] : memref<3x32x32xbf16, #tpu.memory_space<vmem>>, vector<1x32x32xbf16>
    %88 = vector.shape_cast %87 : vector<1x32x32xbf16> to vector<32x32xbf16>
    %cst_65 = arith.constant dense<0.000000e+00> : vector<2x32xf32>
    %89 = tpu.matmul %79, %88, %cst_65 {dimension_numbers = #tpu.dot_dimension_numbers<[1], [0], [0], [1], [0, 0, 1, 1], [], []>} : vector<2x32xbf16>, vector<32x32xbf16>, vector<2x32xf32> -> vector<2x32xf32>
    %c1_66 = arith.constant 1 : index
    %c0_67 = arith.constant 0 : index
    %c0_68 = arith.constant 0 : index
    %90 = vector.load %arg5[%c1_66, %c0_67, %c0_68] : memref<3x1x32xf32, #tpu.memory_space<vmem>>, vector<1x1x32xf32>
    %91 = vector.shape_cast %90 : vector<1x1x32xf32> to vector<1x32xf32>
    %92 = vector.broadcast %91 : vector<1x32xf32> to vector<2x32xf32>
    %93 = arith.addf %89, %92 : vector<2x32xf32>
    %c2_69 = arith.constant 2 : index
    %c0_70 = arith.constant 0 : index
    %c0_71 = arith.constant 0 : index
    %94 = vector.load %arg3[%c2_69, %c0_70, %c0_71] : memref<3x32x32xbf16, #tpu.memory_space<vmem>>, vector<1x32x32xbf16>
    %95 = vector.shape_cast %94 : vector<1x32x32xbf16> to vector<32x32xbf16>
    %cst_72 = arith.constant dense<0.000000e+00> : vector<2x32xf32>
    %96 = tpu.matmul %79, %95, %cst_72 {dimension_numbers = #tpu.dot_dimension_numbers<[1], [0], [0], [1], [0, 0, 1, 1], [], []>} : vector<2x32xbf16>, vector<32x32xbf16>, vector<2x32xf32> -> vector<2x32xf32>
    %c2_73 = arith.constant 2 : index
    %c0_74 = arith.constant 0 : index
    %c0_75 = arith.constant 0 : index
    %97 = vector.load %arg5[%c2_73, %c0_74, %c0_75] : memref<3x1x32xf32, #tpu.memory_space<vmem>>, vector<1x1x32xf32>
    %98 = vector.shape_cast %97 : vector<1x1x32xf32> to vector<1x32xf32>
    %99 = vector.broadcast %98 : vector<1x32xf32> to vector<2x32xf32>
    %100 = arith.addf %96, %99 : vector<2x32xf32>
    %101 = arith.index_cast %78 : i32 to index
    %c0_76 = arith.constant 0 : index
    %102 = vector.load %arg7[%101, %c0_76] : memref<16x32xf32, #tpu.memory_space<vmem>>, vector<2x32xf32>
    %103 = arith.addf %102, %86 : vector<2x32xf32>
    %104 = arith.negf %103 : vector<2x32xf32>
    %105 = math.exp %104 : vector<2x32xf32>
    %cst_77 = arith.constant 1.000000e+00 : f32
    %106 = vector.broadcast %cst_77 : f32 to vector<2x32xf32>
    %107 = arith.addf %106, %105 : vector<2x32xf32>
    %108 = arith.divf %106, %107 : vector<2x32xf32>
    %109 = arith.index_cast %78 : i32 to index
    %c0_78 = arith.constant 0 : index
    %110 = vector.load %arg8[%109, %c0_78] : memref<16x32xf32, #tpu.memory_space<vmem>>, vector<2x32xf32>
    %111 = arith.addf %110, %93 : vector<2x32xf32>
    %112 = arith.negf %111 : vector<2x32xf32>
    %113 = math.exp %112 : vector<2x32xf32>
    %cst_79 = arith.constant 1.000000e+00 : f32
    %114 = vector.broadcast %cst_79 : f32 to vector<2x32xf32>
    %115 = arith.addf %114, %113 : vector<2x32xf32>
    %116 = arith.divf %114, %115 : vector<2x32xf32>
    %117 = arith.index_cast %78 : i32 to index
    %c0_80 = arith.constant 0 : index
    %118 = vector.load %arg9[%117, %c0_80] : memref<16x32xf32, #tpu.memory_space<vmem>>, vector<2x32xf32>
    %119 = arith.mulf %108, %100 : vector<2x32xf32>
    %120 = arith.addf %118, %119 : vector<2x32xf32>
    %121 = math.tanh %120 : vector<2x32xf32>
    %cst_81 = arith.constant 1.000000e+00 : f32
    %122 = vector.broadcast %cst_81 : f32 to vector<2x32xf32>
    %123 = arith.subf %122, %116 : vector<2x32xf32>
    %124 = arith.mulf %123, %121 : vector<2x32xf32>
    %125 = arith.mulf %116, %75 : vector<2x32xf32>
    %126 = arith.addf %124, %125 : vector<2x32xf32>
    %127 = arith.index_cast %78 : i32 to index
    %c0_82 = arith.constant 0 : index
    %128 = vector.load %arg6[%127, %c0_82] : memref<16x32xf32, #tpu.memory_space<vmem>>, vector<2x32xf32>
    tpu.vector_store %arg6[%127, %c0_82], %126 {strides = array<i32>} : memref<16x32xf32, #tpu.memory_space<vmem>>, vector<2x32xf32>,
    %c2_i32_83 = arith.constant 2 : i32
    %c2_i32_84 = arith.constant 2 : i32
    %129 = arith.muli %c2_i32_83, %c2_i32_84 : i32
    %130 = arith.truncf %126 : vector<2x32xf32> to vector<2x32xbf16>
    %c0_85 = arith.constant 0 : index
    %c0_86 = arith.constant 0 : index
    %c0_87 = arith.constant 0 : index
    %131 = vector.load %arg3[%c0_85, %c0_86, %c0_87] : memref<3x32x32xbf16, #tpu.memory_space<vmem>>, vector<1x32x32xbf16>
    %132 = vector.shape_cast %131 : vector<1x32x32xbf16> to vector<32x32xbf16>
    %cst_88 = arith.constant dense<0.000000e+00> : vector<2x32xf32>
    %133 = tpu.matmul %130, %132, %cst_88 {dimension_numbers = #tpu.dot_dimension_numbers<[1], [0], [0], [1], [0, 0, 1, 1], [], []>} : vector<2x32xbf16>, vector<32x32xbf16>, vector<2x32xf32> -> vector<2x32xf32>
    %c0_89 = arith.constant 0 : index
    %c0_90 = arith.constant 0 : index
    %c0_91 = arith.constant 0 : index
    %134 = vector.load %arg5[%c0_89, %c0_90, %c0_91] : memref<3x1x32xf32, #tpu.memory_space<vmem>>, vector<1x1x32xf32>
    %135 = vector.shape_cast %134 : vector<1x1x32xf32> to vector<1x32xf32>
    %136 = vector.broadcast %135 : vector<1x32xf32> to vector<2x32xf32>
    %137 = arith.addf %133, %136 : vector<2x32xf32>
    %c1_92 = arith.constant 1 : index
    %c0_93 = arith.constant 0 : index
    %c0_94 = arith.constant 0 : index
    %138 = vector.load %arg3[%c1_92, %c0_93, %c0_94] : memref<3x32x32xbf16, #tpu.memory_space<vmem>>, vector<1x32x32xbf16>
    %139 = vector.shape_cast %138 : vector<1x32x32xbf16> to vector<32x32xbf16>
    %cst_95 = arith.constant dense<0.000000e+00> : vector<2x32xf32>
    %140 = tpu.matmul %130, %139, %cst_95 {dimension_numbers = #tpu.dot_dimension_numbers<[1], [0], [0], [1], [0, 0, 1, 1], [], []>} : vector<2x32xbf16>, vector<32x32xbf16>, vector<2x32xf32> -> vector<2x32xf32>
    %c1_96 = arith.constant 1 : index
    %c0_97 = arith.constant 0 : index
    %c0_98 = arith.constant 0 : index
    %141 = vector.load %arg5[%c1_96, %c0_97, %c0_98] : memref<3x1x32xf32, #tpu.memory_space<vmem>>, vector<1x1x32xf32>
    %142 = vector.shape_cast %141 : vector<1x1x32xf32> to vector<1x32xf32>
    %143 = vector.broadcast %142 : vector<1x32xf32> to vector<2x32xf32>
    %144 = arith.addf %140, %143 : vector<2x32xf32>
    %c2_99 = arith.constant 2 : index
    %c0_100 = arith.constant 0 : index
    %c0_101 = arith.constant 0 : index
    %145 = vector.load %arg3[%c2_99, %c0_100, %c0_101] : memref<3x32x32xbf16, #tpu.memory_space<vmem>>, vector<1x32x32xbf16>
    %146 = vector.shape_cast %145 : vector<1x32x32xbf16> to vector<32x32xbf16>
    %cst_102 = arith.constant dense<0.000000e+00> : vector<2x32xf32>
    %147 = tpu.matmul %130, %146, %cst_102 {dimension_numbers = #tpu.dot_dimension_numbers<[1], [0], [0], [1], [0, 0, 1, 1], [], []>} : vector<2x32xbf16>, vector<32x32xbf16>, vector<2x32xf32> -> vector<2x32xf32>
    %c2_103 = arith.constant 2 : index
    %c0_104 = arith.constant 0 : index
    %c0_105 = arith.constant 0 : index
    %148 = vector.load %arg5[%c2_103, %c0_104, %c0_105] : memref<3x1x32xf32, #tpu.memory_space<vmem>>, vector<1x1x32xf32>
    %149 = vector.shape_cast %148 : vector<1x1x32xf32> to vector<1x32xf32>
    %150 = vector.broadcast %149 : vector<1x32xf32> to vector<2x32xf32>
    %151 = arith.addf %147, %150 : vector<2x32xf32>
    %152 = arith.index_cast %129 : i32 to index
    %c0_106 = arith.constant 0 : index
    %153 = vector.load %arg7[%152, %c0_106] : memref<16x32xf32, #tpu.memory_space<vmem>>, vector<2x32xf32>
    %154 = arith.addf %153, %137 : vector<2x32xf32>
    %155 = arith.negf %154 : vector<2x32xf32>
    %156 = math.exp %155 : vector<2x32xf32>
    %cst_107 = arith.constant 1.000000e+00 : f32
    %157 = vector.broadcast %cst_107 : f32 to vector<2x32xf32>
    %158 = arith.addf %157, %156 : vector<2x32xf32>
    %159 = arith.divf %157, %158 : vector<2x32xf32>
    %160 = arith.index_cast %129 : i32 to index
    %c0_108 = arith.constant 0 : index
    %161 = vector.load %arg8[%160, %c0_108] : memref<16x32xf32, #tpu.memory_space<vmem>>, vector<2x32xf32>
    %162 = arith.addf %161, %144 : vector<2x32xf32>
    %163 = arith.negf %162 : vector<2x32xf32>
    %164 = math.exp %163 : vector<2x32xf32>
    %cst_109 = arith.constant 1.000000e+00 : f32
    %165 = vector.broadcast %cst_109 : f32 to vector<2x32xf32>
    %166 = arith.addf %165, %164 : vector<2x32xf32>
    %167 = arith.divf %165, %166 : vector<2x32xf32>
    %168 = arith.index_cast %129 : i32 to index
    %c0_110 = arith.constant 0 : index
    %169 = vector.load %arg9[%168, %c0_110] : memref<16x32xf32, #tpu.memory_space<vmem>>, vector<2x32xf32>
    %170 = arith.mulf %159, %151 : vector<2x32xf32>
    %171 = arith.addf %169, %170 : vector<2x32xf32>
    %172 = math.tanh %171 : vector<2x32xf32>
    %cst_111 = arith.constant 1.000000e+00 : f32
    %173 = vector.broadcast %cst_111 : f32 to vector<2x32xf32>
    %174 = arith.subf %173, %167 : vector<2x32xf32>
    %175 = arith.mulf %174, %172 : vector<2x32xf32>
    %176 = arith.mulf %167, %126 : vector<2x32xf32>
    %177 = arith.addf %175, %176 : vector<2x32xf32>
    %178 = arith.index_cast %129 : i32 to index
    %c0_112 = arith.constant 0 : index
    %179 = vector.load %arg6[%178, %c0_112] : memref<16x32xf32, #tpu.memory_space<vmem>>, vector<2x32xf32>
    tpu.vector_store %arg6[%178, %c0_112], %177 {strides = array<i32>} : memref<16x32xf32, #tpu.memory_space<vmem>>, vector<2x32xf32>,
    %c3_i32 = arith.constant 3 : i32
    %c2_i32_113 = arith.constant 2 : i32
    %180 = arith.muli %c3_i32, %c2_i32_113 : i32
    %181 = arith.truncf %177 : vector<2x32xf32> to vector<2x32xbf16>
    %c0_114 = arith.constant 0 : index
    %c0_115 = arith.constant 0 : index
    %c0_116 = arith.constant 0 : index
    %182 = vector.load %arg3[%c0_114, %c0_115, %c0_116] : memref<3x32x32xbf16, #tpu.memory_space<vmem>>, vector<1x32x32xbf16>
    %183 = vector.shape_cast %182 : vector<1x32x32xbf16> to vector<32x32xbf16>
    %cst_117 = arith.constant dense<0.000000e+00> : vector<2x32xf32>
    %184 = tpu.matmul %181, %183, %cst_117 {dimension_numbers = #tpu.dot_dimension_numbers<[1], [0], [0], [1], [0, 0, 1, 1], [], []>} : vector<2x32xbf16>, vector<32x32xbf16>, vector<2x32xf32> -> vector<2x32xf32>
    %c0_118 = arith.constant 0 : index
    %c0_119 = arith.constant 0 : index
    %c0_120 = arith.constant 0 : index
    %185 = vector.load %arg5[%c0_118, %c0_119, %c0_120] : memref<3x1x32xf32, #tpu.memory_space<vmem>>, vector<1x1x32xf32>
    %186 = vector.shape_cast %185 : vector<1x1x32xf32> to vector<1x32xf32>
    %187 = vector.broadcast %186 : vector<1x32xf32> to vector<2x32xf32>
    %188 = arith.addf %184, %187 : vector<2x32xf32>
    %c1_121 = arith.constant 1 : index
    %c0_122 = arith.constant 0 : index
    %c0_123 = arith.constant 0 : index
    %189 = vector.load %arg3[%c1_121, %c0_122, %c0_123] : memref<3x32x32xbf16, #tpu.memory_space<vmem>>, vector<1x32x32xbf16>
    %190 = vector.shape_cast %189 : vector<1x32x32xbf16> to vector<32x32xbf16>
    %cst_124 = arith.constant dense<0.000000e+00> : vector<2x32xf32>
    %191 = tpu.matmul %181, %190, %cst_124 {dimension_numbers = #tpu.dot_dimension_numbers<[1], [0], [0], [1], [0, 0, 1, 1], [], []>} : vector<2x32xbf16>, vector<32x32xbf16>, vector<2x32xf32> -> vector<2x32xf32>
    %c1_125 = arith.constant 1 : index
    %c0_126 = arith.constant 0 : index
    %c0_127 = arith.constant 0 : index
    %192 = vector.load %arg5[%c1_125, %c0_126, %c0_127] : memref<3x1x32xf32, #tpu.memory_space<vmem>>, vector<1x1x32xf32>
    %193 = vector.shape_cast %192 : vector<1x1x32xf32> to vector<1x32xf32>
    %194 = vector.broadcast %193 : vector<1x32xf32> to vector<2x32xf32>
    %195 = arith.addf %191, %194 : vector<2x32xf32>
    %c2_128 = arith.constant 2 : index
    %c0_129 = arith.constant 0 : index
    %c0_130 = arith.constant 0 : index
    %196 = vector.load %arg3[%c2_128, %c0_129, %c0_130] : memref<3x32x32xbf16, #tpu.memory_space<vmem>>, vector<1x32x32xbf16>
    %197 = vector.shape_cast %196 : vector<1x32x32xbf16> to vector<32x32xbf16>
    %cst_131 = arith.constant dense<0.000000e+00> : vector<2x32xf32>
    %198 = tpu.matmul %181, %197, %cst_131 {dimension_numbers = #tpu.dot_dimension_numbers<[1], [0], [0], [1], [0, 0, 1, 1], [], []>} : vector<2x32xbf16>, vector<32x32xbf16>, vector<2x32xf32> -> vector<2x32xf32>
    %c2_132 = arith.constant 2 : index
    %c0_133 = arith.constant 0 : index
    %c0_134 = arith.constant 0 : index
    %199 = vector.load %arg5[%c2_132, %c0_133, %c0_134] : memref<3x1x32xf32, #tpu.memory_space<vmem>>, vector<1x1x32xf32>
    %200 = vector.shape_cast %199 : vector<1x1x32xf32> to vector<1x32xf32>
    %201 = vector.broadcast %200 : vector<1x32xf32> to vector<2x32xf32>
    %202 = arith.addf %198, %201 : vector<2x32xf32>
    %203 = arith.index_cast %180 : i32 to index
    %c0_135 = arith.constant 0 : index
    %204 = vector.load %arg7[%203, %c0_135] : memref<16x32xf32, #tpu.memory_space<vmem>>, vector<2x32xf32>
    %205 = arith.addf %204, %188 : vector<2x32xf32>
    %206 = arith.negf %205 : vector<2x32xf32>
    %207 = math.exp %206 : vector<2x32xf32>
    %cst_136 = arith.constant 1.000000e+00 : f32
    %208 = vector.broadcast %cst_136 : f32 to vector<2x32xf32>
    %209 = arith.addf %208, %207 : vector<2x32xf32>
    %210 = arith.divf %208, %209 : vector<2x32xf32>
    %211 = arith.index_cast %180 : i32 to index
    %c0_137 = arith.constant 0 : index
    %212 = vector.load %arg8[%211, %c0_137] : memref<16x32xf32, #tpu.memory_space<vmem>>, vector<2x32xf32>
    %213 = arith.addf %212, %195 : vector<2x32xf32>
    %214 = arith.negf %213 : vector<2x32xf32>
    %215 = math.exp %214 : vector<2x32xf32>
    %cst_138 = arith.constant 1.000000e+00 : f32
    %216 = vector.broadcast %cst_138 : f32 to vector<2x32xf32>
    %217 = arith.addf %216, %215 : vector<2x32xf32>
    %218 = arith.divf %216, %217 : vector<2x32xf32>
    %219 = arith.index_cast %180 : i32 to index
    %c0_139 = arith.constant 0 : index
    %220 = vector.load %arg9[%219, %c0_139] : memref<16x32xf32, #tpu.memory_space<vmem>>, vector<2x32xf32>
    %221 = arith.mulf %210, %202 : vector<2x32xf32>
    %222 = arith.addf %220, %221 : vector<2x32xf32>
    %223 = math.tanh %222 : vector<2x32xf32>
    %cst_140 = arith.constant 1.000000e+00 : f32
    %224 = vector.broadcast %cst_140 : f32 to vector<2x32xf32>
    %225 = arith.subf %224, %218 : vector<2x32xf32>
    %226 = arith.mulf %225, %223 : vector<2x32xf32>
    %227 = arith.mulf %218, %177 : vector<2x32xf32>
    %228 = arith.addf %226, %227 : vector<2x32xf32>
    %229 = arith.index_cast %180 : i32 to index
    %c0_141 = arith.constant 0 : index
    %230 = vector.load %arg6[%229, %c0_141] : memref<16x32xf32, #tpu.memory_space<vmem>>, vector<2x32xf32>
    tpu.vector_store %arg6[%229, %c0_141], %228 {strides = array<i32>} : memref<16x32xf32, #tpu.memory_space<vmem>>, vector<2x32xf32>,
    %c4_i32 = arith.constant 4 : i32
    %c2_i32_142 = arith.constant 2 : i32
    %231 = arith.muli %c4_i32, %c2_i32_142 : i32
    %232 = arith.truncf %228 : vector<2x32xf32> to vector<2x32xbf16>
    %c0_143 = arith.constant 0 : index
    %c0_144 = arith.constant 0 : index
    %c0_145 = arith.constant 0 : index
    %233 = vector.load %arg3[%c0_143, %c0_144, %c0_145] : memref<3x32x32xbf16, #tpu.memory_space<vmem>>, vector<1x32x32xbf16>
    %234 = vector.shape_cast %233 : vector<1x32x32xbf16> to vector<32x32xbf16>
    %cst_146 = arith.constant dense<0.000000e+00> : vector<2x32xf32>
    %235 = tpu.matmul %232, %234, %cst_146 {dimension_numbers = #tpu.dot_dimension_numbers<[1], [0], [0], [1], [0, 0, 1, 1], [], []>} : vector<2x32xbf16>, vector<32x32xbf16>, vector<2x32xf32> -> vector<2x32xf32>
    %c0_147 = arith.constant 0 : index
    %c0_148 = arith.constant 0 : index
    %c0_149 = arith.constant 0 : index
    %236 = vector.load %arg5[%c0_147, %c0_148, %c0_149] : memref<3x1x32xf32, #tpu.memory_space<vmem>>, vector<1x1x32xf32>
    %237 = vector.shape_cast %236 : vector<1x1x32xf32> to vector<1x32xf32>
    %238 = vector.broadcast %237 : vector<1x32xf32> to vector<2x32xf32>
    %239 = arith.addf %235, %238 : vector<2x32xf32>
    %c1_150 = arith.constant 1 : index
    %c0_151 = arith.constant 0 : index
    %c0_152 = arith.constant 0 : index
    %240 = vector.load %arg3[%c1_150, %c0_151, %c0_152] : memref<3x32x32xbf16, #tpu.memory_space<vmem>>, vector<1x32x32xbf16>
    %241 = vector.shape_cast %240 : vector<1x32x32xbf16> to vector<32x32xbf16>
    %cst_153 = arith.constant dense<0.000000e+00> : vector<2x32xf32>
    %242 = tpu.matmul %232, %241, %cst_153 {dimension_numbers = #tpu.dot_dimension_numbers<[1], [0], [0], [1], [0, 0, 1, 1], [], []>} : vector<2x32xbf16>, vector<32x32xbf16>, vector<2x32xf32> -> vector<2x32xf32>
    %c1_154 = arith.constant 1 : index
    %c0_155 = arith.constant 0 : index
    %c0_156 = arith.constant 0 : index
    %243 = vector.load %arg5[%c1_154, %c0_155, %c0_156] : memref<3x1x32xf32, #tpu.memory_space<vmem>>, vector<1x1x32xf32>
    %244 = vector.shape_cast %243 : vector<1x1x32xf32> to vector<1x32xf32>
    %245 = vector.broadcast %244 : vector<1x32xf32> to vector<2x32xf32>
    %246 = arith.addf %242, %245 : vector<2x32xf32>
    %c2_157 = arith.constant 2 : index
    %c0_158 = arith.constant 0 : index
    %c0_159 = arith.constant 0 : index
    %247 = vector.load %arg3[%c2_157, %c0_158, %c0_159] : memref<3x32x32xbf16, #tpu.memory_space<vmem>>, vector<1x32x32xbf16>
    %248 = vector.shape_cast %247 : vector<1x32x32xbf16> to vector<32x32xbf16>
    %cst_160 = arith.constant dense<0.000000e+00> : vector<2x32xf32>
    %249 = tpu.matmul %232, %248, %cst_160 {dimension_numbers = #tpu.dot_dimension_numbers<[1], [0], [0], [1], [0, 0, 1, 1], [], []>} : vector<2x32xbf16>, vector<32x32xbf16>, vector<2x32xf32> -> vector<2x32xf32>
    %c2_161 = arith.constant 2 : index
    %c0_162 = arith.constant 0 : index
    %c0_163 = arith.constant 0 : index
    %250 = vector.load %arg5[%c2_161, %c0_162, %c0_163] : memref<3x1x32xf32, #tpu.memory_space<vmem>>, vector<1x1x32xf32>
    %251 = vector.shape_cast %250 : vector<1x1x32xf32> to vector<1x32xf32>
    %252 = vector.broadcast %251 : vector<1x32xf32> to vector<2x32xf32>
    %253 = arith.addf %249, %252 : vector<2x32xf32>
    %254 = arith.index_cast %231 : i32 to index
    %c0_164 = arith.constant 0 : index
    %255 = vector.load %arg7[%254, %c0_164] : memref<16x32xf32, #tpu.memory_space<vmem>>, vector<2x32xf32>
    %256 = arith.addf %255, %239 : vector<2x32xf32>
    %257 = arith.negf %256 : vector<2x32xf32>
    %258 = math.exp %257 : vector<2x32xf32>
    %cst_165 = arith.constant 1.000000e+00 : f32
    %259 = vector.broadcast %cst_165 : f32 to vector<2x32xf32>
    %260 = arith.addf %259, %258 : vector<2x32xf32>
    %261 = arith.divf %259, %260 : vector<2x32xf32>
    %262 = arith.index_cast %231 : i32 to index
    %c0_166 = arith.constant 0 : index
    %263 = vector.load %arg8[%262, %c0_166] : memref<16x32xf32, #tpu.memory_space<vmem>>, vector<2x32xf32>
    %264 = arith.addf %263, %246 : vector<2x32xf32>
    %265 = arith.negf %264 : vector<2x32xf32>
    %266 = math.exp %265 : vector<2x32xf32>
    %cst_167 = arith.constant 1.000000e+00 : f32
    %267 = vector.broadcast %cst_167 : f32 to vector<2x32xf32>
    %268 = arith.addf %267, %266 : vector<2x32xf32>
    %269 = arith.divf %267, %268 : vector<2x32xf32>
    %270 = arith.index_cast %231 : i32 to index
    %c0_168 = arith.constant 0 : index
    %271 = vector.load %arg9[%270, %c0_168] : memref<16x32xf32, #tpu.memory_space<vmem>>, vector<2x32xf32>
    %272 = arith.mulf %261, %253 : vector<2x32xf32>
    %273 = arith.addf %271, %272 : vector<2x32xf32>
    %274 = math.tanh %273 : vector<2x32xf32>
    %cst_169 = arith.constant 1.000000e+00 : f32
    %275 = vector.broadcast %cst_169 : f32 to vector<2x32xf32>
    %276 = arith.subf %275, %269 : vector<2x32xf32>
    %277 = arith.mulf %276, %274 : vector<2x32xf32>
    %278 = arith.mulf %269, %228 : vector<2x32xf32>
    %279 = arith.addf %277, %278 : vector<2x32xf32>
    %280 = arith.index_cast %231 : i32 to index
    %c0_170 = arith.constant 0 : index
    %281 = vector.load %arg6[%280, %c0_170] : memref<16x32xf32, #tpu.memory_space<vmem>>, vector<2x32xf32>
    tpu.vector_store %arg6[%280, %c0_170], %279 {strides = array<i32>} : memref<16x32xf32, #tpu.memory_space<vmem>>, vector<2x32xf32>,
    %c5_i32 = arith.constant 5 : i32
    %c2_i32_171 = arith.constant 2 : i32
    %282 = arith.muli %c5_i32, %c2_i32_171 : i32
    %283 = arith.truncf %279 : vector<2x32xf32> to vector<2x32xbf16>
    %c0_172 = arith.constant 0 : index
    %c0_173 = arith.constant 0 : index
    %c0_174 = arith.constant 0 : index
    %284 = vector.load %arg3[%c0_172, %c0_173, %c0_174] : memref<3x32x32xbf16, #tpu.memory_space<vmem>>, vector<1x32x32xbf16>
    %285 = vector.shape_cast %284 : vector<1x32x32xbf16> to vector<32x32xbf16>
    %cst_175 = arith.constant dense<0.000000e+00> : vector<2x32xf32>
    %286 = tpu.matmul %283, %285, %cst_175 {dimension_numbers = #tpu.dot_dimension_numbers<[1], [0], [0], [1], [0, 0, 1, 1], [], []>} : vector<2x32xbf16>, vector<32x32xbf16>, vector<2x32xf32> -> vector<2x32xf32>
    %c0_176 = arith.constant 0 : index
    %c0_177 = arith.constant 0 : index
    %c0_178 = arith.constant 0 : index
    %287 = vector.load %arg5[%c0_176, %c0_177, %c0_178] : memref<3x1x32xf32, #tpu.memory_space<vmem>>, vector<1x1x32xf32>
    %288 = vector.shape_cast %287 : vector<1x1x32xf32> to vector<1x32xf32>
    %289 = vector.broadcast %288 : vector<1x32xf32> to vector<2x32xf32>
    %290 = arith.addf %286, %289 : vector<2x32xf32>
    %c1_179 = arith.constant 1 : index
    %c0_180 = arith.constant 0 : index
    %c0_181 = arith.constant 0 : index
    %291 = vector.load %arg3[%c1_179, %c0_180, %c0_181] : memref<3x32x32xbf16, #tpu.memory_space<vmem>>, vector<1x32x32xbf16>
    %292 = vector.shape_cast %291 : vector<1x32x32xbf16> to vector<32x32xbf16>
    %cst_182 = arith.constant dense<0.000000e+00> : vector<2x32xf32>
    %293 = tpu.matmul %283, %292, %cst_182 {dimension_numbers = #tpu.dot_dimension_numbers<[1], [0], [0], [1], [0, 0, 1, 1], [], []>} : vector<2x32xbf16>, vector<32x32xbf16>, vector<2x32xf32> -> vector<2x32xf32>
    %c1_183 = arith.constant 1 : index
    %c0_184 = arith.constant 0 : index
    %c0_185 = arith.constant 0 : index
    %294 = vector.load %arg5[%c1_183, %c0_184, %c0_185] : memref<3x1x32xf32, #tpu.memory_space<vmem>>, vector<1x1x32xf32>
    %295 = vector.shape_cast %294 : vector<1x1x32xf32> to vector<1x32xf32>
    %296 = vector.broadcast %295 : vector<1x32xf32> to vector<2x32xf32>
    %297 = arith.addf %293, %296 : vector<2x32xf32>
    %c2_186 = arith.constant 2 : index
    %c0_187 = arith.constant 0 : index
    %c0_188 = arith.constant 0 : index
    %298 = vector.load %arg3[%c2_186, %c0_187, %c0_188] : memref<3x32x32xbf16, #tpu.memory_space<vmem>>, vector<1x32x32xbf16>
    %299 = vector.shape_cast %298 : vector<1x32x32xbf16> to vector<32x32xbf16>
    %cst_189 = arith.constant dense<0.000000e+00> : vector<2x32xf32>
    %300 = tpu.matmul %283, %299, %cst_189 {dimension_numbers = #tpu.dot_dimension_numbers<[1], [0], [0], [1], [0, 0, 1, 1], [], []>} : vector<2x32xbf16>, vector<32x32xbf16>, vector<2x32xf32> -> vector<2x32xf32>
    %c2_190 = arith.constant 2 : index
    %c0_191 = arith.constant 0 : index
    %c0_192 = arith.constant 0 : index
    %301 = vector.load %arg5[%c2_190, %c0_191, %c0_192] : memref<3x1x32xf32, #tpu.memory_space<vmem>>, vector<1x1x32xf32>
    %302 = vector.shape_cast %301 : vector<1x1x32xf32> to vector<1x32xf32>
    %303 = vector.broadcast %302 : vector<1x32xf32> to vector<2x32xf32>
    %304 = arith.addf %300, %303 : vector<2x32xf32>
    %305 = arith.index_cast %282 : i32 to index
    %c0_193 = arith.constant 0 : index
    %306 = vector.load %arg7[%305, %c0_193] : memref<16x32xf32, #tpu.memory_space<vmem>>, vector<2x32xf32>
    %307 = arith.addf %306, %290 : vector<2x32xf32>
    %308 = arith.negf %307 : vector<2x32xf32>
    %309 = math.exp %308 : vector<2x32xf32>
    %cst_194 = arith.constant 1.000000e+00 : f32
    %310 = vector.broadcast %cst_194 : f32 to vector<2x32xf32>
    %311 = arith.addf %310, %309 : vector<2x32xf32>
    %312 = arith.divf %310, %311 : vector<2x32xf32>
    %313 = arith.index_cast %282 : i32 to index
    %c0_195 = arith.constant 0 : index
    %314 = vector.load %arg8[%313, %c0_195] : memref<16x32xf32, #tpu.memory_space<vmem>>, vector<2x32xf32>
    %315 = arith.addf %314, %297 : vector<2x32xf32>
    %316 = arith.negf %315 : vector<2x32xf32>
    %317 = math.exp %316 : vector<2x32xf32>
    %cst_196 = arith.constant 1.000000e+00 : f32
    %318 = vector.broadcast %cst_196 : f32 to vector<2x32xf32>
    %319 = arith.addf %318, %317 : vector<2x32xf32>
    %320 = arith.divf %318, %319 : vector<2x32xf32>
    %321 = arith.index_cast %282 : i32 to index
    %c0_197 = arith.constant 0 : index
    %322 = vector.load %arg9[%321, %c0_197] : memref<16x32xf32, #tpu.memory_space<vmem>>, vector<2x32xf32>
    %323 = arith.mulf %312, %304 : vector<2x32xf32>
    %324 = arith.addf %322, %323 : vector<2x32xf32>
    %325 = math.tanh %324 : vector<2x32xf32>
    %cst_198 = arith.constant 1.000000e+00 : f32
    %326 = vector.broadcast %cst_198 : f32 to vector<2x32xf32>
    %327 = arith.subf %326, %320 : vector<2x32xf32>
    %328 = arith.mulf %327, %325 : vector<2x32xf32>
    %329 = arith.mulf %320, %279 : vector<2x32xf32>
    %330 = arith.addf %328, %329 : vector<2x32xf32>
    %331 = arith.index_cast %282 : i32 to index
    %c0_199 = arith.constant 0 : index
    %332 = vector.load %arg6[%331, %c0_199] : memref<16x32xf32, #tpu.memory_space<vmem>>, vector<2x32xf32>
    tpu.vector_store %arg6[%331, %c0_199], %330 {strides = array<i32>} : memref<16x32xf32, #tpu.memory_space<vmem>>, vector<2x32xf32>,
    %c6_i32 = arith.constant 6 : i32
    %c2_i32_200 = arith.constant 2 : i32
    %333 = arith.muli %c6_i32, %c2_i32_200 : i32
    %334 = arith.truncf %330 : vector<2x32xf32> to vector<2x32xbf16>
    %c0_201 = arith.constant 0 : index
    %c0_202 = arith.constant 0 : index
    %c0_203 = arith.constant 0 : index
    %335 = vector.load %arg3[%c0_201, %c0_202, %c0_203] : memref<3x32x32xbf16, #tpu.memory_space<vmem>>, vector<1x32x32xbf16>
    %336 = vector.shape_cast %335 : vector<1x32x32xbf16> to vector<32x32xbf16>
    %cst_204 = arith.constant dense<0.000000e+00> : vector<2x32xf32>
    %337 = tpu.matmul %334, %336, %cst_204 {dimension_numbers = #tpu.dot_dimension_numbers<[1], [0], [0], [1], [0, 0, 1, 1], [], []>} : vector<2x32xbf16>, vector<32x32xbf16>, vector<2x32xf32> -> vector<2x32xf32>
    %c0_205 = arith.constant 0 : index
    %c0_206 = arith.constant 0 : index
    %c0_207 = arith.constant 0 : index
    %338 = vector.load %arg5[%c0_205, %c0_206, %c0_207] : memref<3x1x32xf32, #tpu.memory_space<vmem>>, vector<1x1x32xf32>
    %339 = vector.shape_cast %338 : vector<1x1x32xf32> to vector<1x32xf32>
    %340 = vector.broadcast %339 : vector<1x32xf32> to vector<2x32xf32>
    %341 = arith.addf %337, %340 : vector<2x32xf32>
    %c1_208 = arith.constant 1 : index
    %c0_209 = arith.constant 0 : index
    %c0_210 = arith.constant 0 : index
    %342 = vector.load %arg3[%c1_208, %c0_209, %c0_210] : memref<3x32x32xbf16, #tpu.memory_space<vmem>>, vector<1x32x32xbf16>
    %343 = vector.shape_cast %342 : vector<1x32x32xbf16> to vector<32x32xbf16>
    %cst_211 = arith.constant dense<0.000000e+00> : vector<2x32xf32>
    %344 = tpu.matmul %334, %343, %cst_211 {dimension_numbers = #tpu.dot_dimension_numbers<[1], [0], [0], [1], [0, 0, 1, 1], [], []>} : vector<2x32xbf16>, vector<32x32xbf16>, vector<2x32xf32> -> vector<2x32xf32>
    %c1_212 = arith.constant 1 : index
    %c0_213 = arith.constant 0 : index
    %c0_214 = arith.constant 0 : index
    %345 = vector.load %arg5[%c1_212, %c0_213, %c0_214] : memref<3x1x32xf32, #tpu.memory_space<vmem>>, vector<1x1x32xf32>
    %346 = vector.shape_cast %345 : vector<1x1x32xf32> to vector<1x32xf32>
    %347 = vector.broadcast %346 : vector<1x32xf32> to vector<2x32xf32>
    %348 = arith.addf %344, %347 : vector<2x32xf32>
    %c2_215 = arith.constant 2 : index
    %c0_216 = arith.constant 0 : index
    %c0_217 = arith.constant 0 : index
    %349 = vector.load %arg3[%c2_215, %c0_216, %c0_217] : memref<3x32x32xbf16, #tpu.memory_space<vmem>>, vector<1x32x32xbf16>
    %350 = vector.shape_cast %349 : vector<1x32x32xbf16> to vector<32x32xbf16>
    %cst_218 = arith.constant dense<0.000000e+00> : vector<2x32xf32>
    %351 = tpu.matmul %334, %350, %cst_218 {dimension_numbers = #tpu.dot_dimension_numbers<[1], [0], [0], [1], [0, 0, 1, 1], [], []>} : vector<2x32xbf16>, vector<32x32xbf16>, vector<2x32xf32> -> vector<2x32xf32>
    %c2_219 = arith.constant 2 : index
    %c0_220 = arith.constant 0 : index
    %c0_221 = arith.constant 0 : index
    %352 = vector.load %arg5[%c2_219, %c0_220, %c0_221] : memref<3x1x32xf32, #tpu.memory_space<vmem>>, vector<1x1x32xf32>
    %353 = vector.shape_cast %352 : vector<1x1x32xf32> to vector<1x32xf32>
    %354 = vector.broadcast %353 : vector<1x32xf32> to vector<2x32xf32>
    %355 = arith.addf %351, %354 : vector<2x32xf32>
    %356 = arith.index_cast %333 : i32 to index
    %c0_222 = arith.constant 0 : index
    %357 = vector.load %arg7[%356, %c0_222] : memref<16x32xf32, #tpu.memory_space<vmem>>, vector<2x32xf32>
    %358 = arith.addf %357, %341 : vector<2x32xf32>
    %359 = arith.negf %358 : vector<2x32xf32>
    %360 = math.exp %359 : vector<2x32xf32>
    %cst_223 = arith.constant 1.000000e+00 : f32
    %361 = vector.broadcast %cst_223 : f32 to vector<2x32xf32>
    %362 = arith.addf %361, %360 : vector<2x32xf32>
    %363 = arith.divf %361, %362 : vector<2x32xf32>
    %364 = arith.index_cast %333 : i32 to index
    %c0_224 = arith.constant 0 : index
    %365 = vector.load %arg8[%364, %c0_224] : memref<16x32xf32, #tpu.memory_space<vmem>>, vector<2x32xf32>
    %366 = arith.addf %365, %348 : vector<2x32xf32>
    %367 = arith.negf %366 : vector<2x32xf32>
    %368 = math.exp %367 : vector<2x32xf32>
    %cst_225 = arith.constant 1.000000e+00 : f32
    %369 = vector.broadcast %cst_225 : f32 to vector<2x32xf32>
    %370 = arith.addf %369, %368 : vector<2x32xf32>
    %371 = arith.divf %369, %370 : vector<2x32xf32>
    %372 = arith.index_cast %333 : i32 to index
    %c0_226 = arith.constant 0 : index
    %373 = vector.load %arg9[%372, %c0_226] : memref<16x32xf32, #tpu.memory_space<vmem>>, vector<2x32xf32>
    %374 = arith.mulf %363, %355 : vector<2x32xf32>
    %375 = arith.addf %373, %374 : vector<2x32xf32>
    %376 = math.tanh %375 : vector<2x32xf32>
    %cst_227 = arith.constant 1.000000e+00 : f32
    %377 = vector.broadcast %cst_227 : f32 to vector<2x32xf32>
    %378 = arith.subf %377, %371 : vector<2x32xf32>
    %379 = arith.mulf %378, %376 : vector<2x32xf32>
    %380 = arith.mulf %371, %330 : vector<2x32xf32>
    %381 = arith.addf %379, %380 : vector<2x32xf32>
    %382 = arith.index_cast %333 : i32 to index
    %c0_228 = arith.constant 0 : index
    %383 = vector.load %arg6[%382, %c0_228] : memref<16x32xf32, #tpu.memory_space<vmem>>, vector<2x32xf32>
    tpu.vector_store %arg6[%382, %c0_228], %381 {strides = array<i32>} : memref<16x32xf32, #tpu.memory_space<vmem>>, vector<2x32xf32>,
    %c7_i32 = arith.constant 7 : i32
    %c2_i32_229 = arith.constant 2 : i32
    %384 = arith.muli %c7_i32, %c2_i32_229 : i32
    %385 = arith.truncf %381 : vector<2x32xf32> to vector<2x32xbf16>
    %c0_230 = arith.constant 0 : index
    %c0_231 = arith.constant 0 : index
    %c0_232 = arith.constant 0 : index
    %386 = vector.load %arg3[%c0_230, %c0_231, %c0_232] : memref<3x32x32xbf16, #tpu.memory_space<vmem>>, vector<1x32x32xbf16>
    %387 = vector.shape_cast %386 : vector<1x32x32xbf16> to vector<32x32xbf16>
    %cst_233 = arith.constant dense<0.000000e+00> : vector<2x32xf32>
    %388 = tpu.matmul %385, %387, %cst_233 {dimension_numbers = #tpu.dot_dimension_numbers<[1], [0], [0], [1], [0, 0, 1, 1], [], []>} : vector<2x32xbf16>, vector<32x32xbf16>, vector<2x32xf32> -> vector<2x32xf32>
    %c0_234 = arith.constant 0 : index
    %c0_235 = arith.constant 0 : index
    %c0_236 = arith.constant 0 : index
    %389 = vector.load %arg5[%c0_234, %c0_235, %c0_236] : memref<3x1x32xf32, #tpu.memory_space<vmem>>, vector<1x1x32xf32>
    %390 = vector.shape_cast %389 : vector<1x1x32xf32> to vector<1x32xf32>
    %391 = vector.broadcast %390 : vector<1x32xf32> to vector<2x32xf32>
    %392 = arith.addf %388, %391 : vector<2x32xf32>
    %c1_237 = arith.constant 1 : index
    %c0_238 = arith.constant 0 : index
    %c0_239 = arith.constant 0 : index
    %393 = vector.load %arg3[%c1_237, %c0_238, %c0_239] : memref<3x32x32xbf16, #tpu.memory_space<vmem>>, vector<1x32x32xbf16>
    %394 = vector.shape_cast %393 : vector<1x32x32xbf16> to vector<32x32xbf16>
    %cst_240 = arith.constant dense<0.000000e+00> : vector<2x32xf32>
    %395 = tpu.matmul %385, %394, %cst_240 {dimension_numbers = #tpu.dot_dimension_numbers<[1], [0], [0], [1], [0, 0, 1, 1], [], []>} : vector<2x32xbf16>, vector<32x32xbf16>, vector<2x32xf32> -> vector<2x32xf32>
    %c1_241 = arith.constant 1 : index
    %c0_242 = arith.constant 0 : index
    %c0_243 = arith.constant 0 : index
    %396 = vector.load %arg5[%c1_241, %c0_242, %c0_243] : memref<3x1x32xf32, #tpu.memory_space<vmem>>, vector<1x1x32xf32>
    %397 = vector.shape_cast %396 : vector<1x1x32xf32> to vector<1x32xf32>
    %398 = vector.broadcast %397 : vector<1x32xf32> to vector<2x32xf32>
    %399 = arith.addf %395, %398 : vector<2x32xf32>
    %c2_244 = arith.constant 2 : index
    %c0_245 = arith.constant 0 : index
    %c0_246 = arith.constant 0 : index
    %400 = vector.load %arg3[%c2_244, %c0_245, %c0_246] : memref<3x32x32xbf16, #tpu.memory_space<vmem>>, vector<1x32x32xbf16>
    %401 = vector.shape_cast %400 : vector<1x32x32xbf16> to vector<32x32xbf16>
    %cst_247 = arith.constant dense<0.000000e+00> : vector<2x32xf32>
    %402 = tpu.matmul %385, %401, %cst_247 {dimension_numbers = #tpu.dot_dimension_numbers<[1], [0], [0], [1], [0, 0, 1, 1], [], []>} : vector<2x32xbf16>, vector<32x32xbf16>, vector<2x32xf32> -> vector<2x32xf32>
    %c2_248 = arith.constant 2 : index
    %c0_249 = arith.constant 0 : index
    %c0_250 = arith.constant 0 : index
    %403 = vector.load %arg5[%c2_248, %c0_249, %c0_250] : memref<3x1x32xf32, #tpu.memory_space<vmem>>, vector<1x1x32xf32>
    %404 = vector.shape_cast %403 : vector<1x1x32xf32> to vector<1x32xf32>
    %405 = vector.broadcast %404 : vector<1x32xf32> to vector<2x32xf32>
    %406 = arith.addf %402, %405 : vector<2x32xf32>
    %407 = arith.index_cast %384 : i32 to index
    %c0_251 = arith.constant 0 : index
    %408 = vector.load %arg7[%407, %c0_251] : memref<16x32xf32, #tpu.memory_space<vmem>>, vector<2x32xf32>
    %409 = arith.addf %408, %392 : vector<2x32xf32>
    %410 = arith.negf %409 : vector<2x32xf32>
    %411 = math.exp %410 : vector<2x32xf32>
    %cst_252 = arith.constant 1.000000e+00 : f32
    %412 = vector.broadcast %cst_252 : f32 to vector<2x32xf32>
    %413 = arith.addf %412, %411 : vector<2x32xf32>
    %414 = arith.divf %412, %413 : vector<2x32xf32>
    %415 = arith.index_cast %384 : i32 to index
    %c0_253 = arith.constant 0 : index
    %416 = vector.load %arg8[%415, %c0_253] : memref<16x32xf32, #tpu.memory_space<vmem>>, vector<2x32xf32>
    %417 = arith.addf %416, %399 : vector<2x32xf32>
    %418 = arith.negf %417 : vector<2x32xf32>
    %419 = math.exp %418 : vector<2x32xf32>
    %cst_254 = arith.constant 1.000000e+00 : f32
    %420 = vector.broadcast %cst_254 : f32 to vector<2x32xf32>
    %421 = arith.addf %420, %419 : vector<2x32xf32>
    %422 = arith.divf %420, %421 : vector<2x32xf32>
    %423 = arith.index_cast %384 : i32 to index
    %c0_255 = arith.constant 0 : index
    %424 = vector.load %arg9[%423, %c0_255] : memref<16x32xf32, #tpu.memory_space<vmem>>, vector<2x32xf32>
    %425 = arith.mulf %414, %406 : vector<2x32xf32>
    %426 = arith.addf %424, %425 : vector<2x32xf32>
    %427 = math.tanh %426 : vector<2x32xf32>
    %cst_256 = arith.constant 1.000000e+00 : f32
    %428 = vector.broadcast %cst_256 : f32 to vector<2x32xf32>
    %429 = arith.subf %428, %422 : vector<2x32xf32>
    %430 = arith.mulf %429, %427 : vector<2x32xf32>
    %431 = arith.mulf %422, %381 : vector<2x32xf32>
    %432 = arith.addf %430, %431 : vector<2x32xf32>
    %433 = arith.index_cast %384 : i32 to index
    %c0_257 = arith.constant 0 : index
    %434 = vector.load %arg6[%433, %c0_257] : memref<16x32xf32, #tpu.memory_space<vmem>>, vector<2x32xf32>
    tpu.vector_store %arg6[%433, %c0_257], %432 {strides = array<i32>} : memref<16x32xf32, #tpu.memory_space<vmem>>, vector<2x32xf32>,
    %c8_i32 = arith.constant 8 : i32
    return
  }
  func.func @transform_0(%arg0: i32) -> (i32, i32) {
    %c0_i32 = arith.constant 0 : i32
    %c0_i32_0 = arith.constant 0 : i32
    %c0_i32_1 = arith.constant 0 : i32
    return %c0_i32, %c0_i32_0 : i32, i32
  }
  func.func @transform_1(%arg0: i32) -> (i32, i32, i32) {
    %c0_i32 = arith.constant 0 : i32
    %c0_i32_0 = arith.constant 0 : i32
    %c0_i32_1 = arith.constant 0 : i32
    %c0_i32_2 = arith.constant 0 : i32
    return %c0_i32, %c0_i32_0, %c0_i32_1 : i32, i32, i32
  }
  func.func @transform_2(%arg0: i32) -> (i32, i32, i32) {
    %c0_i32 = arith.constant 0 : i32
    %c0_i32_0 = arith.constant 0 : i32
    %c0_i32_1 = arith.constant 0 : i32
    %c0_i32_2 = arith.constant 0 : i32
    return %c0_i32, %c0_i32_0, %c0_i32_1 : i32, i32, i32
  }
  func.func @transform_3(%arg0: i32) -> (i32, i32, i32) {
    %c0_i32 = arith.constant 0 : i32
    %c0_i32_0 = arith.constant 0 : i32
    %c0_i32_1 = arith.constant 0 : i32
    %c0_i32_2 = arith.constant 0 : i32
    return %c0_i32, %c0_i32_0, %c0_i32_1 : i32, i32, i32
  }
  func.func @transform_4(%arg0: i32) -> (i32, i32, i32) {
    %c0_i32 = arith.constant 0 : i32
    %c0_i32_0 = arith.constant 0 : i32
    %c0_i32_1 = arith.constant 0 : i32
    %c0_i32_2 = arith.constant 0 : i32
    return %c0_i32, %c0_i32_0, %c0_i32_1 : i32, i32, i32
  }
  func.func @transform_5(%arg0: i32) -> (i32, i32) {
    %c0_i32 = arith.constant 0 : i32
    %c0_i32_0 = arith.constant 0 : i32
    %c0_i32_1 = arith.constant 0 : i32
    return %c0_i32, %c0_i32_0 : i32, i32
  }
}

</mosaic_0001>

<llo_original>
// kernel: decoder_forward.2
$region0: #{decoder_forward.2}
  #allocation0 [shape = 'u32[]', space=smem, size = 0x4, offset = 0x4, fixed_abs, tag = 'smem constant byte address 0x4 - core index']
  #allocation1 [shape = 'u32[144,128]{1,0:T(1,128)}', space=vmem, size = 0x12000, scoped, tag = 'internal scratch']
  #allocation2 [shape = 'f32[16,32]{1,0:T(8,128)}', space=vmem, size = 0x2000, scoped, tag = 'scratch operand']
  #allocation3 [shape = 'f32[16,32]{1,0:T(8,128)}', space=vmem, size = 0x2000, scoped, tag = 'scratch operand']
  #allocation4 [shape = 'f32[16,32]{1,0:T(8,128)}', space=vmem, size = 0x2000, scoped, tag = 'scratch operand']
  %s0 = inlined_call_operand.hbm [shape: f32[16,16], index: 0, kind: input, shape index: {}]
  %s1 = inlined_call_operand.hbm [shape: bf16[3,16,32], index: 1, kind: input, shape index: {}]
  %s2 = inlined_call_operand.hbm [shape: bf16[3,32,32], index: 2, kind: input, shape index: {}]
  %s3 = inlined_call_operand.hbm [shape: f32[3,1,32], index: 3, kind: input, shape index: {}]
  %s4 = inlined_call_operand.hbm [shape: f32[3,1,32], index: 4, kind: input, shape index: {}]
  %s5 = inlined_call_operand.hbm [shape: f32[16,32], index: 5, kind: output, shape index: {}]
  %s6 = sld [smem:[#allocation0]]
  $region50: #{decoder_forward.2} parent=0
    _
  %s8 = ssub.s32 1, %s6
  %s9 = scalar_select 0, %s8, %s6
  $region1: #{decoder_forward.2} parent=0
    #allocation5 [shape = 'u8[8192]{0}', space=vmem, size = 0x2000, scoped, tag = 'input window, operand 0, single buffered']
    #allocation6 [shape = 's32[1]{0}', space=sflag, size = 0x4, scoped, tag = 'scoped memory for decoder_forward.2']
    #allocation7 [shape = 's32[1]{0}', space=sflag, size = 0x4, scoped, tag = 'scoped memory for decoder_forward.2']
    #allocation8 [shape = 'u8[12288]{0}', space=vmem, size = 0x3000, scoped, tag = 'input window, operand 1, single buffered']
    #allocation9 [shape = 's32[1]{0}', space=sflag, size = 0x4, scoped, tag = 'scoped memory for decoder_forward.2']
    #allocation10 [shape = 'u8[24576]{0}', space=vmem, size = 0x6000, scoped, tag = 'input window, operand 2, single buffered']
    #allocation11 [shape = 'u8[1536]{0}', space=vmem, size = 0x800, scoped, tag = 'input window, operand 3, single buffered']
    #allocation12 [shape = 's32[1]{0}', space=sflag, size = 0x4, scoped, tag = 'scoped memory for decoder_forward.2']
    #allocation13 [shape = 'u8[1536]{0}', space=vmem, size = 0x800, scoped, tag = 'input window, operand 4, single buffered']
    #allocation14 [shape = 'u8[8192]{0}', space=vmem, size = 0x2000, scoped, tag = 'output window, operand 0, single buffered']
    %10 = vsyncpa [#allocation6], 0
    %11 = vsyncpa [#allocation9], 0
    %12 = vsyncpa [#allocation12], 0
    %13 = vsyncpa [#allocation7], 0
    // Predicated region
    $region2: #{decoder_forward.2} parent=1 // pred_check
      _
    $region3: #{decoder_forward.2} parent=1 // pred_check_branch
      %15 = sbr.rel (0) target = $region5
    $region4: #{decoder_forward.2} parent=1 // pred_region
      %s17 = ssub.s32 256, 256
      %18 = vsyncadd [#allocation6], %s17
      %s19 = sshll.u32 [#allocation5], 4
      %s20 = int_to_ptr.vmem [resolvable:$true] %s19
      %25 = dma.hbm_to_vmem [thread:$0]  %s0, 256, %s20, [#allocation6], 128, 128, 8
    $region5: #{decoder_forward.2} parent=1 // pred_fallthru
      _
    // Predicated region
    $region6: #{decoder_forward.2} parent=1 // pred_check
      _
    $region7: #{decoder_forward.2} parent=1 // pred_check_branch
      %27 = sbr.rel (0) target = $region9
    $region8: #{decoder_forward.2} parent=1 // pred_region
      %s29 = ssub.s32 384, 384
      %30 = vsyncadd [#allocation9], %s29
      %s31 = sshll.u32 [#allocation8], 4
      %s32 = int_to_ptr.vmem [resolvable:$true] %s31
      %37 = dma.hbm_to_vmem [thread:$0]  %s1, 384, %s32, [#allocation9], 64, 64, 4
    $region9: #{decoder_forward.2} parent=1 // pred_fallthru
      _
    // Predicated region
    $region10: #{decoder_forward.2} parent=1 // pred_check
      _
    $region11: #{decoder_forward.2} parent=1 // pred_check_branch
      %39 = sbr.rel (0) target = $region13
    $region12: #{decoder_forward.2} parent=1 // pred_region
      %s41 = ssub.s32 768, 768
      %42 = vsyncadd [#allocation9], %s41
      %s43 = sshll.u32 [#allocation10], 4
      %s44 = int_to_ptr.vmem [resolvable:$true] %s43
      %49 = dma.hbm_to_vmem [thread:$0]  %s2, 768, %s44, [#allocation9], 64, 64, 4
    $region13: #{decoder_forward.2} parent=1 // pred_fallthru
      _
    // Predicated region
    $region14: #{decoder_forward.2} parent=1 // pred_check
      _
    $region15: #{decoder_forward.2} parent=1 // pred_check_branch
      %51 = sbr.rel (0) target = $region17
    $region16: #{decoder_forward.2} parent=1 // pred_region
      %s53 = ssub.s32 48, 48
      %54 = vsyncadd [#allocation12], %s53
      %s55 = sshll.u32 [#allocation11], 4
      %s56 = int_to_ptr.vmem [resolvable:$true] %s55
      %61 = dma.hbm_to_vmem [thread:$0]  %s3, 48, %s56, [#allocation12], 16, 16, 1
    $region17: #{decoder_forward.2} parent=1 // pred_fallthru
      _
    // Predicated region
    $region18: #{decoder_forward.2} parent=1 // pred_check
      _
    $region19: #{decoder_forward.2} parent=1 // pred_check_branch
      %63 = sbr.rel (0) target = $region21
    $region20: #{decoder_forward.2} parent=1 // pred_region
      %s65 = ssub.s32 48, 48
      %66 = vsyncadd [#allocation12], %s65
      %s67 = sshll.u32 [#allocation13], 4
      %s68 = int_to_ptr.vmem [resolvable:$true] %s67
      %73 = dma.hbm_to_vmem [thread:$0]  %s4, 48, %s68, [#allocation12], 16, 16, 1
    $region21: #{decoder_forward.2} parent=1 // pred_fallthru
      _
    // Predicated region
    $region22: #{decoder_forward.2} parent=1 // pred_check
      _
    $region23: #{decoder_forward.2} parent=1 // pred_check_branch
      %75 = sbr.rel (0) target = $region25
    $region24: #{decoder_forward.2} parent=1 // pred_region
      %76 = dma.done [#allocation6], 256
    $region25: #{decoder_forward.2} parent=1 // pred_fallthru
      _
    // Predicated region
    $region26: #{decoder_forward.2} parent=1 // pred_check
      _
    $region27: #{decoder_forward.2} parent=1 // pred_check_branch
      %78 = sbr.rel (0) target = $region29
    $region28: #{decoder_forward.2} parent=1 // pred_region
      %79 = dma.done [#allocation9], 384
    $region29: #{decoder_forward.2} parent=1 // pred_fallthru
      _
    // Predicated region
    $region30: #{decoder_forward.2} parent=1 // pred_check
      _
    $region31: #{decoder_forward.2} parent=1 // pred_check_branch
      %81 = sbr.rel (0) target = $region33
    $region32: #{decoder_forward.2} parent=1 // pred_region
      %82 = dma.done [#allocation9], 768
    $region33: #{decoder_forward.2} parent=1 // pred_fallthru
      _
    // Predicated region
    $region34: #{decoder_forward.2} parent=1 // pred_check
      _
    $region35: #{decoder_forward.2} parent=1 // pred_check_branch
      %84 = sbr.rel (0) target = $region37
    $region36: #{decoder_forward.2} parent=1 // pred_region
      %85 = dma.done [#allocation12], 48
    $region37: #{decoder_forward.2} parent=1 // pred_fallthru
      _
    // Predicated region
    $region38: #{decoder_forward.2} parent=1 // pred_check
      _
    $region39: #{decoder_forward.2} parent=1 // pred_check_branch
      %87 = sbr.rel (0) target = $region41
    $region40: #{decoder_forward.2} parent=1 // pred_region
      %88 = dma.done [#allocation12], 48
    $region41: #{decoder_forward.2} parent=1 // pred_fallthru
      _
    %v90 = vld [vmem:[#allocation5] sm:$0xff]
    %v91 = vld [vmem:[#allocation5 + $0x8] sm:$0xff]
    %v92 = vpack.c.bf16 %v91, %v90
    %v93 = vld [vmem:[#allocation8] sm:$0xf]
    %v94 = vld [vmem:[#allocation8 + $0x4] sm:$0xf]
    %v95 = vld [vmem:[#allocation11] sm:$0x1]
    %v97 = vlaneseq
    %v98 = vshrl.u32 %v97, 7
    %v99 = vsub.s32 0, %v98
    %v100 = vrot.slane %v95, %v99
    %v104 = vunpack.c.l.b16 %v93
    %v105 = vunpack.c.l.b16 %v94
    %v106 = vpack.c.b16 %v105, %v104
    %vm108 = vcmask 130048
    %v110 = vsel %vm108, %v92, 0
    %112 = vmatprep.subr.bf16.mxu0 0
    %113 = vmatpush1.bf16.msra.mxu0 %v106
    %114 = vmatprep.subr.bf16.mxu0 0
    %115 = vmatpush1.bf16.msra.mxu0 0
    %116 = vmatprep.subr.bf16.mxu0 0
    %117 = vmatpush1.bf16.msra.mxu0 0
    %118 = vmatprep.subr.bf16.mxu0 0
    %119 = vmatpush1.bf16.msra.mxu0 0
    %120 = vmatprep.subr.bf16.mxu0 0
    %121 = vmatpush1.bf16.msra.mxu0 0
    %122 = vmatprep.subr.bf16.mxu0 0
    %123 = vmatpush1.bf16.msra.mxu0 0
    %124 = vmatprep.subr.bf16.mxu0 0
    %125 = vmatpush1.bf16.msra.mxu0 0
    %126 = vmatprep.subr.bf16.mxu0 0
    %127 = vmatpush1.bf16.msra.mxu0 0
    %128 = vmatprep.subr.bf16.mxu0 0
    %129 = vmatpush1.bf16.msra.mxu0 0
    %130 = vmatprep.subr.bf16.mxu0 0
    %131 = vmatpush1.bf16.msra.mxu0 0
    %132 = vmatprep.subr.bf16.mxu0 0
    %133 = vmatpush1.bf16.msra.mxu0 0
    %134 = vmatprep.subr.bf16.mxu0 0
    %135 = vmatpush1.bf16.msra.mxu0 0
    %136 = vmatprep.subr.bf16.mxu0 0
    %137 = vmatpush1.bf16.msra.mxu0 0
    %138 = vmatprep.subr.bf16.mxu0 0
    %139 = vmatpush1.bf16.msra.mxu0 0
    %140 = vmatprep.subr.bf16.mxu0 0
    %141 = vmatpush1.bf16.msra.mxu0 0
    %142 = vmatprep.subr.bf16.mxu0 0
    %143 = vmatpush1.bf16.msra.mxu0 0
    %144 = vmatprep.mubr.bf16.mxu0 0
    %145 = vmatmul.mubr.bf16.gmra.mrb[0].mxu0 %v110
    %v146 = vpop.f32.mrb[0].mxu0
    %v147 = vadd.f32 %v100, %v146
    %v148 = vpop.f32.mrb[0].mxu0
    %v149 = vpop.f32.mrb[0].mxu0
    %v150 = vadd.f32 %v100, %v149
    %v151 = vpop.f32.mrb[0].mxu0
    %152 = vdwg.mxu0
    %vm153 = vcmask 261120
    %154 = vst.msk [vmem:[#allocation2] sm:$0xff] %vm153, %v147
    %155 = vst.msk [vmem:[#allocation2 + $0x8] sm:$0xff] %vm153, %v150
    %s156 = scalar_lea.vmem [#allocation8], 8
    %v157 = vld [vmem:[%s156] sm:$0xf]
    %v158 = vld [vmem:[%s156 + $0x4] sm:$0xf]
    %s159 = scalar_lea.vmem [#allocation11], 1
    %v160 = vld [vmem:[%s159] sm:$0x1]
    %v162 = vlaneseq
    %v163 = vshrl.u32 %v162, 7
    %v164 = vsub.s32 0, %v163
    %v165 = vrot.slane %v160, %v164
    %v169 = vunpack.c.l.b16 %v157
    %v170 = vunpack.c.l.b16 %v158
    %v171 = vpack.c.b16 %v170, %v169
    %173 = vmatprep.subr.bf16.mxu0 0
    %174 = vmatpush1.bf16.msra.mxu0 %v171
    %175 = vmatprep.subr.bf16.mxu0 0
    %176 = vmatpush1.bf16.msra.mxu0 0
    %177 = vmatprep.subr.bf16.mxu0 0
    %178 = vmatpush1.bf16.msra.mxu0 0
    %179 = vmatprep.subr.bf16.mxu0 0
    %180 = vmatpush1.bf16.msra.mxu0 0
    %181 = vmatprep.subr.bf16.mxu0 0
    %182 = vmatpush1.bf16.msra.mxu0 0
    %183 = vmatprep.subr.bf16.mxu0 0
    %184 = vmatpush1.bf16.msra.mxu0 0
    %185 = vmatprep.subr.bf16.mxu0 0
    %186 = vmatpush1.bf16.msra.mxu0 0
    %187 = vmatprep.subr.bf16.mxu0 0
    %188 = vmatpush1.bf16.msra.mxu0 0
    %189 = vmatprep.subr.bf16.mxu0 0
    %190 = vmatpush1.bf16.msra.mxu0 0
    %191 = vmatprep.subr.bf16.mxu0 0
    %192 = vmatpush1.bf16.msra.mxu0 0
    %193 = vmatprep.subr.bf16.mxu0 0
    %194 = vmatpush1.bf16.msra.mxu0 0
    %195 = vmatprep.subr.bf16.mxu0 0
    %196 = vmatpush1.bf16.msra.mxu0 0
    %197 = vmatprep.subr.bf16.mxu0 0
    %198 = vmatpush1.bf16.msra.mxu0 0
    %199 = vmatprep.subr.bf16.mxu0 0
    %200 = vmatpush1.bf16.msra.mxu0 0
    %201 = vmatprep.subr.bf16.mxu0 0
    %202 = vmatpush1.bf16.msra.mxu0 0
    %203 = vmatprep.subr.bf16.mxu0 0
    %204 = vmatpush1.bf16.msra.mxu0 0
    %205 = vmatprep.mubr.bf16.mxu0 0
    %206 = vmatmul.mubr.bf16.gmra.mrb[0].mxu0 %v110
    %v207 = vpop.f32.mrb[0].mxu0
    %v208 = vadd.f32 %v165, %v207
    %v209 = vpop.f32.mrb[0].mxu0
    %v210 = vpop.f32.mrb[0].mxu0
    %v211 = vadd.f32 %v165, %v210
    %v212 = vpop.f32.mrb[0].mxu0
    %213 = vdwg.mxu0
    %214 = vst.msk [vmem:[#allocation3] sm:$0xff] %vm153, %v208
    %215 = vst.msk [vmem:[#allocation3 + $0x8] sm:$0xff] %vm153, %v211
    %s216 = scalar_lea.vmem [#allocation8], 16
    %v217 = vld [vmem:[%s216] sm:$0xf]
    %v218 = vld [vmem:[%s216 + $0x4] sm:$0xf]
    %s219 = scalar_lea.vmem [#allocation11], 2
    %v220 = vld [vmem:[%s219] sm:$0x1]
    %v222 = vlaneseq
    %v223 = vshrl.u32 %v222, 7
    %v224 = vsub.s32 0, %v223
    %v225 = vrot.slane %v220, %v224
    %v229 = vunpack.c.l.b16 %v217
    %v230 = vunpack.c.l.b16 %v218
    %v231 = vpack.c.b16 %v230, %v229
    %233 = vmatprep.subr.bf16.mxu0 0
    %234 = vmatpush1.bf16.msra.mxu0 %v231
    %235 = vmatprep.subr.bf16.mxu0 0
    %236 = vmatpush1.bf16.msra.mxu0 0
    %237 = vmatprep.subr.bf16.mxu0 0
    %238 = vmatpush1.bf16.msra.mxu0 0
    %239 = vmatprep.subr.bf16.mxu0 0
    %240 = vmatpush1.bf16.msra.mxu0 0
    %241 = vmatprep.subr.bf16.mxu0 0
    %242 = vmatpush1.bf16.msra.mxu0 0
    %243 = vmatprep.subr.bf16.mxu0 0
    %244 = vmatpush1.bf16.msra.mxu0 0
    %245 = vmatprep.subr.bf16.mxu0 0
    %246 = vmatpush1.bf16.msra.mxu0 0
    %247 = vmatprep.subr.bf16.mxu0 0
    %248 = vmatpush1.bf16.msra.mxu0 0
    %249 = vmatprep.subr.bf16.mxu0 0
    %250 = vmatpush1.bf16.msra.mxu0 0
    %251 = vmatprep.subr.bf16.mxu0 0
    %252 = vmatpush1.bf16.msra.mxu0 0
    %253 = vmatprep.subr.bf16.mxu0 0
    %254 = vmatpush1.bf16.msra.mxu0 0
    %255 = vmatprep.subr.bf16.mxu0 0
    %256 = vmatpush1.bf16.msra.mxu0 0
    %257 = vmatprep.subr.bf16.mxu0 0
    %258 = vmatpush1.bf16.msra.mxu0 0
    %259 = vmatprep.subr.bf16.mxu0 0
    %260 = vmatpush1.bf16.msra.mxu0 0
    %261 = vmatprep.subr.bf16.mxu0 0
    %262 = vmatpush1.bf16.msra.mxu0 0
    %263 = vmatprep.subr.bf16.mxu0 0
    %264 = vmatpush1.bf16.msra.mxu0 0
    %265 = vmatprep.mubr.bf16.mxu0 0
    %266 = vmatmul.mubr.bf16.gmra.mrb[0].mxu0 %v110
    %v267 = vpop.f32.mrb[0].mxu0
    %v268 = vadd.f32 %v225, %v267
    %v269 = vpop.f32.mrb[0].mxu0
    %v270 = vpop.f32.mrb[0].mxu0
    %v271 = vadd.f32 %v225, %v270
    %v272 = vpop.f32.mrb[0].mxu0
    %273 = vdwg.mxu0
    %274 = vst.msk [vmem:[#allocation4] sm:$0xff] %vm153, %v268
    %275 = vst.msk [vmem:[#allocation4 + $0x8] sm:$0xff] %vm153, %v271
    %v276 = vld [vmem:[#allocation10] sm:$0xf]
    %v277 = vld [vmem:[#allocation10 + $0x4] sm:$0xf]
    %v278 = vld [vmem:[#allocation10 + $0x8] sm:$0xf]
    %v279 = vld [vmem:[#allocation10 + $0xc] sm:$0xf]
    %v280 = vld [vmem:[#allocation13] sm:$0x1]
    %v282 = vlaneseq
    %v283 = vshrl.u32 %v282, 7
    %v284 = vsub.s32 0, %v283
    %v285 = vrot.slane %v280, %v284
    %v291 = vunpack.c.l.b16 %v276
    %v292 = vunpack.c.l.b16 %v277
    %v293 = vunpack.c.l.b16 %v278
    %v294 = vunpack.c.l.b16 %v279
    %v295 = vpack.c.b16 %v292, %v291
    %v296 = vpack.c.b16 %v294, %v293
    %v300 = vsel %vm153, 0, 0
    %302 = vmatprep.subr.bf16.mxu0 0
    %303 = vmatpush1.bf16.msra.mxu0 %v295
    %304 = vmatprep.subr.bf16.mxu0 0
    %305 = vmatpush1.bf16.msra.mxu0 %v296
    %306 = vmatprep.subr.bf16.mxu0 0
    %307 = vmatpush1.bf16.msra.mxu0 0
    %308 = vmatprep.subr.bf16.mxu0 0
    %309 = vmatpush1.bf16.msra.mxu0 0
    %310 = vmatprep.subr.bf16.mxu0 0
    %311 = vmatpush1.bf16.msra.mxu0 0
    %312 = vmatprep.subr.bf16.mxu0 0
    %313 = vmatpush1.bf16.msra.mxu0 0
    %314 = vmatprep.subr.bf16.mxu0 0
    %315 = vmatpush1.bf16.msra.mxu0 0
    %316 = vmatprep.subr.bf16.mxu0 0
    %317 = vmatpush1.bf16.msra.mxu0 0
    %318 = vmatprep.subr.bf16.mxu0 0
    %319 = vmatpush1.bf16.msra.mxu0 0
    %320 = vmatprep.subr.bf16.mxu0 0
    %321 = vmatpush1.bf16.msra.mxu0 0
    %322 = vmatprep.subr.bf16.mxu0 0
    %323 = vmatpush1.bf16.msra.mxu0 0
    %324 = vmatprep.subr.bf16.mxu0 0
    %325 = vmatpush1.bf16.msra.mxu0 0
    %326 = vmatprep.subr.bf16.mxu0 0
    %327 = vmatpush1.bf16.msra.mxu0 0
    %328 = vmatprep.subr.bf16.mxu0 0
    %329 = vmatpush1.bf16.msra.mxu0 0
    %330 = vmatprep.subr.bf16.mxu0 0
    %331 = vmatpush1.bf16.msra.mxu0 0
    %332 = vmatprep.subr.bf16.mxu0 0
    %333 = vmatpush1.bf16.msra.mxu0 0
    %334 = vmatprep.mubr.bf16.mxu0 0
    %335 = vmatmul.mubr.bf16.gmra.mrb[0].mxu0 %v300
    %v336 = vpop.f32.mrb[0].mxu0
    %v337 = vadd.f32 %v285, %v336
    %v338 = vpop.f32.mrb[0].mxu0
    %v339 = vpop.f32.mrb[0].mxu0
    %v340 = vpop.f32.mrb[0].mxu0
    %341 = vdwg.mxu0
    %s342 = scalar_lea.vmem [#allocation10], 16
    %v343 = vld [vmem:[%s342] sm:$0xf]
    %v344 = vld [vmem:[%s342 + $0x4] sm:$0xf]
    %v345 = vld [vmem:[%s342 + $0x8] sm:$0xf]
    %v346 = vld [vmem:[%s342 + $0xc] sm:$0xf]
    %s347 = scalar_lea.vmem [#allocation13], 1
    %v348 = vld [vmem:[%s347] sm:$0x1]
    %v350 = vlaneseq
    %v351 = vshrl.u32 %v350, 7
    %v352 = vsub.s32 0, %v351
    %v353 = vrot.slane %v348, %v352
    %v359 = vunpack.c.l.b16 %v343
    %v360 = vunpack.c.l.b16 %v344
    %v361 = vunpack.c.l.b16 %v345
    %v362 = vunpack.c.l.b16 %v346
    %v363 = vpack.c.b16 %v360, %v359
    %v364 = vpack.c.b16 %v362, %v361
    %367 = vmatprep.subr.bf16.mxu0 0
    %368 = vmatpush1.bf16.msra.mxu0 %v363
    %369 = vmatprep.subr.bf16.mxu0 0
    %370 = vmatpush1.bf16.msra.mxu0 %v364
    %371 = vmatprep.subr.bf16.mxu0 0
    %372 = vmatpush1.bf16.msra.mxu0 0
    %373 = vmatprep.subr.bf16.mxu0 0
    %374 = vmatpush1.bf16.msra.mxu0 0
    %375 = vmatprep.subr.bf16.mxu0 0
    %376 = vmatpush1.bf16.msra.mxu0 0
    %377 = vmatprep.subr.bf16.mxu0 0
    %378 = vmatpush1.bf16.msra.mxu0 0
    %379 = vmatprep.subr.bf16.mxu0 0
    %380 = vmatpush1.bf16.msra.mxu0 0
    %381 = vmatprep.subr.bf16.mxu0 0
    %382 = vmatpush1.bf16.msra.mxu0 0
    %383 = vmatprep.subr.bf16.mxu0 0
    %384 = vmatpush1.bf16.msra.mxu0 0
    %385 = vmatprep.subr.bf16.mxu0 0
    %386 = vmatpush1.bf16.msra.mxu0 0
    %387 = vmatprep.subr.bf16.mxu0 0
    %388 = vmatpush1.bf16.msra.mxu0 0
    %389 = vmatprep.subr.bf16.mxu0 0
    %390 = vmatpush1.bf16.msra.mxu0 0
    %391 = vmatprep.subr.bf16.mxu0 0
    %392 = vmatpush1.bf16.msra.mxu0 0
    %393 = vmatprep.subr.bf16.mxu0 0
    %394 = vmatpush1.bf16.msra.mxu0 0
    %395 = vmatprep.subr.bf16.mxu0 0
    %396 = vmatpush1.bf16.msra.mxu0 0
    %397 = vmatprep.subr.bf16.mxu0 0
    %398 = vmatpush1.bf16.msra.mxu0 0
    %399 = vmatprep.mubr.bf16.mxu0 0
    %400 = vmatmul.mubr.bf16.gmra.mrb[0].mxu0 %v300
    %v401 = vpop.f32.mrb[0].mxu0
    %v402 = vadd.f32 %v353, %v401
    %v403 = vpop.f32.mrb[0].mxu0
    %v404 = vpop.f32.mrb[0].mxu0
    %v405 = vpop.f32.mrb[0].mxu0
    %406 = vdwg.mxu0
    %s407 = scalar_lea.vmem [#allocation10], 32
    %v408 = vld [vmem:[%s407] sm:$0xf]
    %v409 = vld [vmem:[%s407 + $0x4] sm:$0xf]
    %v410 = vld [vmem:[%s407 + $0x8] sm:$0xf]
    %v411 = vld [vmem:[%s407 + $0xc] sm:$0xf]
    %s412 = scalar_lea.vmem [#allocation13], 2
    %v413 = vld [vmem:[%s412] sm:$0x1]
    %v415 = vlaneseq
    %v416 = vshrl.u32 %v415, 7
    %v417 = vsub.s32 0, %v416
    %v418 = vrot.slane %v413, %v417
    %v424 = vunpack.c.l.b16 %v408
    %v425 = vunpack.c.l.b16 %v409
    %v426 = vunpack.c.l.b16 %v410
    %v427 = vunpack.c.l.b16 %v411
    %v428 = vpack.c.b16 %v425, %v424
    %v429 = vpack.c.b16 %v427, %v426
    %432 = vmatprep.subr.bf16.mxu0 0
    %433 = vmatpush1.bf16.msra.mxu0 %v428
    %434 = vmatprep.subr.bf16.mxu0 0
    %435 = vmatpush1.bf16.msra.mxu0 %v429
    %436 = vmatprep.subr.bf16.mxu0 0
    %437 = vmatpush1.bf16.msra.mxu0 0
    %438 = vmatprep.subr.bf16.mxu0 0
    %439 = vmatpush1.bf16.msra.mxu0 0
    %440 = vmatprep.subr.bf16.mxu0 0
    %441 = vmatpush1.bf16.msra.mxu0 0
    %442 = vmatprep.subr.bf16.mxu0 0
    %443 = vmatpush1.bf16.msra.mxu0 0
    %444 = vmatprep.subr.bf16.mxu0 0
    %445 = vmatpush1.bf16.msra.mxu0 0
    %446 = vmatprep.subr.bf16.mxu0 0
    %447 = vmatpush1.bf16.msra.mxu0 0
    %448 = vmatprep.subr.bf16.mxu0 0
    %449 = vmatpush1.bf16.msra.mxu0 0
    %450 = vmatprep.subr.bf16.mxu0 0
    %451 = vmatpush1.bf16.msra.mxu0 0
    %452 = vmatprep.subr.bf16.mxu0 0
    %453 = vmatpush1.bf16.msra.mxu0 0
    %454 = vmatprep.subr.bf16.mxu0 0
    %455 = vmatpush1.bf16.msra.mxu0 0
    %456 = vmatprep.subr.bf16.mxu0 0
    %457 = vmatpush1.bf16.msra.mxu0 0
    %458 = vmatprep.subr.bf16.mxu0 0
    %459 = vmatpush1.bf16.msra.mxu0 0
    %460 = vmatprep.subr.bf16.mxu0 0
    %461 = vmatpush1.bf16.msra.mxu0 0
    %462 = vmatprep.subr.bf16.mxu0 0
    %463 = vmatpush1.bf16.msra.mxu0 0
    %464 = vmatprep.mubr.bf16.mxu0 0
    %465 = vmatmul.mubr.bf16.gmra.mrb[0].mxu0 %v300
    %v466 = vpop.f32.mrb[0].mxu0
    %v467 = vadd.f32 %v418, %v466
    %v468 = vpop.f32.mrb[0].mxu0
    %v469 = vpop.f32.mrb[0].mxu0
    %v470 = vpop.f32.mrb[0].mxu0
    %471 = vdwg.mxu0
    %v472 = vld [vmem:[#allocation2] sm:$0x3]
    %v473 = vadd.f32 %v472, %v337
    %v474 = vxor.u32 %v473, 2147483648
    %v475 = vmul.f32 %v474, 1.442695
    %v476 = vpow.pop %v475
    %v477 = vadd.f32 %v476, 1.0
    %v478 = vrcp.pop %v477
    %v479 = vmul.f32 1.0, %v478
    %v480 = vld [vmem:[#allocation3] sm:$0x3]
    %v481 = vadd.f32 %v480, %v402
    %v482 = vxor.u32 %v481, 2147483648
    %v483 = vmul.f32 %v482, 1.442695
    %v484 = vpow.pop %v483
    %v485 = vadd.f32 %v484, 1.0
    %v486 = vrcp.pop %v485
    %v487 = vmul.f32 1.0, %v486
    %v488 = vld [vmem:[#allocation4] sm:$0x3]
    %v489 = vmul.f32 %v479, %v467
    %v490 = vadd.f32 %v488, %v489
    %v491 = vtanh.pop %v490
    %v492 = vsub.f32 1.0, %v487
    %v493 = vmul.f32 %v492, %v491
    %v494 = vmul.f32 %v487, 0.0
    %v495 = vadd.f32 %v493, %v494
    %vm496 = vcmask 254976
    %497 = vst.msk [vmem:[#allocation14] sm:$0x3] %vm496, %v495
    %v498 = vpack.c.bf16 %v495, %v495
    %v499 = vld [vmem:[#allocation10] sm:$0xf]
    %v500 = vld [vmem:[#allocation10 + $0x4] sm:$0xf]
    %v501 = vld [vmem:[#allocation10 + $0x8] sm:$0xf]
    %v502 = vld [vmem:[#allocation10 + $0xc] sm:$0xf]
    %v503 = vld [vmem:[#allocation13] sm:$0x1]
    %v505 = vlaneseq
    %v506 = vshrl.u32 %v505, 7
    %v507 = vsub.s32 0, %v506
    %v508 = vrot.slane %v503, %v507
    %v514 = vunpack.c.l.b16 %v499
    %v515 = vunpack.c.l.b16 %v500
    %v516 = vunpack.c.l.b16 %v501
    %v517 = vunpack.c.l.b16 %v502
    %v518 = vpack.c.b16 %v515, %v514
    %v519 = vpack.c.b16 %v517, %v516
    %v523 = vsel %vm153, %v498, 0
    %525 = vmatprep.subr.bf16.mxu0 0
    %526 = vmatpush1.bf16.msra.mxu0 %v518
    %527 = vmatprep.subr.bf16.mxu0 0
    %528 = vmatpush1.bf16.msra.mxu0 %v519
    %529 = vmatprep.subr.bf16.mxu0 0
    %530 = vmatpush1.bf16.msra.mxu0 0
    %531 = vmatprep.subr.bf16.mxu0 0
    %532 = vmatpush1.bf16.msra.mxu0 0
    %533 = vmatprep.subr.bf16.mxu0 0
    %534 = vmatpush1.bf16.msra.mxu0 0
    %535 = vmatprep.subr.bf16.mxu0 0
    %536 = vmatpush1.bf16.msra.mxu0 0
    %537 = vmatprep.subr.bf16.mxu0 0
    %538 = vmatpush1.bf16.msra.mxu0 0
    %539 = vmatprep.subr.bf16.mxu0 0
    %540 = vmatpush1.bf16.msra.mxu0 0
    %541 = vmatprep.subr.bf16.mxu0 0
    %542 = vmatpush1.bf16.msra.mxu0 0
    %543 = vmatprep.subr.bf16.mxu0 0
    %544 = vmatpush1.bf16.msra.mxu0 0
    %545 = vmatprep.subr.bf16.mxu0 0
    %546 = vmatpush1.bf16.msra.mxu0 0
    %547 = vmatprep.subr.bf16.mxu0 0
    %548 = vmatpush1.bf16.msra.mxu0 0
    %549 = vmatprep.subr.bf16.mxu0 0
    %550 = vmatpush1.bf16.msra.mxu0 0
    %551 = vmatprep.subr.bf16.mxu0 0
    %552 = vmatpush1.bf16.msra.mxu0 0
    %553 = vmatprep.subr.bf16.mxu0 0
    %554 = vmatpush1.bf16.msra.mxu0 0
    %555 = vmatprep.subr.bf16.mxu0 0
    %556 = vmatpush1.bf16.msra.mxu0 0
    %557 = vmatprep.mubr.bf16.mxu0 0
    %558 = vmatmul.mubr.bf16.gmra.mrb[0].mxu0 %v523
    %v559 = vpop.f32.mrb[0].mxu0
    %v560 = vadd.f32 %v508, %v559
    %v561 = vpop.f32.mrb[0].mxu0
    %v562 = vpop.f32.mrb[0].mxu0
    %v563 = vpop.f32.mrb[0].mxu0
    %564 = vdwg.mxu0
    %v565 = vld [vmem:[%s342] sm:$0xf]
    %v566 = vld [vmem:[%s342 + $0x4] sm:$0xf]
    %v567 = vld [vmem:[%s342 + $0x8] sm:$0xf]
    %v568 = vld [vmem:[%s342 + $0xc] sm:$0xf]
    %v569 = vld [vmem:[%s347] sm:$0x1]
    %v571 = vlaneseq
    %v572 = vshrl.u32 %v571, 7
    %v573 = vsub.s32 0, %v572
    %v574 = vrot.slane %v569, %v573
    %v580 = vunpack.c.l.b16 %v565
    %v581 = vunpack.c.l.b16 %v566
    %v582 = vunpack.c.l.b16 %v567
    %v583 = vunpack.c.l.b16 %v568
    %v584 = vpack.c.b16 %v581, %v580
    %v585 = vpack.c.b16 %v583, %v582
    %588 = vmatprep.subr.bf16.mxu0 0
    %589 = vmatpush1.bf16.msra.mxu0 %v584
    %590 = vmatprep.subr.bf16.mxu0 0
    %591 = vmatpush1.bf16.msra.mxu0 %v585
    %592 = vmatprep.subr.bf16.mxu0 0
    %593 = vmatpush1.bf16.msra.mxu0 0
    %594 = vmatprep.subr.bf16.mxu0 0
    %595 = vmatpush1.bf16.msra.mxu0 0
    %596 = vmatprep.subr.bf16.mxu0 0
    %597 = vmatpush1.bf16.msra.mxu0 0
    %598 = vmatprep.subr.bf16.mxu0 0
    %599 = vmatpush1.bf16.msra.mxu0 0
    %600 = vmatprep.subr.bf16.mxu0 0
    %601 = vmatpush1.bf16.msra.mxu0 0
    %602 = vmatprep.subr.bf16.mxu0 0
    %603 = vmatpush1.bf16.msra.mxu0 0
    %604 = vmatprep.subr.bf16.mxu0 0
    %605 = vmatpush1.bf16.msra.mxu0 0
    %606 = vmatprep.subr.bf16.mxu0 0
    %607 = vmatpush1.bf16.msra.mxu0 0
    %608 = vmatprep.subr.bf16.mxu0 0
    %609 = vmatpush1.bf16.msra.mxu0 0
    %610 = vmatprep.subr.bf16.mxu0 0
    %611 = vmatpush1.bf16.msra.mxu0 0
    %612 = vmatprep.subr.bf16.mxu0 0
    %613 = vmatpush1.bf16.msra.mxu0 0
    %614 = vmatprep.subr.bf16.mxu0 0
    %615 = vmatpush1.bf16.msra.mxu0 0
    %616 = vmatprep.subr.bf16.mxu0 0
    %617 = vmatpush1.bf16.msra.mxu0 0
    %618 = vmatprep.subr.bf16.mxu0 0
    %619 = vmatpush1.bf16.msra.mxu0 0
    %620 = vmatprep.mubr.bf16.mxu0 0
    %621 = vmatmul.mubr.bf16.gmra.mrb[0].mxu0 %v523
    %v622 = vpop.f32.mrb[0].mxu0
    %v623 = vadd.f32 %v574, %v622
    %v624 = vpop.f32.mrb[0].mxu0
    %v625 = vpop.f32.mrb[0].mxu0
    %v626 = vpop.f32.mrb[0].mxu0
    %627 = vdwg.mxu0
    %v628 = vld [vmem:[%s407] sm:$0xf]
    %v629 = vld [vmem:[%s407 + $0x4] sm:$0xf]
    %v630 = vld [vmem:[%s407 + $0x8] sm:$0xf]
    %v631 = vld [vmem:[%s407 + $0xc] sm:$0xf]
    %v632 = vld [vmem:[%s412] sm:$0x1]
    %v634 = vlaneseq
    %v635 = vshrl.u32 %v634, 7
    %v636 = vsub.s32 0, %v635
    %v637 = vrot.slane %v632, %v636
    %v643 = vunpack.c.l.b16 %v628
    %v644 = vunpack.c.l.b16 %v629
    %v645 = vunpack.c.l.b16 %v630
    %v646 = vunpack.c.l.b16 %v631
    %v647 = vpack.c.b16 %v644, %v643
    %v648 = vpack.c.b16 %v646, %v645
    %651 = vmatprep.subr.bf16.mxu0 0
    %652 = vmatpush1.bf16.msra.mxu0 %v647
    %653 = vmatprep.subr.bf16.mxu0 0
    %654 = vmatpush1.bf16.msra.mxu0 %v648
    %655 = vmatprep.subr.bf16.mxu0 0
    %656 = vmatpush1.bf16.msra.mxu0 0
    %657 = vmatprep.subr.bf16.mxu0 0
    %658 = vmatpush1.bf16.msra.mxu0 0
    %659 = vmatprep.subr.bf16.mxu0 0
    %660 = vmatpush1.bf16.msra.mxu0 0
    %661 = vmatprep.subr.bf16.mxu0 0
    %662 = vmatpush1.bf16.msra.mxu0 0
    %663 = vmatprep.subr.bf16.mxu0 0
    %664 = vmatpush1.bf16.msra.mxu0 0
    %665 = vmatprep.subr.bf16.mxu0 0
    %666 = vmatpush1.bf16.msra.mxu0 0
    %667 = vmatprep.subr.bf16.mxu0 0
    %668 = vmatpush1.bf16.msra.mxu0 0
    %669 = vmatprep.subr.bf16.mxu0 0
    %670 = vmatpush1.bf16.msra.mxu0 0
    %671 = vmatprep.subr.bf16.mxu0 0
    %672 = vmatpush1.bf16.msra.mxu0 0
    %673 = vmatprep.subr.bf16.mxu0 0
    %674 = vmatpush1.bf16.msra.mxu0 0
    %675 = vmatprep.subr.bf16.mxu0 0
    %676 = vmatpush1.bf16.msra.mxu0 0
    %677 = vmatprep.subr.bf16.mxu0 0
    %678 = vmatpush1.bf16.msra.mxu0 0
    %679 = vmatprep.subr.bf16.mxu0 0
    %680 = vmatpush1.bf16.msra.mxu0 0
    %681 = vmatprep.subr.bf16.mxu0 0
    %682 = vmatpush1.bf16.msra.mxu0 0
    %683 = vmatprep.mubr.bf16.mxu0 0
    %684 = vmatmul.mubr.bf16.gmra.mrb[0].mxu0 %v523
    %v685 = vpop.f32.mrb[0].mxu0
    %v686 = vadd.f32 %v637, %v685
    %v687 = vpop.f32.mrb[0].mxu0
    %v688 = vpop.f32.mrb[0].mxu0
    %v689 = vpop.f32.mrb[0].mxu0
    %690 = vdwg.mxu0
    %v691 = vld [vmem:[#allocation2 + $0x2] sm:$0x3]
    %v692 = vadd.f32 %v691, %v560
    %v693 = vxor.u32 %v692, 2147483648
    %v694 = vmul.f32 %v693, 1.442695
    %v695 = vpow.pop %v694
    %v696 = vadd.f32 %v695, 1.0
    %v697 = vrcp.pop %v696
    %v698 = vmul.f32 1.0, %v697
    %v699 = vld [vmem:[#allocation3 + $0x2] sm:$0x3]
    %v700 = vadd.f32 %v699, %v623
    %v701 = vxor.u32 %v700, 2147483648
    %v702 = vmul.f32 %v701, 1.442695
    %v703 = vpow.pop %v702
    %v704 = vadd.f32 %v703, 1.0
    %v705 = vrcp.pop %v704
    %v706 = vmul.f32 1.0, %v705
    %v707 = vld [vmem:[#allocation4 + $0x2] sm:$0x3]
    %v708 = vmul.f32 %v698, %v686
    %v709 = vadd.f32 %v707, %v708
    %v710 = vtanh.pop %v709
    %v711 = vsub.f32 1.0, %v706
    %v712 = vmul.f32 %v711, %v710
    %v713 = vmul.f32 %v706, %v495
    %v714 = vadd.f32 %v712, %v713
    %715 = vst.msk [vmem:[#allocation14 + $0x2] sm:$0x3] %vm496, %v714
    %v716 = vpack.c.bf16 %v714, %v714
    %v717 = vld [vmem:[#allocation10] sm:$0xf]
    %v718 = vld [vmem:[#allocation10 + $0x4] sm:$0xf]
    %v719 = vld [vmem:[#allocation10 + $0x8] sm:$0xf]
    %v720 = vld [vmem:[#allocation10 + $0xc] sm:$0xf]
    %v721 = vld [vmem:[#allocation13] sm:$0x1]
    %v723 = vlaneseq
    %v724 = vshrl.u32 %v723, 7
    %v725 = vsub.s32 0, %v724
    %v726 = vrot.slane %v721, %v725
    %v732 = vunpack.c.l.b16 %v717
    %v733 = vunpack.c.l.b16 %v718
    %v734 = vunpack.c.l.b16 %v719
    %v735 = vunpack.c.l.b16 %v720
    %v736 = vpack.c.b16 %v733, %v732
    %v737 = vpack.c.b16 %v735, %v734
    %v741 = vsel %vm153, %v716, 0
    %743 = vmatprep.subr.bf16.mxu0 0
    %744 = vmatpush1.bf16.msra.mxu0 %v736
    %745 = vmatprep.subr.bf16.mxu0 0
    %746 = vmatpush1.bf16.msra.mxu0 %v737
    %747 = vmatprep.subr.bf16.mxu0 0
    %748 = vmatpush1.bf16.msra.mxu0 0
    %749 = vmatprep.subr.bf16.mxu0 0
    %750 = vmatpush1.bf16.msra.mxu0 0
    %751 = vmatprep.subr.bf16.mxu0 0
    %752 = vmatpush1.bf16.msra.mxu0 0
    %753 = vmatprep.subr.bf16.mxu0 0
    %754 = vmatpush1.bf16.msra.mxu0 0
    %755 = vmatprep.subr.bf16.mxu0 0
    %756 = vmatpush1.bf16.msra.mxu0 0
    %757 = vmatprep.subr.bf16.mxu0 0
    %758 = vmatpush1.bf16.msra.mxu0 0
    %759 = vmatprep.subr.bf16.mxu0 0
    %760 = vmatpush1.bf16.msra.mxu0 0
    %761 = vmatprep.subr.bf16.mxu0 0
    %762 = vmatpush1.bf16.msra.mxu0 0
    %763 = vmatprep.subr.bf16.mxu0 0
    %764 = vmatpush1.bf16.msra.mxu0 0
    %765 = vmatprep.subr.bf16.mxu0 0
    %766 = vmatpush1.bf16.msra.mxu0 0
    %767 = vmatprep.subr.bf16.mxu0 0
    %768 = vmatpush1.bf16.msra.mxu0 0
    %769 = vmatprep.subr.bf16.mxu0 0
    %770 = vmatpush1.bf16.msra.mxu0 0
    %771 = vmatprep.subr.bf16.mxu0 0
    %772 = vmatpush1.bf16.msra.mxu0 0
    %773 = vmatprep.subr.bf16.mxu0 0
    %774 = vmatpush1.bf16.msra.mxu0 0
    %775 = vmatprep.mubr.bf16.mxu0 0
    %776 = vmatmul.mubr.bf16.gmra.mrb[0].mxu0 %v741
    %v777 = vpop.f32.mrb[0].mxu0
    %v778 = vadd.f32 %v726, %v777
    %v779 = vpop.f32.mrb[0].mxu0
    %v780 = vpop.f32.mrb[0].mxu0
    %v781 = vpop.f32.mrb[0].mxu0
    %782 = vdwg.mxu0
    %v783 = vld [vmem:[%s342] sm:$0xf]
    %v784 = vld [vmem:[%s342 + $0x4] sm:$0xf]
    %v785 = vld [vmem:[%s342 + $0x8] sm:$0xf]
    %v786 = vld [vmem:[%s342 + $0xc] sm:$0xf]
    %v787 = vld [vmem:[%s347] sm:$0x1]
    %v789 = vlaneseq
    %v790 = vshrl.u32 %v789, 7
    %v791 = vsub.s32 0, %v790
    %v792 = vrot.slane %v787, %v791
    %v798 = vunpack.c.l.b16 %v783
    %v799 = vunpack.c.l.b16 %v784
    %v800 = vunpack.c.l.b16 %v785
    %v801 = vunpack.c.l.b16 %v786
    %v802 = vpack.c.b16 %v799, %v798
    %v803 = vpack.c.b16 %v801, %v800
    %806 = vmatprep.subr.bf16.mxu0 0
    %807 = vmatpush1.bf16.msra.mxu0 %v802
    %808 = vmatprep.subr.bf16.mxu0 0
    %809 = vmatpush1.bf16.msra.mxu0 %v803
    %810 = vmatprep.subr.bf16.mxu0 0
    %811 = vmatpush1.bf16.msra.mxu0 0
    %812 = vmatprep.subr.bf16.mxu0 0
    %813 = vmatpush1.bf16.msra.mxu0 0
    %814 = vmatprep.subr.bf16.mxu0 0
    %815 = vmatpush1.bf16.msra.mxu0 0
    %816 = vmatprep.subr.bf16.mxu0 0
    %817 = vmatpush1.bf16.msra.mxu0 0
    %818 = vmatprep.subr.bf16.mxu0 0
    %819 = vmatpush1.bf16.msra.mxu0 0
    %820 = vmatprep.subr.bf16.mxu0 0
    %821 = vmatpush1.bf16.msra.mxu0 0
    %822 = vmatprep.subr.bf16.mxu0 0
    %823 = vmatpush1.bf16.msra.mxu0 0
    %824 = vmatprep.subr.bf16.mxu0 0
    %825 = vmatpush1.bf16.msra.mxu0 0
    %826 = vmatprep.subr.bf16.mxu0 0
    %827 = vmatpush1.bf16.msra.mxu0 0
    %828 = vmatprep.subr.bf16.mxu0 0
    %829 = vmatpush1.bf16.msra.mxu0 0
    %830 = vmatprep.subr.bf16.mxu0 0
    %831 = vmatpush1.bf16.msra.mxu0 0
    %832 = vmatprep.subr.bf16.mxu0 0
    %833 = vmatpush1.bf16.msra.mxu0 0
    %834 = vmatprep.subr.bf16.mxu0 0
    %835 = vmatpush1.bf16.msra.mxu0 0
    %836 = vmatprep.subr.bf16.mxu0 0
    %837 = vmatpush1.bf16.msra.mxu0 0
    %838 = vmatprep.mubr.bf16.mxu0 0
    %839 = vmatmul.mubr.bf16.gmra.mrb[0].mxu0 %v741
    %v840 = vpop.f32.mrb[0].mxu0
    %v841 = vadd.f32 %v792, %v840
    %v842 = vpop.f32.mrb[0].mxu0
    %v843 = vpop.f32.mrb[0].mxu0
    %v844 = vpop.f32.mrb[0].mxu0
    %845 = vdwg.mxu0
    %v846 = vld [vmem:[%s407] sm:$0xf]
    %v847 = vld [vmem:[%s407 + $0x4] sm:$0xf]
    %v848 = vld [vmem:[%s407 + $0x8] sm:$0xf]
    %v849 = vld [vmem:[%s407 + $0xc] sm:$0xf]
    %v850 = vld [vmem:[%s412] sm:$0x1]
    %v852 = vlaneseq
    %v853 = vshrl.u32 %v852, 7
    %v854 = vsub.s32 0, %v853
    %v855 = vrot.slane %v850, %v854
    %v861 = vunpack.c.l.b16 %v846
    %v862 = vunpack.c.l.b16 %v847
    %v863 = vunpack.c.l.b16 %v848
    %v864 = vunpack.c.l.b16 %v849
    %v865 = vpack.c.b16 %v862, %v861
    %v866 = vpack.c.b16 %v864, %v863
    %869 = vmatprep.subr.bf16.mxu0 0
    %870 = vmatpush1.bf16.msra.mxu0 %v865
    %871 = vmatprep.subr.bf16.mxu0 0
    %872 = vmatpush1.bf16.msra.mxu0 %v866
    %873 = vmatprep.subr.bf16.mxu0 0
    %874 = vmatpush1.bf16.msra.mxu0 0
    %875 = vmatprep.subr.bf16.mxu0 0
    %876 = vmatpush1.bf16.msra.mxu0 0
    %877 = vmatprep.subr.bf16.mxu0 0
    %878 = vmatpush1.bf16.msra.mxu0 0
    %879 = vmatprep.subr.bf16.mxu0 0
    %880 = vmatpush1.bf16.msra.mxu0 0
    %881 = vmatprep.subr.bf16.mxu0 0
    %882 = vmatpush1.bf16.msra.mxu0 0
    %883 = vmatprep.subr.bf16.mxu0 0
    %884 = vmatpush1.bf16.msra.mxu0 0
    %885 = vmatprep.subr.bf16.mxu0 0
    %886 = vmatpush1.bf16.msra.mxu0 0
    %887 = vmatprep.subr.bf16.mxu0 0
    %888 = vmatpush1.bf16.msra.mxu0 0
    %889 = vmatprep.subr.bf16.mxu0 0
    %890 = vmatpush1.bf16.msra.mxu0 0
    %891 = vmatprep.subr.bf16.mxu0 0
    %892 = vmatpush1.bf16.msra.mxu0 0
    %893 = vmatprep.subr.bf16.mxu0 0
    %894 = vmatpush1.bf16.msra.mxu0 0
    %895 = vmatprep.subr.bf16.mxu0 0
    %896 = vmatpush1.bf16.msra.mxu0 0
    %897 = vmatprep.subr.bf16.mxu0 0
    %898 = vmatpush1.bf16.msra.mxu0 0
    %899 = vmatprep.subr.bf16.mxu0 0
    %900 = vmatpush1.bf16.msra.mxu0 0
    %901 = vmatprep.mubr.bf16.mxu0 0
    %902 = vmatmul.mubr.bf16.gmra.mrb[0].mxu0 %v741
    %v903 = vpop.f32.mrb[0].mxu0
    %v904 = vadd.f32 %v855, %v903
    %v905 = vpop.f32.mrb[0].mxu0
    %v906 = vpop.f32.mrb[0].mxu0
    %v907 = vpop.f32.mrb[0].mxu0
    %908 = vdwg.mxu0
    %v909 = vld [vmem:[#allocation2 + $0x4] sm:$0x3]
    %v910 = vadd.f32 %v909, %v778
    %v911 = vxor.u32 %v910, 2147483648
    %v912 = vmul.f32 %v911, 1.442695
    %v913 = vpow.pop %v912
    %v914 = vadd.f32 %v913, 1.0
    %v915 = vrcp.pop %v914
    %v916 = vmul.f32 1.0, %v915
    %v917 = vld [vmem:[#allocation3 + $0x4] sm:$0x3]
    %v918 = vadd.f32 %v917, %v841
    %v919 = vxor.u32 %v918, 2147483648
    %v920 = vmul.f32 %v919, 1.442695
    %v921 = vpow.pop %v920
    %v922 = vadd.f32 %v921, 1.0
    %v923 = vrcp.pop %v922
    %v924 = vmul.f32 1.0, %v923
    %v925 = vld [vmem:[#allocation4 + $0x4] sm:$0x3]
    %v926 = vmul.f32 %v916, %v904
    %v927 = vadd.f32 %v925, %v926
    %v928 = vtanh.pop %v927
    %v929 = vsub.f32 1.0, %v924
    %v930 = vmul.f32 %v929, %v928
    %v931 = vmul.f32 %v924, %v714
    %v932 = vadd.f32 %v930, %v931
    %933 = vst.msk [vmem:[#allocation14 + $0x4] sm:$0x3] %vm496, %v932
    %v934 = vpack.c.bf16 %v932, %v932
    %v935 = vld [vmem:[#allocation10] sm:$0xf]
    %v936 = vld [vmem:[#allocation10 + $0x4] sm:$0xf]
    %v937 = vld [vmem:[#allocation10 + $0x8] sm:$0xf]
    %v938 = vld [vmem:[#allocation10 + $0xc] sm:$0xf]
    %v939 = vld [vmem:[#allocation13] sm:$0x1]
    %v941 = vlaneseq
    %v942 = vshrl.u32 %v941, 7
    %v943 = vsub.s32 0, %v942
    %v944 = vrot.slane %v939, %v943
    %v950 = vunpack.c.l.b16 %v935
    %v951 = vunpack.c.l.b16 %v936
    %v952 = vunpack.c.l.b16 %v937
    %v953 = vunpack.c.l.b16 %v938
    %v954 = vpack.c.b16 %v951, %v950
    %v955 = vpack.c.b16 %v953, %v952
    %v959 = vsel %vm153, %v934, 0
    %961 = vmatprep.subr.bf16.mxu0 0
    %962 = vmatpush1.bf16.msra.mxu0 %v954
    %963 = vmatprep.subr.bf16.mxu0 0
    %964 = vmatpush1.bf16.msra.mxu0 %v955
    %965 = vmatprep.subr.bf16.mxu0 0
    %966 = vmatpush1.bf16.msra.mxu0 0
    %967 = vmatprep.subr.bf16.mxu0 0
    %968 = vmatpush1.bf16.msra.mxu0 0
    %969 = vmatprep.subr.bf16.mxu0 0
    %970 = vmatpush1.bf16.msra.mxu0 0
    %971 = vmatprep.subr.bf16.mxu0 0
    %972 = vmatpush1.bf16.msra.mxu0 0
    %973 = vmatprep.subr.bf16.mxu0 0
    %974 = vmatpush1.bf16.msra.mxu0 0
    %975 = vmatprep.subr.bf16.mxu0 0
    %976 = vmatpush1.bf16.msra.mxu0 0
    %977 = vmatprep.subr.bf16.mxu0 0
    %978 = vmatpush1.bf16.msra.mxu0 0
    %979 = vmatprep.subr.bf16.mxu0 0
    %980 = vmatpush1.bf16.msra.mxu0 0
    %981 = vmatprep.subr.bf16.mxu0 0
    %982 = vmatpush1.bf16.msra.mxu0 0
    %983 = vmatprep.subr.bf16.mxu0 0
    %984 = vmatpush1.bf16.msra.mxu0 0
    %985 = vmatprep.subr.bf16.mxu0 0
    %986 = vmatpush1.bf16.msra.mxu0 0
    %987 = vmatprep.subr.bf16.mxu0 0
    %988 = vmatpush1.bf16.msra.mxu0 0
    %989 = vmatprep.subr.bf16.mxu0 0
    %990 = vmatpush1.bf16.msra.mxu0 0
    %991 = vmatprep.subr.bf16.mxu0 0
    %992 = vmatpush1.bf16.msra.mxu0 0
    %993 = vmatprep.mubr.bf16.mxu0 0
    %994 = vmatmul.mubr.bf16.gmra.mrb[0].mxu0 %v959
    %v995 = vpop.f32.mrb[0].mxu0
    %v996 = vadd.f32 %v944, %v995
    %v997 = vpop.f32.mrb[0].mxu0
    %v998 = vpop.f32.mrb[0].mxu0
    %v999 = vpop.f32.mrb[0].mxu0
    %1000 = vdwg.mxu0
    %v1001 = vld [vmem:[%s342] sm:$0xf]
    %v1002 = vld [vmem:[%s342 + $0x4] sm:$0xf]
    %v1003 = vld [vmem:[%s342 + $0x8] sm:$0xf]
    %v1004 = vld [vmem:[%s342 + $0xc] sm:$0xf]
    %v1005 = vld [vmem:[%s347] sm:$0x1]
    %v1007 = vlaneseq
    %v1008 = vshrl.u32 %v1007, 7
    %v1009 = vsub.s32 0, %v1008
    %v1010 = vrot.slane %v1005, %v1009
    %v1016 = vunpack.c.l.b16 %v1001
    %v1017 = vunpack.c.l.b16 %v1002
    %v1018 = vunpack.c.l.b16 %v1003
    %v1019 = vunpack.c.l.b16 %v1004
    %v1020 = vpack.c.b16 %v1017, %v1016
    %v1021 = vpack.c.b16 %v1019, %v1018
    %1024 = vmatprep.subr.bf16.mxu0 0
    %1025 = vmatpush1.bf16.msra.mxu0 %v1020
    %1026 = vmatprep.subr.bf16.mxu0 0
    %1027 = vmatpush1.bf16.msra.mxu0 %v1021
    %1028 = vmatprep.subr.bf16.mxu0 0
    %1029 = vmatpush1.bf16.msra.mxu0 0
    %1030 = vmatprep.subr.bf16.mxu0 0
    %1031 = vmatpush1.bf16.msra.mxu0 0
    %1032 = vmatprep.subr.bf16.mxu0 0
    %1033 = vmatpush1.bf16.msra.mxu0 0
    %1034 = vmatprep.subr.bf16.mxu0 0
    %1035 = vmatpush1.bf16.msra.mxu0 0
    %1036 = vmatprep.subr.bf16.mxu0 0
    %1037 = vmatpush1.bf16.msra.mxu0 0
    %1038 = vmatprep.subr.bf16.mxu0 0
    %1039 = vmatpush1.bf16.msra.mxu0 0
    %1040 = vmatprep.subr.bf16.mxu0 0
    %1041 = vmatpush1.bf16.msra.mxu0 0
    %1042 = vmatprep.subr.bf16.mxu0 0
    %1043 = vmatpush1.bf16.msra.mxu0 0
    %1044 = vmatprep.subr.bf16.mxu0 0
    %1045 = vmatpush1.bf16.msra.mxu0 0
    %1046 = vmatprep.subr.bf16.mxu0 0
    %1047 = vmatpush1.bf16.msra.mxu0 0
    %1048 = vmatprep.subr.bf16.mxu0 0
    %1049 = vmatpush1.bf16.msra.mxu0 0
    %1050 = vmatprep.subr.bf16.mxu0 0
    %1051 = vmatpush1.bf16.msra.mxu0 0
    %1052 = vmatprep.subr.bf16.mxu0 0
    %1053 = vmatpush1.bf16.msra.mxu0 0
    %1054 = vmatprep.subr.bf16.mxu0 0
    %1055 = vmatpush1.bf16.msra.mxu0 0
    %1056 = vmatprep.mubr.bf16.mxu0 0
    %1057 = vmatmul.mubr.bf16.gmra.mrb[0].mxu0 %v959
    %v1058 = vpop.f32.mrb[0].mxu0
    %v1059 = vadd.f32 %v1010, %v1058
    %v1060 = vpop.f32.mrb[0].mxu0
    %v1061 = vpop.f32.mrb[0].mxu0
    %v1062 = vpop.f32.mrb[0].mxu0
    %1063 = vdwg.mxu0
    %v1064 = vld [vmem:[%s407] sm:$0xf]
    %v1065 = vld [vmem:[%s407 + $0x4] sm:$0xf]
    %v1066 = vld [vmem:[%s407 + $0x8] sm:$0xf]
    %v1067 = vld [vmem:[%s407 + $0xc] sm:$0xf]
    %v1068 = vld [vmem:[%s412] sm:$0x1]
    %v1070 = vlaneseq
    %v1071 = vshrl.u32 %v1070, 7
    %v1072 = vsub.s32 0, %v1071
    %v1073 = vrot.slane %v1068, %v1072
    %v1079 = vunpack.c.l.b16 %v1064
    %v1080 = vunpack.c.l.b16 %v1065
    %v1081 = vunpack.c.l.b16 %v1066
    %v1082 = vunpack.c.l.b16 %v1067
    %v1083 = vpack.c.b16 %v1080, %v1079
    %v1084 = vpack.c.b16 %v1082, %v1081
    %1087 = vmatprep.subr.bf16.mxu0 0
    %1088 = vmatpush1.bf16.msra.mxu0 %v1083
    %1089 = vmatprep.subr.bf16.mxu0 0
    %1090 = vmatpush1.bf16.msra.mxu0 %v1084
    %1091 = vmatprep.subr.bf16.mxu0 0
    %1092 = vmatpush1.bf16.msra.mxu0 0
    %1093 = vmatprep.subr.bf16.mxu0 0
    %1094 = vmatpush1.bf16.msra.mxu0 0
    %1095 = vmatprep.subr.bf16.mxu0 0
    %1096 = vmatpush1.bf16.msra.mxu0 0
    %1097 = vmatprep.subr.bf16.mxu0 0
    %1098 = vmatpush1.bf16.msra.mxu0 0
    %1099 = vmatprep.subr.bf16.mxu0 0
    %1100 = vmatpush1.bf16.msra.mxu0 0
    %1101 = vmatprep.subr.bf16.mxu0 0
    %1102 = vmatpush1.bf16.msra.mxu0 0
    %1103 = vmatprep.subr.bf16.mxu0 0
    %1104 = vmatpush1.bf16.msra.mxu0 0
    %1105 = vmatprep.subr.bf16.mxu0 0
    %1106 = vmatpush1.bf16.msra.mxu0 0
    %1107 = vmatprep.subr.bf16.mxu0 0
    %1108 = vmatpush1.bf16.msra.mxu0 0
    %1109 = vmatprep.subr.bf16.mxu0 0
    %1110 = vmatpush1.bf16.msra.mxu0 0
    %1111 = vmatprep.subr.bf16.mxu0 0
    %1112 = vmatpush1.bf16.msra.mxu0 0
    %1113 = vmatprep.subr.bf16.mxu0 0
    %1114 = vmatpush1.bf16.msra.mxu0 0
    %1115 = vmatprep.subr.bf16.mxu0 0
    %1116 = vmatpush1.bf16.msra.mxu0 0
    %1117 = vmatprep.subr.bf16.mxu0 0
    %1118 = vmatpush1.bf16.msra.mxu0 0
    %1119 = vmatprep.mubr.bf16.mxu0 0
    %1120 = vmatmul.mubr.bf16.gmra.mrb[0].mxu0 %v959
    %v1121 = vpop.f32.mrb[0].mxu0
    %v1122 = vadd.f32 %v1073, %v1121
    %v1123 = vpop.f32.mrb[0].mxu0
    %v1124 = vpop.f32.mrb[0].mxu0
    %v1125 = vpop.f32.mrb[0].mxu0
    %1126 = vdwg.mxu0
    %v1127 = vld [vmem:[#allocation2 + $0x6] sm:$0x3]
    %v1128 = vadd.f32 %v1127, %v996
    %v1129 = vxor.u32 %v1128, 2147483648
    %v1130 = vmul.f32 %v1129, 1.442695
    %v1131 = vpow.pop %v1130
    %v1132 = vadd.f32 %v1131, 1.0
    %v1133 = vrcp.pop %v1132
    %v1134 = vmul.f32 1.0, %v1133
    %v1135 = vld [vmem:[#allocation3 + $0x6] sm:$0x3]
    %v1136 = vadd.f32 %v1135, %v1059
    %v1137 = vxor.u32 %v1136, 2147483648
    %v1138 = vmul.f32 %v1137, 1.442695
    %v1139 = vpow.pop %v1138
    %v1140 = vadd.f32 %v1139, 1.0
    %v1141 = vrcp.pop %v1140
    %v1142 = vmul.f32 1.0, %v1141
    %v1143 = vld [vmem:[#allocation4 + $0x6] sm:$0x3]
    %v1144 = vmul.f32 %v1134, %v1122
    %v1145 = vadd.f32 %v1143, %v1144
    %v1146 = vtanh.pop %v1145
    %v1147 = vsub.f32 1.0, %v1142
    %v1148 = vmul.f32 %v1147, %v1146
    %v1149 = vmul.f32 %v1142, %v932
    %v1150 = vadd.f32 %v1148, %v1149
    %1151 = vst.msk [vmem:[#allocation14 + $0x6] sm:$0x3] %vm496, %v1150
    %v1152 = vpack.c.bf16 %v1150, %v1150
    %v1153 = vld [vmem:[#allocation10] sm:$0xf]
    %v1154 = vld [vmem:[#allocation10 + $0x4] sm:$0xf]
    %v1155 = vld [vmem:[#allocation10 + $0x8] sm:$0xf]
    %v1156 = vld [vmem:[#allocation10 + $0xc] sm:$0xf]
    %v1157 = vld [vmem:[#allocation13] sm:$0x1]
    %v1159 = vlaneseq
    %v1160 = vshrl.u32 %v1159, 7
    %v1161 = vsub.s32 0, %v1160
    %v1162 = vrot.slane %v1157, %v1161
    %v1168 = vunpack.c.l.b16 %v1153
    %v1169 = vunpack.c.l.b16 %v1154
    %v1170 = vunpack.c.l.b16 %v1155
    %v1171 = vunpack.c.l.b16 %v1156
    %v1172 = vpack.c.b16 %v1169, %v1168
    %v1173 = vpack.c.b16 %v1171, %v1170
    %v1177 = vsel %vm153, %v1152, 0
    %1179 = vmatprep.subr.bf16.mxu0 0
    %1180 = vmatpush1.bf16.msra.mxu0 %v1172
    %1181 = vmatprep.subr.bf16.mxu0 0
    %1182 = vmatpush1.bf16.msra.mxu0 %v1173
    %1183 = vmatprep.subr.bf16.mxu0 0
    %1184 = vmatpush1.bf16.msra.mxu0 0
    %1185 = vmatprep.subr.bf16.mxu0 0
    %1186 = vmatpush1.bf16.msra.mxu0 0
    %1187 = vmatprep.subr.bf16.mxu0 0
    %1188 = vmatpush1.bf16.msra.mxu0 0
    %1189 = vmatprep.subr.bf16.mxu0 0
    %1190 = vmatpush1.bf16.msra.mxu0 0
    %1191 = vmatprep.subr.bf16.mxu0 0
    %1192 = vmatpush1.bf16.msra.mxu0 0
    %1193 = vmatprep.subr.bf16.mxu0 0
    %1194 = vmatpush1.bf16.msra.mxu0 0
    %1195 = vmatprep.subr.bf16.mxu0 0
    %1196 = vmatpush1.bf16.msra.mxu0 0
    %1197 = vmatprep.subr.bf16.mxu0 0
    %1198 = vmatpush1.bf16.msra.mxu0 0
    %1199 = vmatprep.subr.bf16.mxu0 0
    %1200 = vmatpush1.bf16.msra.mxu0 0
    %1201 = vmatprep.subr.bf16.mxu0 0
    %1202 = vmatpush1.bf16.msra.mxu0 0
    %1203 = vmatprep.subr.bf16.mxu0 0
    %1204 = vmatpush1.bf16.msra.mxu0 0
    %1205 = vmatprep.subr.bf16.mxu0 0
    %1206 = vmatpush1.bf16.msra.mxu0 0
    %1207 = vmatprep.subr.bf16.mxu0 0
    %1208 = vmatpush1.bf16.msra.mxu0 0
    %1209 = vmatprep.subr.bf16.mxu0 0
    %1210 = vmatpush1.bf16.msra.mxu0 0
    %1211 = vmatprep.mubr.bf16.mxu0 0
    %1212 = vmatmul.mubr.bf16.gmra.mrb[0].mxu0 %v1177
    %v1213 = vpop.f32.mrb[0].mxu0
    %v1214 = vadd.f32 %v1162, %v1213
    %v1215 = vpop.f32.mrb[0].mxu0
    %v1216 = vpop.f32.mrb[0].mxu0
    %v1217 = vpop.f32.mrb[0].mxu0
    %1218 = vdwg.mxu0
    %v1219 = vld [vmem:[%s342] sm:$0xf]
    %v1220 = vld [vmem:[%s342 + $0x4] sm:$0xf]
    %v1221 = vld [vmem:[%s342 + $0x8] sm:$0xf]
    %v1222 = vld [vmem:[%s342 + $0xc] sm:$0xf]
    %v1223 = vld [vmem:[%s347] sm:$0x1]
    %v1225 = vlaneseq
    %v1226 = vshrl.u32 %v1225, 7
    %v1227 = vsub.s32 0, %v1226
    %v1228 = vrot.slane %v1223, %v1227
    %v1234 = vunpack.c.l.b16 %v1219
    %v1235 = vunpack.c.l.b16 %v1220
    %v1236 = vunpack.c.l.b16 %v1221
    %v1237 = vunpack.c.l.b16 %v1222
    %v1238 = vpack.c.b16 %v1235, %v1234
    %v1239 = vpack.c.b16 %v1237, %v1236
    %1242 = vmatprep.subr.bf16.mxu0 0
    %1243 = vmatpush1.bf16.msra.mxu0 %v1238
    %1244 = vmatprep.subr.bf16.mxu0 0
    %1245 = vmatpush1.bf16.msra.mxu0 %v1239
    %1246 = vmatprep.subr.bf16.mxu0 0
    %1247 = vmatpush1.bf16.msra.mxu0 0
    %1248 = vmatprep.subr.bf16.mxu0 0
    %1249 = vmatpush1.bf16.msra.mxu0 0
    %1250 = vmatprep.subr.bf16.mxu0 0
    %1251 = vmatpush1.bf16.msra.mxu0 0
    %1252 = vmatprep.subr.bf16.mxu0 0
    %1253 = vmatpush1.bf16.msra.mxu0 0
    %1254 = vmatprep.subr.bf16.mxu0 0
    %1255 = vmatpush1.bf16.msra.mxu0 0
    %1256 = vmatprep.subr.bf16.mxu0 0
    %1257 = vmatpush1.bf16.msra.mxu0 0
    %1258 = vmatprep.subr.bf16.mxu0 0
    %1259 = vmatpush1.bf16.msra.mxu0 0
    %1260 = vmatprep.subr.bf16.mxu0 0
    %1261 = vmatpush1.bf16.msra.mxu0 0
    %1262 = vmatprep.subr.bf16.mxu0 0
    %1263 = vmatpush1.bf16.msra.mxu0 0
    %1264 = vmatprep.subr.bf16.mxu0 0
    %1265 = vmatpush1.bf16.msra.mxu0 0
    %1266 = vmatprep.subr.bf16.mxu0 0
    %1267 = vmatpush1.bf16.msra.mxu0 0
    %1268 = vmatprep.subr.bf16.mxu0 0
    %1269 = vmatpush1.bf16.msra.mxu0 0
    %1270 = vmatprep.subr.bf16.mxu0 0
    %1271 = vmatpush1.bf16.msra.mxu0 0
    %1272 = vmatprep.subr.bf16.mxu0 0
    %1273 = vmatpush1.bf16.msra.mxu0 0
    %1274 = vmatprep.mubr.bf16.mxu0 0
    %1275 = vmatmul.mubr.bf16.gmra.mrb[0].mxu0 %v1177
    %v1276 = vpop.f32.mrb[0].mxu0
    %v1277 = vadd.f32 %v1228, %v1276
    %v1278 = vpop.f32.mrb[0].mxu0
    %v1279 = vpop.f32.mrb[0].mxu0
    %v1280 = vpop.f32.mrb[0].mxu0
    %1281 = vdwg.mxu0
    %v1282 = vld [vmem:[%s407] sm:$0xf]
    %v1283 = vld [vmem:[%s407 + $0x4] sm:$0xf]
    %v1284 = vld [vmem:[%s407 + $0x8] sm:$0xf]
    %v1285 = vld [vmem:[%s407 + $0xc] sm:$0xf]
    %v1286 = vld [vmem:[%s412] sm:$0x1]
    %v1288 = vlaneseq
    %v1289 = vshrl.u32 %v1288, 7
    %v1290 = vsub.s32 0, %v1289
    %v1291 = vrot.slane %v1286, %v1290
    %v1297 = vunpack.c.l.b16 %v1282
    %v1298 = vunpack.c.l.b16 %v1283
    %v1299 = vunpack.c.l.b16 %v1284
    %v1300 = vunpack.c.l.b16 %v1285
    %v1301 = vpack.c.b16 %v1298, %v1297
    %v1302 = vpack.c.b16 %v1300, %v1299
    %1305 = vmatprep.subr.bf16.mxu0 0
    %1306 = vmatpush1.bf16.msra.mxu0 %v1301
    %1307 = vmatprep.subr.bf16.mxu0 0
    %1308 = vmatpush1.bf16.msra.mxu0 %v1302
    %1309 = vmatprep.subr.bf16.mxu0 0
    %1310 = vmatpush1.bf16.msra.mxu0 0
    %1311 = vmatprep.subr.bf16.mxu0 0
    %1312 = vmatpush1.bf16.msra.mxu0 0
    %1313 = vmatprep.subr.bf16.mxu0 0
    %1314 = vmatpush1.bf16.msra.mxu0 0
    %1315 = vmatprep.subr.bf16.mxu0 0
    %1316 = vmatpush1.bf16.msra.mxu0 0
    %1317 = vmatprep.subr.bf16.mxu0 0
    %1318 = vmatpush1.bf16.msra.mxu0 0
    %1319 = vmatprep.subr.bf16.mxu0 0
    %1320 = vmatpush1.bf16.msra.mxu0 0
    %1321 = vmatprep.subr.bf16.mxu0 0
    %1322 = vmatpush1.bf16.msra.mxu0 0
    %1323 = vmatprep.subr.bf16.mxu0 0
    %1324 = vmatpush1.bf16.msra.mxu0 0
    %1325 = vmatprep.subr.bf16.mxu0 0
    %1326 = vmatpush1.bf16.msra.mxu0 0
    %1327 = vmatprep.subr.bf16.mxu0 0
    %1328 = vmatpush1.bf16.msra.mxu0 0
    %1329 = vmatprep.subr.bf16.mxu0 0
    %1330 = vmatpush1.bf16.msra.mxu0 0
    %1331 = vmatprep.subr.bf16.mxu0 0
    %1332 = vmatpush1.bf16.msra.mxu0 0
    %1333 = vmatprep.subr.bf16.mxu0 0
    %1334 = vmatpush1.bf16.msra.mxu0 0
    %1335 = vmatprep.subr.bf16.mxu0 0
    %1336 = vmatpush1.bf16.msra.mxu0 0
    %1337 = vmatprep.mubr.bf16.mxu0 0
    %1338 = vmatmul.mubr.bf16.gmra.mrb[0].mxu0 %v1177
    %v1339 = vpop.f32.mrb[0].mxu0
    %v1340 = vadd.f32 %v1291, %v1339
    %v1341 = vpop.f32.mrb[0].mxu0
    %v1342 = vpop.f32.mrb[0].mxu0
    %v1343 = vpop.f32.mrb[0].mxu0
    %1344 = vdwg.mxu0
    %v1345 = vld [vmem:[#allocation2 + $0x8] sm:$0x3]
    %v1346 = vadd.f32 %v1345, %v1214
    %v1347 = vxor.u32 %v1346, 2147483648
    %v1348 = vmul.f32 %v1347, 1.442695
    %v1349 = vpow.pop %v1348
    %v1350 = vadd.f32 %v1349, 1.0
    %v1351 = vrcp.pop %v1350
    %v1352 = vmul.f32 1.0, %v1351
    %v1353 = vld [vmem:[#allocation3 + $0x8] sm:$0x3]
    %v1354 = vadd.f32 %v1353, %v1277
    %v1355 = vxor.u32 %v1354, 2147483648
    %v1356 = vmul.f32 %v1355, 1.442695
    %v1357 = vpow.pop %v1356
    %v1358 = vadd.f32 %v1357, 1.0
    %v1359 = vrcp.pop %v1358
    %v1360 = vmul.f32 1.0, %v1359
    %v1361 = vld [vmem:[#allocation4 + $0x8] sm:$0x3]
    %v1362 = vmul.f32 %v1352, %v1340
    %v1363 = vadd.f32 %v1361, %v1362
    %v1364 = vtanh.pop %v1363
    %v1365 = vsub.f32 1.0, %v1360
    %v1366 = vmul.f32 %v1365, %v1364
    %v1367 = vmul.f32 %v1360, %v1150
    %v1368 = vadd.f32 %v1366, %v1367
    %1369 = vst.msk [vmem:[#allocation14 + $0x8] sm:$0x3] %vm496, %v1368
    %v1370 = vpack.c.bf16 %v1368, %v1368
    %v1371 = vld [vmem:[#allocation10] sm:$0xf]
    %v1372 = vld [vmem:[#allocation10 + $0x4] sm:$0xf]
    %v1373 = vld [vmem:[#allocation10 + $0x8] sm:$0xf]
    %v1374 = vld [vmem:[#allocation10 + $0xc] sm:$0xf]
    %v1375 = vld [vmem:[#allocation13] sm:$0x1]
    %v1377 = vlaneseq
    %v1378 = vshrl.u32 %v1377, 7
    %v1379 = vsub.s32 0, %v1378
    %v1380 = vrot.slane %v1375, %v1379
    %v1386 = vunpack.c.l.b16 %v1371
    %v1387 = vunpack.c.l.b16 %v1372
    %v1388 = vunpack.c.l.b16 %v1373
    %v1389 = vunpack.c.l.b16 %v1374
    %v1390 = vpack.c.b16 %v1387, %v1386
    %v1391 = vpack.c.b16 %v1389, %v1388
    %v1395 = vsel %vm153, %v1370, 0
    %1397 = vmatprep.subr.bf16.mxu0 0
    %1398 = vmatpush1.bf16.msra.mxu0 %v1390
    %1399 = vmatprep.subr.bf16.mxu0 0
    %1400 = vmatpush1.bf16.msra.mxu0 %v1391
    %1401 = vmatprep.subr.bf16.mxu0 0
    %1402 = vmatpush1.bf16.msra.mxu0 0
    %1403 = vmatprep.subr.bf16.mxu0 0
    %1404 = vmatpush1.bf16.msra.mxu0 0
    %1405 = vmatprep.subr.bf16.mxu0 0
    %1406 = vmatpush1.bf16.msra.mxu0 0
    %1407 = vmatprep.subr.bf16.mxu0 0
    %1408 = vmatpush1.bf16.msra.mxu0 0
    %1409 = vmatprep.subr.bf16.mxu0 0
    %1410 = vmatpush1.bf16.msra.mxu0 0
    %1411 = vmatprep.subr.bf16.mxu0 0
    %1412 = vmatpush1.bf16.msra.mxu0 0
    %1413 = vmatprep.subr.bf16.mxu0 0
    %1414 = vmatpush1.bf16.msra.mxu0 0
    %1415 = vmatprep.subr.bf16.mxu0 0
    %1416 = vmatpush1.bf16.msra.mxu0 0
    %1417 = vmatprep.subr.bf16.mxu0 0
    %1418 = vmatpush1.bf16.msra.mxu0 0
    %1419 = vmatprep.subr.bf16.mxu0 0
    %1420 = vmatpush1.bf16.msra.mxu0 0
    %1421 = vmatprep.subr.bf16.mxu0 0
    %1422 = vmatpush1.bf16.msra.mxu0 0
    %1423 = vmatprep.subr.bf16.mxu0 0
    %1424 = vmatpush1.bf16.msra.mxu0 0
    %1425 = vmatprep.subr.bf16.mxu0 0
    %1426 = vmatpush1.bf16.msra.mxu0 0
    %1427 = vmatprep.subr.bf16.mxu0 0
    %1428 = vmatpush1.bf16.msra.mxu0 0
    %1429 = vmatprep.mubr.bf16.mxu0 0
    %1430 = vmatmul.mubr.bf16.gmra.mrb[0].mxu0 %v1395
    %v1431 = vpop.f32.mrb[0].mxu0
    %v1432 = vadd.f32 %v1380, %v1431
    %v1433 = vpop.f32.mrb[0].mxu0
    %v1434 = vpop.f32.mrb[0].mxu0
    %v1435 = vpop.f32.mrb[0].mxu0
    %1436 = vdwg.mxu0
    %v1437 = vld [vmem:[%s342] sm:$0xf]
    %v1438 = vld [vmem:[%s342 + $0x4] sm:$0xf]
    %v1439 = vld [vmem:[%s342 + $0x8] sm:$0xf]
    %v1440 = vld [vmem:[%s342 + $0xc] sm:$0xf]
    %v1441 = vld [vmem:[%s347] sm:$0x1]
    %v1443 = vlaneseq
    %v1444 = vshrl.u32 %v1443, 7
    %v1445 = vsub.s32 0, %v1444
    %v1446 = vrot.slane %v1441, %v1445
    %v1452 = vunpack.c.l.b16 %v1437
    %v1453 = vunpack.c.l.b16 %v1438
    %v1454 = vunpack.c.l.b16 %v1439
    %v1455 = vunpack.c.l.b16 %v1440
    %v1456 = vpack.c.b16 %v1453, %v1452
    %v1457 = vpack.c.b16 %v1455, %v1454
    %1460 = vmatprep.subr.bf16.mxu0 0
    %1461 = vmatpush1.bf16.msra.mxu0 %v1456
    %1462 = vmatprep.subr.bf16.mxu0 0
    %1463 = vmatpush1.bf16.msra.mxu0 %v1457
    %1464 = vmatprep.subr.bf16.mxu0 0
    %1465 = vmatpush1.bf16.msra.mxu0 0
    %1466 = vmatprep.subr.bf16.mxu0 0
    %1467 = vmatpush1.bf16.msra.mxu0 0
    %1468 = vmatprep.subr.bf16.mxu0 0
    %1469 = vmatpush1.bf16.msra.mxu0 0
    %1470 = vmatprep.subr.bf16.mxu0 0
    %1471 = vmatpush1.bf16.msra.mxu0 0
    %1472 = vmatprep.subr.bf16.mxu0 0
    %1473 = vmatpush1.bf16.msra.mxu0 0
    %1474 = vmatprep.subr.bf16.mxu0 0
    %1475 = vmatpush1.bf16.msra.mxu0 0
    %1476 = vmatprep.subr.bf16.mxu0 0
    %1477 = vmatpush1.bf16.msra.mxu0 0
    %1478 = vmatprep.subr.bf16.mxu0 0
    %1479 = vmatpush1.bf16.msra.mxu0 0
    %1480 = vmatprep.subr.bf16.mxu0 0
    %1481 = vmatpush1.bf16.msra.mxu0 0
    %1482 = vmatprep.subr.bf16.mxu0 0
    %1483 = vmatpush1.bf16.msra.mxu0 0
    %1484 = vmatprep.subr.bf16.mxu0 0
    %1485 = vmatpush1.bf16.msra.mxu0 0
    %1486 = vmatprep.subr.bf16.mxu0 0
    %1487 = vmatpush1.bf16.msra.mxu0 0
    %1488 = vmatprep.subr.bf16.mxu0 0
    %1489 = vmatpush1.bf16.msra.mxu0 0
    %1490 = vmatprep.subr.bf16.mxu0 0
    %1491 = vmatpush1.bf16.msra.mxu0 0
    %1492 = vmatprep.mubr.bf16.mxu0 0
    %1493 = vmatmul.mubr.bf16.gmra.mrb[0].mxu0 %v1395
    %v1494 = vpop.f32.mrb[0].mxu0
    %v1495 = vadd.f32 %v1446, %v1494
    %v1496 = vpop.f32.mrb[0].mxu0
    %v1497 = vpop.f32.mrb[0].mxu0
    %v1498 = vpop.f32.mrb[0].mxu0
    %1499 = vdwg.mxu0
    %v1500 = vld [vmem:[%s407] sm:$0xf]
    %v1501 = vld [vmem:[%s407 + $0x4] sm:$0xf]
    %v1502 = vld [vmem:[%s407 + $0x8] sm:$0xf]
    %v1503 = vld [vmem:[%s407 + $0xc] sm:$0xf]
    %v1504 = vld [vmem:[%s412] sm:$0x1]
    %v1506 = vlaneseq
    %v1507 = vshrl.u32 %v1506, 7
    %v1508 = vsub.s32 0, %v1507
    %v1509 = vrot.slane %v1504, %v1508
    %v1515 = vunpack.c.l.b16 %v1500
    %v1516 = vunpack.c.l.b16 %v1501
    %v1517 = vunpack.c.l.b16 %v1502
    %v1518 = vunpack.c.l.b16 %v1503
    %v1519 = vpack.c.b16 %v1516, %v1515
    %v1520 = vpack.c.b16 %v1518, %v1517
    %1523 = vmatprep.subr.bf16.mxu0 0
    %1524 = vmatpush1.bf16.msra.mxu0 %v1519
    %1525 = vmatprep.subr.bf16.mxu0 0
    %1526 = vmatpush1.bf16.msra.mxu0 %v1520
    %1527 = vmatprep.subr.bf16.mxu0 0
    %1528 = vmatpush1.bf16.msra.mxu0 0
    %1529 = vmatprep.subr.bf16.mxu0 0
    %1530 = vmatpush1.bf16.msra.mxu0 0
    %1531 = vmatprep.subr.bf16.mxu0 0
    %1532 = vmatpush1.bf16.msra.mxu0 0
    %1533 = vmatprep.subr.bf16.mxu0 0
    %1534 = vmatpush1.bf16.msra.mxu0 0
    %1535 = vmatprep.subr.bf16.mxu0 0
    %1536 = vmatpush1.bf16.msra.mxu0 0
    %1537 = vmatprep.subr.bf16.mxu0 0
    %1538 = vmatpush1.bf16.msra.mxu0 0
    %1539 = vmatprep.subr.bf16.mxu0 0
    %1540 = vmatpush1.bf16.msra.mxu0 0
    %1541 = vmatprep.subr.bf16.mxu0 0
    %1542 = vmatpush1.bf16.msra.mxu0 0
    %1543 = vmatprep.subr.bf16.mxu0 0
    %1544 = vmatpush1.bf16.msra.mxu0 0
    %1545 = vmatprep.subr.bf16.mxu0 0
    %1546 = vmatpush1.bf16.msra.mxu0 0
    %1547 = vmatprep.subr.bf16.mxu0 0
    %1548 = vmatpush1.bf16.msra.mxu0 0
    %1549 = vmatprep.subr.bf16.mxu0 0
    %1550 = vmatpush1.bf16.msra.mxu0 0
    %1551 = vmatprep.subr.bf16.mxu0 0
    %1552 = vmatpush1.bf16.msra.mxu0 0
    %1553 = vmatprep.subr.bf16.mxu0 0
    %1554 = vmatpush1.bf16.msra.mxu0 0
    %1555 = vmatprep.mubr.bf16.mxu0 0
    %1556 = vmatmul.mubr.bf16.gmra.mrb[0].mxu0 %v1395
    %v1557 = vpop.f32.mrb[0].mxu0
    %v1558 = vadd.f32 %v1509, %v1557
    %v1559 = vpop.f32.mrb[0].mxu0
    %v1560 = vpop.f32.mrb[0].mxu0
    %v1561 = vpop.f32.mrb[0].mxu0
    %1562 = vdwg.mxu0
    %v1563 = vld [vmem:[#allocation2 + $0xa] sm:$0x3]
    %v1564 = vadd.f32 %v1563, %v1432
    %v1565 = vxor.u32 %v1564, 2147483648
    %v1566 = vmul.f32 %v1565, 1.442695
    %v1567 = vpow.pop %v1566
    %v1568 = vadd.f32 %v1567, 1.0
    %v1569 = vrcp.pop %v1568
    %v1570 = vmul.f32 1.0, %v1569
    %v1571 = vld [vmem:[#allocation3 + $0xa] sm:$0x3]
    %v1572 = vadd.f32 %v1571, %v1495
    %v1573 = vxor.u32 %v1572, 2147483648
    %v1574 = vmul.f32 %v1573, 1.442695
    %v1575 = vpow.pop %v1574
    %v1576 = vadd.f32 %v1575, 1.0
    %v1577 = vrcp.pop %v1576
    %v1578 = vmul.f32 1.0, %v1577
    %v1579 = vld [vmem:[#allocation4 + $0xa] sm:$0x3]
    %v1580 = vmul.f32 %v1570, %v1558
    %v1581 = vadd.f32 %v1579, %v1580
    %v1582 = vtanh.pop %v1581
    %v1583 = vsub.f32 1.0, %v1578
    %v1584 = vmul.f32 %v1583, %v1582
    %v1585 = vmul.f32 %v1578, %v1368
    %v1586 = vadd.f32 %v1584, %v1585
    %1587 = vst.msk [vmem:[#allocation14 + $0xa] sm:$0x3] %vm496, %v1586
    %v1588 = vpack.c.bf16 %v1586, %v1586
    %v1589 = vld [vmem:[#allocation10] sm:$0xf]
    %v1590 = vld [vmem:[#allocation10 + $0x4] sm:$0xf]
    %v1591 = vld [vmem:[#allocation10 + $0x8] sm:$0xf]
    %v1592 = vld [vmem:[#allocation10 + $0xc] sm:$0xf]
    %v1593 = vld [vmem:[#allocation13] sm:$0x1]
    %v1595 = vlaneseq
    %v1596 = vshrl.u32 %v1595, 7
    %v1597 = vsub.s32 0, %v1596
    %v1598 = vrot.slane %v1593, %v1597
    %v1604 = vunpack.c.l.b16 %v1589
    %v1605 = vunpack.c.l.b16 %v1590
    %v1606 = vunpack.c.l.b16 %v1591
    %v1607 = vunpack.c.l.b16 %v1592
    %v1608 = vpack.c.b16 %v1605, %v1604
    %v1609 = vpack.c.b16 %v1607, %v1606
    %v1613 = vsel %vm153, %v1588, 0
    %1615 = vmatprep.subr.bf16.mxu0 0
    %1616 = vmatpush1.bf16.msra.mxu0 %v1608
    %1617 = vmatprep.subr.bf16.mxu0 0
    %1618 = vmatpush1.bf16.msra.mxu0 %v1609
    %1619 = vmatprep.subr.bf16.mxu0 0
    %1620 = vmatpush1.bf16.msra.mxu0 0
    %1621 = vmatprep.subr.bf16.mxu0 0
    %1622 = vmatpush1.bf16.msra.mxu0 0
    %1623 = vmatprep.subr.bf16.mxu0 0
    %1624 = vmatpush1.bf16.msra.mxu0 0
    %1625 = vmatprep.subr.bf16.mxu0 0
    %1626 = vmatpush1.bf16.msra.mxu0 0
    %1627 = vmatprep.subr.bf16.mxu0 0
    %1628 = vmatpush1.bf16.msra.mxu0 0
    %1629 = vmatprep.subr.bf16.mxu0 0
    %1630 = vmatpush1.bf16.msra.mxu0 0
    %1631 = vmatprep.subr.bf16.mxu0 0
    %1632 = vmatpush1.bf16.msra.mxu0 0
    %1633 = vmatprep.subr.bf16.mxu0 0
    %1634 = vmatpush1.bf16.msra.mxu0 0
    %1635 = vmatprep.subr.bf16.mxu0 0
    %1636 = vmatpush1.bf16.msra.mxu0 0
    %1637 = vmatprep.subr.bf16.mxu0 0
    %1638 = vmatpush1.bf16.msra.mxu0 0
    %1639 = vmatprep.subr.bf16.mxu0 0
    %1640 = vmatpush1.bf16.msra.mxu0 0
    %1641 = vmatprep.subr.bf16.mxu0 0
    %1642 = vmatpush1.bf16.msra.mxu0 0
    %1643 = vmatprep.subr.bf16.mxu0 0
    %1644 = vmatpush1.bf16.msra.mxu0 0
    %1645 = vmatprep.subr.bf16.mxu0 0
    %1646 = vmatpush1.bf16.msra.mxu0 0
    %1647 = vmatprep.mubr.bf16.mxu0 0
    %1648 = vmatmul.mubr.bf16.gmra.mrb[0].mxu0 %v1613
    %v1649 = vpop.f32.mrb[0].mxu0
    %v1650 = vadd.f32 %v1598, %v1649
    %v1651 = vpop.f32.mrb[0].mxu0
    %v1652 = vpop.f32.mrb[0].mxu0
    %v1653 = vpop.f32.mrb[0].mxu0
    %1654 = vdwg.mxu0
    %v1655 = vld [vmem:[%s342] sm:$0xf]
    %v1656 = vld [vmem:[%s342 + $0x4] sm:$0xf]
    %v1657 = vld [vmem:[%s342 + $0x8] sm:$0xf]
    %v1658 = vld [vmem:[%s342 + $0xc] sm:$0xf]
    %v1659 = vld [vmem:[%s347] sm:$0x1]
    %v1661 = vlaneseq
    %v1662 = vshrl.u32 %v1661, 7
    %v1663 = vsub.s32 0, %v1662
    %v1664 = vrot.slane %v1659, %v1663
    %v1670 = vunpack.c.l.b16 %v1655
    %v1671 = vunpack.c.l.b16 %v1656
    %v1672 = vunpack.c.l.b16 %v1657
    %v1673 = vunpack.c.l.b16 %v1658
    %v1674 = vpack.c.b16 %v1671, %v1670
    %v1675 = vpack.c.b16 %v1673, %v1672
    %1678 = vmatprep.subr.bf16.mxu0 0
    %1679 = vmatpush1.bf16.msra.mxu0 %v1674
    %1680 = vmatprep.subr.bf16.mxu0 0
    %1681 = vmatpush1.bf16.msra.mxu0 %v1675
    %1682 = vmatprep.subr.bf16.mxu0 0
    %1683 = vmatpush1.bf16.msra.mxu0 0
    %1684 = vmatprep.subr.bf16.mxu0 0
    %1685 = vmatpush1.bf16.msra.mxu0 0
    %1686 = vmatprep.subr.bf16.mxu0 0
    %1687 = vmatpush1.bf16.msra.mxu0 0
    %1688 = vmatprep.subr.bf16.mxu0 0
    %1689 = vmatpush1.bf16.msra.mxu0 0
    %1690 = vmatprep.subr.bf16.mxu0 0
    %1691 = vmatpush1.bf16.msra.mxu0 0
    %1692 = vmatprep.subr.bf16.mxu0 0
    %1693 = vmatpush1.bf16.msra.mxu0 0
    %1694 = vmatprep.subr.bf16.mxu0 0
    %1695 = vmatpush1.bf16.msra.mxu0 0
    %1696 = vmatprep.subr.bf16.mxu0 0
    %1697 = vmatpush1.bf16.msra.mxu0 0
    %1698 = vmatprep.subr.bf16.mxu0 0
    %1699 = vmatpush1.bf16.msra.mxu0 0
    %1700 = vmatprep.subr.bf16.mxu0 0
    %1701 = vmatpush1.bf16.msra.mxu0 0
    %1702 = vmatprep.subr.bf16.mxu0 0
    %1703 = vmatpush1.bf16.msra.mxu0 0
    %1704 = vmatprep.subr.bf16.mxu0 0
    %1705 = vmatpush1.bf16.msra.mxu0 0
    %1706 = vmatprep.subr.bf16.mxu0 0
    %1707 = vmatpush1.bf16.msra.mxu0 0
    %1708 = vmatprep.subr.bf16.mxu0 0
    %1709 = vmatpush1.bf16.msra.mxu0 0
    %1710 = vmatprep.mubr.bf16.mxu0 0
    %1711 = vmatmul.mubr.bf16.gmra.mrb[0].mxu0 %v1613
    %v1712 = vpop.f32.mrb[0].mxu0
    %v1713 = vadd.f32 %v1664, %v1712
    %v1714 = vpop.f32.mrb[0].mxu0
    %v1715 = vpop.f32.mrb[0].mxu0
    %v1716 = vpop.f32.mrb[0].mxu0
    %1717 = vdwg.mxu0
    %v1718 = vld [vmem:[%s407] sm:$0xf]
    %v1719 = vld [vmem:[%s407 + $0x4] sm:$0xf]
    %v1720 = vld [vmem:[%s407 + $0x8] sm:$0xf]
    %v1721 = vld [vmem:[%s407 + $0xc] sm:$0xf]
    %v1722 = vld [vmem:[%s412] sm:$0x1]
    %v1724 = vlaneseq
    %v1725 = vshrl.u32 %v1724, 7
    %v1726 = vsub.s32 0, %v1725
    %v1727 = vrot.slane %v1722, %v1726
    %v1733 = vunpack.c.l.b16 %v1718
    %v1734 = vunpack.c.l.b16 %v1719
    %v1735 = vunpack.c.l.b16 %v1720
    %v1736 = vunpack.c.l.b16 %v1721
    %v1737 = vpack.c.b16 %v1734, %v1733
    %v1738 = vpack.c.b16 %v1736, %v1735
    %1741 = vmatprep.subr.bf16.mxu0 0
    %1742 = vmatpush1.bf16.msra.mxu0 %v1737
    %1743 = vmatprep.subr.bf16.mxu0 0
    %1744 = vmatpush1.bf16.msra.mxu0 %v1738
    %1745 = vmatprep.subr.bf16.mxu0 0
    %1746 = vmatpush1.bf16.msra.mxu0 0
    %1747 = vmatprep.subr.bf16.mxu0 0
    %1748 = vmatpush1.bf16.msra.mxu0 0
    %1749 = vmatprep.subr.bf16.mxu0 0
    %1750 = vmatpush1.bf16.msra.mxu0 0
    %1751 = vmatprep.subr.bf16.mxu0 0
    %1752 = vmatpush1.bf16.msra.mxu0 0
    %1753 = vmatprep.subr.bf16.mxu0 0
    %1754 = vmatpush1.bf16.msra.mxu0 0
    %1755 = vmatprep.subr.bf16.mxu0 0
    %1756 = vmatpush1.bf16.msra.mxu0 0
    %1757 = vmatprep.subr.bf16.mxu0 0
    %1758 = vmatpush1.bf16.msra.mxu0 0
    %1759 = vmatprep.subr.bf16.mxu0 0
    %1760 = vmatpush1.bf16.msra.mxu0 0
    %1761 = vmatprep.subr.bf16.mxu0 0
    %1762 = vmatpush1.bf16.msra.mxu0 0
    %1763 = vmatprep.subr.bf16.mxu0 0
    %1764 = vmatpush1.bf16.msra.mxu0 0
    %1765 = vmatprep.subr.bf16.mxu0 0
    %1766 = vmatpush1.bf16.msra.mxu0 0
    %1767 = vmatprep.subr.bf16.mxu0 0
    %1768 = vmatpush1.bf16.msra.mxu0 0
    %1769 = vmatprep.subr.bf16.mxu0 0
    %1770 = vmatpush1.bf16.msra.mxu0 0
    %1771 = vmatprep.subr.bf16.mxu0 0
    %1772 = vmatpush1.bf16.msra.mxu0 0
    %1773 = vmatprep.mubr.bf16.mxu0 0
    %1774 = vmatmul.mubr.bf16.gmra.mrb[0].mxu0 %v1613
    %v1775 = vpop.f32.mrb[0].mxu0
    %v1776 = vadd.f32 %v1727, %v1775
    %v1777 = vpop.f32.mrb[0].mxu0
    %v1778 = vpop.f32.mrb[0].mxu0
    %v1779 = vpop.f32.mrb[0].mxu0
    %1780 = vdwg.mxu0
    %v1781 = vld [vmem:[#allocation2 + $0xc] sm:$0x3]
    %v1782 = vadd.f32 %v1781, %v1650
    %v1783 = vxor.u32 %v1782, 2147483648
    %v1784 = vmul.f32 %v1783, 1.442695
    %v1785 = vpow.pop %v1784
    %v1786 = vadd.f32 %v1785, 1.0
    %v1787 = vrcp.pop %v1786
    %v1788 = vmul.f32 1.0, %v1787
    %v1789 = vld [vmem:[#allocation3 + $0xc] sm:$0x3]
    %v1790 = vadd.f32 %v1789, %v1713
    %v1791 = vxor.u32 %v1790, 2147483648
    %v1792 = vmul.f32 %v1791, 1.442695
    %v1793 = vpow.pop %v1792
    %v1794 = vadd.f32 %v1793, 1.0
    %v1795 = vrcp.pop %v1794
    %v1796 = vmul.f32 1.0, %v1795
    %v1797 = vld [vmem:[#allocation4 + $0xc] sm:$0x3]
    %v1798 = vmul.f32 %v1788, %v1776
    %v1799 = vadd.f32 %v1797, %v1798
    %v1800 = vtanh.pop %v1799
    %v1801 = vsub.f32 1.0, %v1796
    %v1802 = vmul.f32 %v1801, %v1800
    %v1803 = vmul.f32 %v1796, %v1586
    %v1804 = vadd.f32 %v1802, %v1803
    %1805 = vst.msk [vmem:[#allocation14 + $0xc] sm:$0x3] %vm496, %v1804
    %v1806 = vpack.c.bf16 %v1804, %v1804
    %v1807 = vld [vmem:[#allocation10] sm:$0xf]
    %v1808 = vld [vmem:[#allocation10 + $0x4] sm:$0xf]
    %v1809 = vld [vmem:[#allocation10 + $0x8] sm:$0xf]
    %v1810 = vld [vmem:[#allocation10 + $0xc] sm:$0xf]
    %v1811 = vld [vmem:[#allocation13] sm:$0x1]
    %v1813 = vlaneseq
    %v1814 = vshrl.u32 %v1813, 7
    %v1815 = vsub.s32 0, %v1814
    %v1816 = vrot.slane %v1811, %v1815
    %v1822 = vunpack.c.l.b16 %v1807
    %v1823 = vunpack.c.l.b16 %v1808
    %v1824 = vunpack.c.l.b16 %v1809
    %v1825 = vunpack.c.l.b16 %v1810
    %v1826 = vpack.c.b16 %v1823, %v1822
    %v1827 = vpack.c.b16 %v1825, %v1824
    %v1831 = vsel %vm153, %v1806, 0
    %1833 = vmatprep.subr.bf16.mxu0 0
    %1834 = vmatpush1.bf16.msra.mxu0 %v1826
    %1835 = vmatprep.subr.bf16.mxu0 0
    %1836 = vmatpush1.bf16.msra.mxu0 %v1827
    %1837 = vmatprep.subr.bf16.mxu0 0
    %1838 = vmatpush1.bf16.msra.mxu0 0
    %1839 = vmatprep.subr.bf16.mxu0 0
    %1840 = vmatpush1.bf16.msra.mxu0 0
    %1841 = vmatprep.subr.bf16.mxu0 0
    %1842 = vmatpush1.bf16.msra.mxu0 0
    %1843 = vmatprep.subr.bf16.mxu0 0
    %1844 = vmatpush1.bf16.msra.mxu0 0
    %1845 = vmatprep.subr.bf16.mxu0 0
    %1846 = vmatpush1.bf16.msra.mxu0 0
    %1847 = vmatprep.subr.bf16.mxu0 0
    %1848 = vmatpush1.bf16.msra.mxu0 0
    %1849 = vmatprep.subr.bf16.mxu0 0
    %1850 = vmatpush1.bf16.msra.mxu0 0
    %1851 = vmatprep.subr.bf16.mxu0 0
    %1852 = vmatpush1.bf16.msra.mxu0 0
    %1853 = vmatprep.subr.bf16.mxu0 0
    %1854 = vmatpush1.bf16.msra.mxu0 0
    %1855 = vmatprep.subr.bf16.mxu0 0
    %1856 = vmatpush1.bf16.msra.mxu0 0
    %1857 = vmatprep.subr.bf16.mxu0 0
    %1858 = vmatpush1.bf16.msra.mxu0 0
    %1859 = vmatprep.subr.bf16.mxu0 0
    %1860 = vmatpush1.bf16.msra.mxu0 0
    %1861 = vmatprep.subr.bf16.mxu0 0
    %1862 = vmatpush1.bf16.msra.mxu0 0
    %1863 = vmatprep.subr.bf16.mxu0 0
    %1864 = vmatpush1.bf16.msra.mxu0 0
    %1865 = vmatprep.mubr.bf16.mxu0 0
    %1866 = vmatmul.mubr.bf16.gmra.mrb[0].mxu0 %v1831
    %v1867 = vpop.f32.mrb[0].mxu0
    %v1868 = vadd.f32 %v1816, %v1867
    %v1869 = vpop.f32.mrb[0].mxu0
    %v1870 = vpop.f32.mrb[0].mxu0
    %v1871 = vpop.f32.mrb[0].mxu0
    %1872 = vdwg.mxu0
    %v1873 = vld [vmem:[%s342] sm:$0xf]
    %v1874 = vld [vmem:[%s342 + $0x4] sm:$0xf]
    %v1875 = vld [vmem:[%s342 + $0x8] sm:$0xf]
    %v1876 = vld [vmem:[%s342 + $0xc] sm:$0xf]
    %v1877 = vld [vmem:[%s347] sm:$0x1]
    %v1879 = vlaneseq
    %v1880 = vshrl.u32 %v1879, 7
    %v1881 = vsub.s32 0, %v1880
    %v1882 = vrot.slane %v1877, %v1881
    %v1888 = vunpack.c.l.b16 %v1873
    %v1889 = vunpack.c.l.b16 %v1874
    %v1890 = vunpack.c.l.b16 %v1875
    %v1891 = vunpack.c.l.b16 %v1876
    %v1892 = vpack.c.b16 %v1889, %v1888
    %v1893 = vpack.c.b16 %v1891, %v1890
    %1896 = vmatprep.subr.bf16.mxu0 0
    %1897 = vmatpush1.bf16.msra.mxu0 %v1892
    %1898 = vmatprep.subr.bf16.mxu0 0
    %1899 = vmatpush1.bf16.msra.mxu0 %v1893
    %1900 = vmatprep.subr.bf16.mxu0 0
    %1901 = vmatpush1.bf16.msra.mxu0 0
    %1902 = vmatprep.subr.bf16.mxu0 0
    %1903 = vmatpush1.bf16.msra.mxu0 0
    %1904 = vmatprep.subr.bf16.mxu0 0
    %1905 = vmatpush1.bf16.msra.mxu0 0
    %1906 = vmatprep.subr.bf16.mxu0 0
    %1907 = vmatpush1.bf16.msra.mxu0 0
    %1908 = vmatprep.subr.bf16.mxu0 0
    %1909 = vmatpush1.bf16.msra.mxu0 0
    %1910 = vmatprep.subr.bf16.mxu0 0
    %1911 = vmatpush1.bf16.msra.mxu0 0
    %1912 = vmatprep.subr.bf16.mxu0 0
    %1913 = vmatpush1.bf16.msra.mxu0 0
    %1914 = vmatprep.subr.bf16.mxu0 0
    %1915 = vmatpush1.bf16.msra.mxu0 0
    %1916 = vmatprep.subr.bf16.mxu0 0
    %1917 = vmatpush1.bf16.msra.mxu0 0
    %1918 = vmatprep.subr.bf16.mxu0 0
    %1919 = vmatpush1.bf16.msra.mxu0 0
    %1920 = vmatprep.subr.bf16.mxu0 0
    %1921 = vmatpush1.bf16.msra.mxu0 0
    %1922 = vmatprep.subr.bf16.mxu0 0
    %1923 = vmatpush1.bf16.msra.mxu0 0
    %1924 = vmatprep.subr.bf16.mxu0 0
    %1925 = vmatpush1.bf16.msra.mxu0 0
    %1926 = vmatprep.subr.bf16.mxu0 0
    %1927 = vmatpush1.bf16.msra.mxu0 0
    %1928 = vmatprep.mubr.bf16.mxu0 0
    %1929 = vmatmul.mubr.bf16.gmra.mrb[0].mxu0 %v1831
    %v1930 = vpop.f32.mrb[0].mxu0
    %v1931 = vadd.f32 %v1882, %v1930
    %v1932 = vpop.f32.mrb[0].mxu0
    %v1933 = vpop.f32.mrb[0].mxu0
    %v1934 = vpop.f32.mrb[0].mxu0
    %1935 = vdwg.mxu0
    %v1936 = vld [vmem:[%s407] sm:$0xf]
    %v1937 = vld [vmem:[%s407 + $0x4] sm:$0xf]
    %v1938 = vld [vmem:[%s407 + $0x8] sm:$0xf]
    %v1939 = vld [vmem:[%s407 + $0xc] sm:$0xf]
    %v1940 = vld [vmem:[%s412] sm:$0x1]
    %v1942 = vlaneseq
    %v1943 = vshrl.u32 %v1942, 7
    %v1944 = vsub.s32 0, %v1943
    %v1945 = vrot.slane %v1940, %v1944
    %v1951 = vunpack.c.l.b16 %v1936
    %v1952 = vunpack.c.l.b16 %v1937
    %v1953 = vunpack.c.l.b16 %v1938
    %v1954 = vunpack.c.l.b16 %v1939
    %v1955 = vpack.c.b16 %v1952, %v1951
    %v1956 = vpack.c.b16 %v1954, %v1953
    %1959 = vmatprep.subr.bf16.mxu0 0
    %1960 = vmatpush1.bf16.msra.mxu0 %v1955
    %1961 = vmatprep.subr.bf16.mxu0 0
    %1962 = vmatpush1.bf16.msra.mxu0 %v1956
    %1963 = vmatprep.subr.bf16.mxu0 0
    %1964 = vmatpush1.bf16.msra.mxu0 0
    %1965 = vmatprep.subr.bf16.mxu0 0
    %1966 = vmatpush1.bf16.msra.mxu0 0
    %1967 = vmatprep.subr.bf16.mxu0 0
    %1968 = vmatpush1.bf16.msra.mxu0 0
    %1969 = vmatprep.subr.bf16.mxu0 0
    %1970 = vmatpush1.bf16.msra.mxu0 0
    %1971 = vmatprep.subr.bf16.mxu0 0
    %1972 = vmatpush1.bf16.msra.mxu0 0
    %1973 = vmatprep.subr.bf16.mxu0 0
    %1974 = vmatpush1.bf16.msra.mxu0 0
    %1975 = vmatprep.subr.bf16.mxu0 0
    %1976 = vmatpush1.bf16.msra.mxu0 0
    %1977 = vmatprep.subr.bf16.mxu0 0
    %1978 = vmatpush1.bf16.msra.mxu0 0
    %1979 = vmatprep.subr.bf16.mxu0 0
    %1980 = vmatpush1.bf16.msra.mxu0 0
    %1981 = vmatprep.subr.bf16.mxu0 0
    %1982 = vmatpush1.bf16.msra.mxu0 0
    %1983 = vmatprep.subr.bf16.mxu0 0
    %1984 = vmatpush1.bf16.msra.mxu0 0
    %1985 = vmatprep.subr.bf16.mxu0 0
    %1986 = vmatpush1.bf16.msra.mxu0 0
    %1987 = vmatprep.subr.bf16.mxu0 0
    %1988 = vmatpush1.bf16.msra.mxu0 0
    %1989 = vmatprep.subr.bf16.mxu0 0
    %1990 = vmatpush1.bf16.msra.mxu0 0
    %1991 = vmatprep.mubr.bf16.mxu0 0
    %1992 = vmatmul.mubr.bf16.gmra.mrb[0].mxu0 %v1831
    %v1993 = vpop.f32.mrb[0].mxu0
    %v1994 = vadd.f32 %v1945, %v1993
    %v1995 = vpop.f32.mrb[0].mxu0
    %v1996 = vpop.f32.mrb[0].mxu0
    %v1997 = vpop.f32.mrb[0].mxu0
    %1998 = vdwg.mxu0
    %v1999 = vld [vmem:[#allocation2 + $0xe] sm:$0x3]
    %v2000 = vadd.f32 %v1999, %v1868
    %v2001 = vxor.u32 %v2000, 2147483648
    %v2002 = vmul.f32 %v2001, 1.442695
    %v2003 = vpow.pop %v2002
    %v2004 = vadd.f32 %v2003, 1.0
    %v2005 = vrcp.pop %v2004
    %v2006 = vmul.f32 1.0, %v2005
    %v2007 = vld [vmem:[#allocation3 + $0xe] sm:$0x3]
    %v2008 = vadd.f32 %v2007, %v1931
    %v2009 = vxor.u32 %v2008, 2147483648
    %v2010 = vmul.f32 %v2009, 1.442695
    %v2011 = vpow.pop %v2010
    %v2012 = vadd.f32 %v2011, 1.0
    %v2013 = vrcp.pop %v2012
    %v2014 = vmul.f32 1.0, %v2013
    %v2015 = vld [vmem:[#allocation4 + $0xe] sm:$0x3]
    %v2016 = vmul.f32 %v2006, %v1994
    %v2017 = vadd.f32 %v2015, %v2016
    %v2018 = vtanh.pop %v2017
    %v2019 = vsub.f32 1.0, %v2014
    %v2020 = vmul.f32 %v2019, %v2018
    %v2021 = vmul.f32 %v2014, %v1804
    %v2022 = vadd.f32 %v2020, %v2021
    %2023 = vst.msk [vmem:[#allocation14 + $0xe] sm:$0x3] %vm496, %v2022
    // Predicated region
    $region42: #{decoder_forward.2} parent=1 // pred_check
      _
    $region43: #{decoder_forward.2} parent=1 // pred_check_branch
      %2025 = sbr.rel (0) target = $region45
    $region44: #{decoder_forward.2} parent=1 // pred_region
      %s2027 = ssub.s32 256, 256
      %2028 = vsyncadd [#allocation7], %s2027
      %s2029 = sshll.u32 [#allocation14], 4
      %s2030 = int_to_ptr.vmem [resolvable:$true] %s2029
      %2035 = dma.vmem_to_hbm [thread:$0]  %s2030, 256, %s5, [#allocation7], 128, 128, 8
    $region45: #{decoder_forward.2} parent=1 // pred_fallthru
      _
    // Predicated region
    $region46: #{decoder_forward.2} parent=1 // pred_check
      _
    $region47: #{decoder_forward.2} parent=1 // pred_check_branch
      %2037 = sbr.rel (0) target = $region49
    $region48: #{decoder_forward.2} parent=1 // pred_region
      %2038 = dma.done [#allocation7], 256
    $region49: #{decoder_forward.2} parent=1 // pred_fallthru
      _
    %2039 = vsyncpa [#allocation6], 1
    %2040 = vsyncpa [#allocation9], 1
    %2041 = vsyncpa [#allocation12], 1
    %2042 = vsyncpa [#allocation7], 1

// kernel: decoder_forward.3
$region0: #{decoder_forward.3}
  #allocation0 [shape = 'u32[]', space=smem, size = 0x4, offset = 0x4, fixed_abs, tag = 'smem constant byte address 0x4 - core index']
  #allocation1 [shape = 'u32[144,128]{1,0:T(1,128)}', space=vmem, size = 0x12000, scoped, tag = 'internal scratch']
  #allocation2 [shape = 'f32[16,32]{1,0:T(8,128)}', space=vmem, size = 0x2000, scoped, tag = 'scratch operand']
  #allocation3 [shape = 'f32[16,32]{1,0:T(8,128)}', space=vmem, size = 0x2000, scoped, tag = 'scratch operand']
  #allocation4 [shape = 'f32[16,32]{1,0:T(8,128)}', space=vmem, size = 0x2000, scoped, tag = 'scratch operand']
  %s0 = inlined_call_operand.hbm [shape: f32[16,32], index: 0, kind: input, shape index: {}]
  %s1 = inlined_call_operand.hbm [shape: bf16[3,32,32], index: 1, kind: input, shape index: {}]
  %s2 = inlined_call_operand.hbm [shape: bf16[3,32,32], index: 2, kind: input, shape index: {}]
  %s3 = inlined_call_operand.hbm [shape: f32[3,1,32], index: 3, kind: input, shape index: {}]
  %s4 = inlined_call_operand.hbm [shape: f32[3,1,32], index: 4, kind: input, shape index: {}]
  %s5 = inlined_call_operand.hbm [shape: bf16[32,128], index: 5, kind: input, shape index: {}]
  %s6 = inlined_call_operand.hbm [shape: f32[1,128], index: 6, kind: input, shape index: {}]
  %s7 = inlined_call_operand.hbm [shape: f32[16,32], index: 7, kind: output, shape index: {0}]
  %s8 = inlined_call_operand.hbm [shape: f32[16,128], index: 8, kind: output, shape index: {1}]
  %9 = xla_tuple %s7, %s8
  %s10 = sld [smem:[#allocation0]]
  $region74: #{decoder_forward.3} parent=0
    _
  %s12 = ssub.s32 1, %s10
  %s13 = scalar_select 0, %s12, %s10
  $region1: #{decoder_forward.3} parent=0
    #allocation5 [shape = 'u8[8192]{0}', space=vmem, size = 0x2000, scoped, tag = 'input window, operand 0, single buffered']
    #allocation6 [shape = 's32[1]{0}', space=sflag, size = 0x4, scoped, tag = 'scoped memory for decoder_forward.3']
    #allocation7 [shape = 's32[1]{0}', space=sflag, size = 0x4, scoped, tag = 'scoped memory for decoder_forward.3']
    #allocation8 [shape = 'u8[24576]{0}', space=vmem, size = 0x6000, scoped, tag = 'input window, operand 1, single buffered']
    #allocation9 [shape = 's32[1]{0}', space=sflag, size = 0x4, scoped, tag = 'scoped memory for decoder_forward.3']
    #allocation10 [shape = 'u8[24576]{0}', space=vmem, size = 0x6000, scoped, tag = 'input window, operand 2, single buffered']
    #allocation11 [shape = 'u8[1536]{0}', space=vmem, size = 0x800, scoped, tag = 'input window, operand 3, single buffered']
    #allocation12 [shape = 's32[1]{0}', space=sflag, size = 0x4, scoped, tag = 'scoped memory for decoder_forward.3']
    #allocation13 [shape = 'u8[1536]{0}', space=vmem, size = 0x800, scoped, tag = 'input window, operand 4, single buffered']
    #allocation14 [shape = 'u8[8192]{0}', space=vmem, size = 0x2000, scoped, tag = 'input window, operand 5, single buffered']
    #allocation15 [shape = 's32[1]{0}', space=sflag, size = 0x4, scoped, tag = 'scoped memory for decoder_forward.3']
    #allocation16 [shape = 'u8[512]{0}', space=vmem, size = 0x400, scoped, tag = 'input window, operand 6, single buffered']
    #allocation17 [shape = 'u8[8192]{0}', space=vmem, size = 0x2000, scoped, tag = 'output window, operand 0, single buffered']
    #allocation18 [shape = 'u8[8192]{0}', space=vmem, size = 0x2000, scoped, tag = 'output window, operand 1, single buffered']
    #allocation19 [shape = 's32[1]{0}', space=sflag, size = 0x4, scoped, tag = 'scoped memory for decoder_forward.3']
    %14 = vsyncpa [#allocation6], 0
    %15 = vsyncpa [#allocation9], 0
    %16 = vsyncpa [#allocation12], 0
    %17 = vsyncpa [#allocation15], 0
    %18 = vsyncpa [#allocation7], 0
    %19 = vsyncpa [#allocation19], 0
    // Predicated region
    $region2: #{decoder_forward.3} parent=1 // pred_check
      _
    $region3: #{decoder_forward.3} parent=1 // pred_check_branch
      %21 = sbr.rel (0) target = $region5
    $region4: #{decoder_forward.3} parent=1 // pred_region
      %s23 = ssub.s32 256, 256
      %24 = vsyncadd [#allocation6], %s23
      %s25 = sshll.u32 [#allocation5], 4
      %s26 = int_to_ptr.vmem [resolvable:$true] %s25
      %31 = dma.hbm_to_vmem [thread:$0]  %s0, 256, %s26, [#allocation6], 128, 128, 8
    $region5: #{decoder_forward.3} parent=1 // pred_fallthru
      _
    // Predicated region
    $region6: #{decoder_forward.3} parent=1 // pred_check
      _
    $region7: #{decoder_forward.3} parent=1 // pred_check_branch
      %33 = sbr.rel (0) target = $region9
    $region8: #{decoder_forward.3} parent=1 // pred_region
      %s35 = ssub.s32 768, 768
      %36 = vsyncadd [#allocation9], %s35
      %s37 = sshll.u32 [#allocation8], 4
      %s38 = int_to_ptr.vmem [resolvable:$true] %s37
      %43 = dma.hbm_to_vmem [thread:$0]  %s1, 768, %s38, [#allocation9], 64, 64, 4
    $region9: #{decoder_forward.3} parent=1 // pred_fallthru
      _
    // Predicated region
    $region10: #{decoder_forward.3} parent=1 // pred_check
      _
    $region11: #{decoder_forward.3} parent=1 // pred_check_branch
      %45 = sbr.rel (0) target = $region13
    $region12: #{decoder_forward.3} parent=1 // pred_region
      %s47 = ssub.s32 768, 768
      %48 = vsyncadd [#allocation9], %s47
      %s49 = sshll.u32 [#allocation10], 4
      %s50 = int_to_ptr.vmem [resolvable:$true] %s49
      %55 = dma.hbm_to_vmem [thread:$0]  %s2, 768, %s50, [#allocation9], 64, 64, 4
    $region13: #{decoder_forward.3} parent=1 // pred_fallthru
      _
    // Predicated region
    $region14: #{decoder_forward.3} parent=1 // pred_check
      _
    $region15: #{decoder_forward.3} parent=1 // pred_check_branch
      %57 = sbr.rel (0) target = $region17
    $region16: #{decoder_forward.3} parent=1 // pred_region
      %s59 = ssub.s32 48, 48
      %60 = vsyncadd [#allocation12], %s59
      %s61 = sshll.u32 [#allocation11], 4
      %s62 = int_to_ptr.vmem [resolvable:$true] %s61
      %67 = dma.hbm_to_vmem [thread:$0]  %s3, 48, %s62, [#allocation12], 16, 16, 1
    $region17: #{decoder_forward.3} parent=1 // pred_fallthru
      _
    // Predicated region
    $region18: #{decoder_forward.3} parent=1 // pred_check
      _
    $region19: #{decoder_forward.3} parent=1 // pred_check_branch
      %69 = sbr.rel (0) target = $region21
    $region20: #{decoder_forward.3} parent=1 // pred_region
      %s71 = ssub.s32 48, 48
      %72 = vsyncadd [#allocation12], %s71
      %s73 = sshll.u32 [#allocation13], 4
      %s74 = int_to_ptr.vmem [resolvable:$true] %s73
      %79 = dma.hbm_to_vmem [thread:$0]  %s4, 48, %s74, [#allocation12], 16, 16, 1
    $region21: #{decoder_forward.3} parent=1 // pred_fallthru
      _
    // Predicated region
    $region22: #{decoder_forward.3} parent=1 // pred_check
      _
    $region23: #{decoder_forward.3} parent=1 // pred_check_branch
      %81 = sbr.rel (0) target = $region25
    $region24: #{decoder_forward.3} parent=1 // pred_region
      %s83 = ssub.s32 256, 256
      %84 = vsyncadd [#allocation15], %s83
      %s85 = sshll.u32 [#allocation14], 4
      %s86 = int_to_ptr.vmem [resolvable:$true] %s85
      %91 = dma.hbm_to_vmem [thread:$0]  %s5, 256, %s86, [#allocation15], 64, 64, 4
    $region25: #{decoder_forward.3} parent=1 // pred_fallthru
      _
    // Predicated region
    $region26: #{decoder_forward.3} parent=1 // pred_check
      _
    $region27: #{decoder_forward.3} parent=1 // pred_check_branch
      %93 = sbr.rel (0) target = $region29
    $region28: #{decoder_forward.3} parent=1 // pred_region
      %s95 = ssub.s32 16, 16
      %96 = vsyncadd [#allocation15], %s95
      %s98 = sshll.u32 [#allocation16], 4
      %s99 = int_to_ptr.vmem [resolvable:$true] %s98
      %101 = dma.hbm_to_vmem [thread:$0]  %s6, 16, %s99, [#allocation15]
    $region29: #{decoder_forward.3} parent=1 // pred_fallthru
      _
    // Predicated region
    $region30: #{decoder_forward.3} parent=1 // pred_check
      _
    $region31: #{decoder_forward.3} parent=1 // pred_check_branch
      %103 = sbr.rel (0) target = $region33
    $region32: #{decoder_forward.3} parent=1 // pred_region
      %104 = dma.done [#allocation6], 256
    $region33: #{decoder_forward.3} parent=1 // pred_fallthru
      _
    // Predicated region
    $region34: #{decoder_forward.3} parent=1 // pred_check
      _
    $region35: #{decoder_forward.3} parent=1 // pred_check_branch
      %106 = sbr.rel (0) target = $region37
    $region36: #{decoder_forward.3} parent=1 // pred_region
      %107 = dma.done [#allocation9], 768
    $region37: #{decoder_forward.3} parent=1 // pred_fallthru
      _
    // Predicated region
    $region38: #{decoder_forward.3} parent=1 // pred_check
      _
    $region39: #{decoder_forward.3} parent=1 // pred_check_branch
      %109 = sbr.rel (0) target = $region41
    $region40: #{decoder_forward.3} parent=1 // pred_region
      %110 = dma.done [#allocation9], 768
    $region41: #{decoder_forward.3} parent=1 // pred_fallthru
      _
    // Predicated region
    $region42: #{decoder_forward.3} parent=1 // pred_check
      _
    $region43: #{decoder_forward.3} parent=1 // pred_check_branch
      %112 = sbr.rel (0) target = $region45
    $region44: #{decoder_forward.3} parent=1 // pred_region
      %113 = dma.done [#allocation12], 48
    $region45: #{decoder_forward.3} parent=1 // pred_fallthru
      _
    // Predicated region
    $region46: #{decoder_forward.3} parent=1 // pred_check
      _
    $region47: #{decoder_forward.3} parent=1 // pred_check_branch
      %115 = sbr.rel (0) target = $region49
    $region48: #{decoder_forward.3} parent=1 // pred_region
      %116 = dma.done [#allocation12], 48
    $region49: #{decoder_forward.3} parent=1 // pred_fallthru
      _
    // Predicated region
    $region50: #{decoder_forward.3} parent=1 // pred_check
      _
    $region51: #{decoder_forward.3} parent=1 // pred_check_branch
      %118 = sbr.rel (0) target = $region53
    $region52: #{decoder_forward.3} parent=1 // pred_region
      %119 = dma.done [#allocation15], 256
    $region53: #{decoder_forward.3} parent=1 // pred_fallthru
      _
    // Predicated region
    $region54: #{decoder_forward.3} parent=1 // pred_check
      _
    $region55: #{decoder_forward.3} parent=1 // pred_check_branch
      %121 = sbr.rel (0) target = $region57
    $region56: #{decoder_forward.3} parent=1 // pred_region
      %122 = dma.done [#allocation15], 16
    $region57: #{decoder_forward.3} parent=1 // pred_fallthru
      _
    %v124 = vld [vmem:[#allocation5] sm:$0xff]
    %v125 = vld [vmem:[#allocation5 + $0x8] sm:$0xff]
    %v126 = vpack.c.bf16 %v125, %v124
    %v127 = vld [vmem:[#allocation8] sm:$0xf]
    %v128 = vld [vmem:[#allocation8 + $0x4] sm:$0xf]
    %v129 = vld [vmem:[#allocation8 + $0x8] sm:$0xf]
    %v130 = vld [vmem:[#allocation8 + $0xc] sm:$0xf]
    %v131 = vld [vmem:[#allocation11] sm:$0x1]
    %v133 = vlaneseq
    %v134 = vshrl.u32 %v133, 7
    %v135 = vsub.s32 0, %v134
    %v136 = vrot.slane %v131, %v135
    %v142 = vunpack.c.l.b16 %v127
    %v143 = vunpack.c.l.b16 %v128
    %v144 = vunpack.c.l.b16 %v129
    %v145 = vunpack.c.l.b16 %v130
    %v146 = vpack.c.b16 %v143, %v142
    %v147 = vpack.c.b16 %v145, %v144
    %vm150 = vcmask 261120
    %v152 = vsel %vm150, %v126, 0
    %154 = vmatprep.subr.bf16.mxu0 0
    %155 = vmatpush1.bf16.msra.mxu0 %v146
    %156 = vmatprep.subr.bf16.mxu0 0
    %157 = vmatpush1.bf16.msra.mxu0 %v147
    %158 = vmatprep.subr.bf16.mxu0 0
    %159 = vmatpush1.bf16.msra.mxu0 0
    %160 = vmatprep.subr.bf16.mxu0 0
    %161 = vmatpush1.bf16.msra.mxu0 0
    %162 = vmatprep.subr.bf16.mxu0 0
    %163 = vmatpush1.bf16.msra.mxu0 0
    %164 = vmatprep.subr.bf16.mxu0 0
    %165 = vmatpush1.bf16.msra.mxu0 0
    %166 = vmatprep.subr.bf16.mxu0 0
    %167 = vmatpush1.bf16.msra.mxu0 0
    %168 = vmatprep.subr.bf16.mxu0 0
    %169 = vmatpush1.bf16.msra.mxu0 0
    %170 = vmatprep.subr.bf16.mxu0 0
    %171 = vmatpush1.bf16.msra.mxu0 0
    %172 = vmatprep.subr.bf16.mxu0 0
    %173 = vmatpush1.bf16.msra.mxu0 0
    %174 = vmatprep.subr.bf16.mxu0 0
    %175 = vmatpush1.bf16.msra.mxu0 0
    %176 = vmatprep.subr.bf16.mxu0 0
    %177 = vmatpush1.bf16.msra.mxu0 0
    %178 = vmatprep.subr.bf16.mxu0 0
    %179 = vmatpush1.bf16.msra.mxu0 0
    %180 = vmatprep.subr.bf16.mxu0 0
    %181 = vmatpush1.bf16.msra.mxu0 0
    %182 = vmatprep.subr.bf16.mxu0 0
    %183 = vmatpush1.bf16.msra.mxu0 0
    %184 = vmatprep.subr.bf16.mxu0 0
    %185 = vmatpush1.bf16.msra.mxu0 0
    %186 = vmatprep.mubr.bf16.mxu0 0
    %187 = vmatmul.mubr.bf16.gmra.mrb[0].mxu0 %v152
    %v188 = vpop.f32.mrb[0].mxu0
    %v189 = vadd.f32 %v136, %v188
    %v190 = vpop.f32.mrb[0].mxu0
    %v191 = vpop.f32.mrb[0].mxu0
    %v192 = vadd.f32 %v136, %v191
    %v193 = vpop.f32.mrb[0].mxu0
    %194 = vdwg.mxu0
    %195 = vst.msk [vmem:[#allocation2] sm:$0xff] %vm150, %v189
    %196 = vst.msk [vmem:[#allocation2 + $0x8] sm:$0xff] %vm150, %v192
    %s197 = scalar_lea.vmem [#allocation8], 16
    %v198 = vld [vmem:[%s197] sm:$0xf]
    %v199 = vld [vmem:[%s197 + $0x4] sm:$0xf]
    %v200 = vld [vmem:[%s197 + $0x8] sm:$0xf]
    %v201 = vld [vmem:[%s197 + $0xc] sm:$0xf]
    %s202 = scalar_lea.vmem [#allocation11], 1
    %v203 = vld [vmem:[%s202] sm:$0x1]
    %v205 = vlaneseq
    %v206 = vshrl.u32 %v205, 7
    %v207 = vsub.s32 0, %v206
    %v208 = vrot.slane %v203, %v207
    %v214 = vunpack.c.l.b16 %v198
    %v215 = vunpack.c.l.b16 %v199
    %v216 = vunpack.c.l.b16 %v200
    %v217 = vunpack.c.l.b16 %v201
    %v218 = vpack.c.b16 %v215, %v214
    %v219 = vpack.c.b16 %v217, %v216
    %222 = vmatprep.subr.bf16.mxu0 0
    %223 = vmatpush1.bf16.msra.mxu0 %v218
    %224 = vmatprep.subr.bf16.mxu0 0
    %225 = vmatpush1.bf16.msra.mxu0 %v219
    %226 = vmatprep.subr.bf16.mxu0 0
    %227 = vmatpush1.bf16.msra.mxu0 0
    %228 = vmatprep.subr.bf16.mxu0 0
    %229 = vmatpush1.bf16.msra.mxu0 0
    %230 = vmatprep.subr.bf16.mxu0 0
    %231 = vmatpush1.bf16.msra.mxu0 0
    %232 = vmatprep.subr.bf16.mxu0 0
    %233 = vmatpush1.bf16.msra.mxu0 0
    %234 = vmatprep.subr.bf16.mxu0 0
    %235 = vmatpush1.bf16.msra.mxu0 0
    %236 = vmatprep.subr.bf16.mxu0 0
    %237 = vmatpush1.bf16.msra.mxu0 0
    %238 = vmatprep.subr.bf16.mxu0 0
    %239 = vmatpush1.bf16.msra.mxu0 0
    %240 = vmatprep.subr.bf16.mxu0 0
    %241 = vmatpush1.bf16.msra.mxu0 0
    %242 = vmatprep.subr.bf16.mxu0 0
    %243 = vmatpush1.bf16.msra.mxu0 0
    %244 = vmatprep.subr.bf16.mxu0 0
    %245 = vmatpush1.bf16.msra.mxu0 0
    %246 = vmatprep.subr.bf16.mxu0 0
    %247 = vmatpush1.bf16.msra.mxu0 0
    %248 = vmatprep.subr.bf16.mxu0 0
    %249 = vmatpush1.bf16.msra.mxu0 0
    %250 = vmatprep.subr.bf16.mxu0 0
    %251 = vmatpush1.bf16.msra.mxu0 0
    %252 = vmatprep.subr.bf16.mxu0 0
    %253 = vmatpush1.bf16.msra.mxu0 0
    %254 = vmatprep.mubr.bf16.mxu0 0
    %255 = vmatmul.mubr.bf16.gmra.mrb[0].mxu0 %v152
    %v256 = vpop.f32.mrb[0].mxu0
    %v257 = vadd.f32 %v208, %v256
    %v258 = vpop.f32.mrb[0].mxu0
    %v259 = vpop.f32.mrb[0].mxu0
    %v260 = vadd.f32 %v208, %v259
    %v261 = vpop.f32.mrb[0].mxu0
    %262 = vdwg.mxu0
    %263 = vst.msk [vmem:[#allocation3] sm:$0xff] %vm150, %v257
    %264 = vst.msk [vmem:[#allocation3 + $0x8] sm:$0xff] %vm150, %v260
    %s265 = scalar_lea.vmem [#allocation8], 32
    %v266 = vld [vmem:[%s265] sm:$0xf]
    %v267 = vld [vmem:[%s265 + $0x4] sm:$0xf]
    %v268 = vld [vmem:[%s265 + $0x8] sm:$0xf]
    %v269 = vld [vmem:[%s265 + $0xc] sm:$0xf]
    %s270 = scalar_lea.vmem [#allocation11], 2
    %v271 = vld [vmem:[%s270] sm:$0x1]
    %v273 = vlaneseq
    %v274 = vshrl.u32 %v273, 7
    %v275 = vsub.s32 0, %v274
    %v276 = vrot.slane %v271, %v275
    %v282 = vunpack.c.l.b16 %v266
    %v283 = vunpack.c.l.b16 %v267
    %v284 = vunpack.c.l.b16 %v268
    %v285 = vunpack.c.l.b16 %v269
    %v286 = vpack.c.b16 %v283, %v282
    %v287 = vpack.c.b16 %v285, %v284
    %290 = vmatprep.subr.bf16.mxu0 0
    %291 = vmatpush1.bf16.msra.mxu0 %v286
    %292 = vmatprep.subr.bf16.mxu0 0
    %293 = vmatpush1.bf16.msra.mxu0 %v287
    %294 = vmatprep.subr.bf16.mxu0 0
    %295 = vmatpush1.bf16.msra.mxu0 0
    %296 = vmatprep.subr.bf16.mxu0 0
    %297 = vmatpush1.bf16.msra.mxu0 0
    %298 = vmatprep.subr.bf16.mxu0 0
    %299 = vmatpush1.bf16.msra.mxu0 0
    %300 = vmatprep.subr.bf16.mxu0 0
    %301 = vmatpush1.bf16.msra.mxu0 0
    %302 = vmatprep.subr.bf16.mxu0 0
    %303 = vmatpush1.bf16.msra.mxu0 0
    %304 = vmatprep.subr.bf16.mxu0 0
    %305 = vmatpush1.bf16.msra.mxu0 0
    %306 = vmatprep.subr.bf16.mxu0 0
    %307 = vmatpush1.bf16.msra.mxu0 0
    %308 = vmatprep.subr.bf16.mxu0 0
    %309 = vmatpush1.bf16.msra.mxu0 0
    %310 = vmatprep.subr.bf16.mxu0 0
    %311 = vmatpush1.bf16.msra.mxu0 0
    %312 = vmatprep.subr.bf16.mxu0 0
    %313 = vmatpush1.bf16.msra.mxu0 0
    %314 = vmatprep.subr.bf16.mxu0 0
    %315 = vmatpush1.bf16.msra.mxu0 0
    %316 = vmatprep.subr.bf16.mxu0 0
    %317 = vmatpush1.bf16.msra.mxu0 0
    %318 = vmatprep.subr.bf16.mxu0 0
    %319 = vmatpush1.bf16.msra.mxu0 0
    %320 = vmatprep.subr.bf16.mxu0 0
    %321 = vmatpush1.bf16.msra.mxu0 0
    %322 = vmatprep.mubr.bf16.mxu0 0
    %323 = vmatmul.mubr.bf16.gmra.mrb[0].mxu0 %v152
    %v324 = vpop.f32.mrb[0].mxu0
    %v325 = vadd.f32 %v276, %v324
    %v326 = vpop.f32.mrb[0].mxu0
    %v327 = vpop.f32.mrb[0].mxu0
    %v328 = vadd.f32 %v276, %v327
    %v329 = vpop.f32.mrb[0].mxu0
    %330 = vdwg.mxu0
    %331 = vst.msk [vmem:[#allocation4] sm:$0xff] %vm150, %v325
    %332 = vst.msk [vmem:[#allocation4 + $0x8] sm:$0xff] %vm150, %v328
    %v333 = vld [vmem:[#allocation10] sm:$0xf]
    %v334 = vld [vmem:[#allocation10 + $0x4] sm:$0xf]
    %v335 = vld [vmem:[#allocation10 + $0x8] sm:$0xf]
    %v336 = vld [vmem:[#allocation10 + $0xc] sm:$0xf]
    %v337 = vld [vmem:[#allocation13] sm:$0x1]
    %v339 = vlaneseq
    %v340 = vshrl.u32 %v339, 7
    %v341 = vsub.s32 0, %v340
    %v342 = vrot.slane %v337, %v341
    %v348 = vunpack.c.l.b16 %v333
    %v349 = vunpack.c.l.b16 %v334
    %v350 = vunpack.c.l.b16 %v335
    %v351 = vunpack.c.l.b16 %v336
    %v352 = vpack.c.b16 %v349, %v348
    %v353 = vpack.c.b16 %v351, %v350
    %v357 = vsel %vm150, 0, 0
    %359 = vmatprep.subr.bf16.mxu0 0
    %360 = vmatpush1.bf16.msra.mxu0 %v352
    %361 = vmatprep.subr.bf16.mxu0 0
    %362 = vmatpush1.bf16.msra.mxu0 %v353
    %363 = vmatprep.subr.bf16.mxu0 0
    %364 = vmatpush1.bf16.msra.mxu0 0
    %365 = vmatprep.subr.bf16.mxu0 0
    %366 = vmatpush1.bf16.msra.mxu0 0
    %367 = vmatprep.subr.bf16.mxu0 0
    %368 = vmatpush1.bf16.msra.mxu0 0
    %369 = vmatprep.subr.bf16.mxu0 0
    %370 = vmatpush1.bf16.msra.mxu0 0
    %371 = vmatprep.subr.bf16.mxu0 0
    %372 = vmatpush1.bf16.msra.mxu0 0
    %373 = vmatprep.subr.bf16.mxu0 0
    %374 = vmatpush1.bf16.msra.mxu0 0
    %375 = vmatprep.subr.bf16.mxu0 0
    %376 = vmatpush1.bf16.msra.mxu0 0
    %377 = vmatprep.subr.bf16.mxu0 0
    %378 = vmatpush1.bf16.msra.mxu0 0
    %379 = vmatprep.subr.bf16.mxu0 0
    %380 = vmatpush1.bf16.msra.mxu0 0
    %381 = vmatprep.subr.bf16.mxu0 0
    %382 = vmatpush1.bf16.msra.mxu0 0
    %383 = vmatprep.subr.bf16.mxu0 0
    %384 = vmatpush1.bf16.msra.mxu0 0
    %385 = vmatprep.subr.bf16.mxu0 0
    %386 = vmatpush1.bf16.msra.mxu0 0
    %387 = vmatprep.subr.bf16.mxu0 0
    %388 = vmatpush1.bf16.msra.mxu0 0
    %389 = vmatprep.subr.bf16.mxu0 0
    %390 = vmatpush1.bf16.msra.mxu0 0
    %391 = vmatprep.mubr.bf16.mxu0 0
    %392 = vmatmul.mubr.bf16.gmra.mrb[0].mxu0 %v357
    %v393 = vpop.f32.mrb[0].mxu0
    %v394 = vadd.f32 %v342, %v393
    %v395 = vpop.f32.mrb[0].mxu0
    %v396 = vpop.f32.mrb[0].mxu0
    %v397 = vpop.f32.mrb[0].mxu0
    %398 = vdwg.mxu0
    %s399 = scalar_lea.vmem [#allocation10], 16
    %v400 = vld [vmem:[%s399] sm:$0xf]
    %v401 = vld [vmem:[%s399 + $0x4] sm:$0xf]
    %v402 = vld [vmem:[%s399 + $0x8] sm:$0xf]
    %v403 = vld [vmem:[%s399 + $0xc] sm:$0xf]
    %s404 = scalar_lea.vmem [#allocation13], 1
    %v405 = vld [vmem:[%s404] sm:$0x1]
    %v407 = vlaneseq
    %v408 = vshrl.u32 %v407, 7
    %v409 = vsub.s32 0, %v408
    %v410 = vrot.slane %v405, %v409
    %v416 = vunpack.c.l.b16 %v400
    %v417 = vunpack.c.l.b16 %v401
    %v418 = vunpack.c.l.b16 %v402
    %v419 = vunpack.c.l.b16 %v403
    %v420 = vpack.c.b16 %v417, %v416
    %v421 = vpack.c.b16 %v419, %v418
    %424 = vmatprep.subr.bf16.mxu0 0
    %425 = vmatpush1.bf16.msra.mxu0 %v420
    %426 = vmatprep.subr.bf16.mxu0 0
    %427 = vmatpush1.bf16.msra.mxu0 %v421
    %428 = vmatprep.subr.bf16.mxu0 0
    %429 = vmatpush1.bf16.msra.mxu0 0
    %430 = vmatprep.subr.bf16.mxu0 0
    %431 = vmatpush1.bf16.msra.mxu0 0
    %432 = vmatprep.subr.bf16.mxu0 0
    %433 = vmatpush1.bf16.msra.mxu0 0
    %434 = vmatprep.subr.bf16.mxu0 0
    %435 = vmatpush1.bf16.msra.mxu0 0
    %436 = vmatprep.subr.bf16.mxu0 0
    %437 = vmatpush1.bf16.msra.mxu0 0
    %438 = vmatprep.subr.bf16.mxu0 0
    %439 = vmatpush1.bf16.msra.mxu0 0
    %440 = vmatprep.subr.bf16.mxu0 0
    %441 = vmatpush1.bf16.msra.mxu0 0
    %442 = vmatprep.subr.bf16.mxu0 0
    %443 = vmatpush1.bf16.msra.mxu0 0
    %444 = vmatprep.subr.bf16.mxu0 0
    %445 = vmatpush1.bf16.msra.mxu0 0
    %446 = vmatprep.subr.bf16.mxu0 0
    %447 = vmatpush1.bf16.msra.mxu0 0
    %448 = vmatprep.subr.bf16.mxu0 0
    %449 = vmatpush1.bf16.msra.mxu0 0
    %450 = vmatprep.subr.bf16.mxu0 0
    %451 = vmatpush1.bf16.msra.mxu0 0
    %452 = vmatprep.subr.bf16.mxu0 0
    %453 = vmatpush1.bf16.msra.mxu0 0
    %454 = vmatprep.subr.bf16.mxu0 0
    %455 = vmatpush1.bf16.msra.mxu0 0
    %456 = vmatprep.mubr.bf16.mxu0 0
    %457 = vmatmul.mubr.bf16.gmra.mrb[0].mxu0 %v357
    %v458 = vpop.f32.mrb[0].mxu0
    %v459 = vadd.f32 %v410, %v458
    %v460 = vpop.f32.mrb[0].mxu0
    %v461 = vpop.f32.mrb[0].mxu0
    %v462 = vpop.f32.mrb[0].mxu0
    %463 = vdwg.mxu0
    %s464 = scalar_lea.vmem [#allocation10], 32
    %v465 = vld [vmem:[%s464] sm:$0xf]
    %v466 = vld [vmem:[%s464 + $0x4] sm:$0xf]
    %v467 = vld [vmem:[%s464 + $0x8] sm:$0xf]
    %v468 = vld [vmem:[%s464 + $0xc] sm:$0xf]
    %s469 = scalar_lea.vmem [#allocation13], 2
    %v470 = vld [vmem:[%s469] sm:$0x1]
    %v472 = vlaneseq
    %v473 = vshrl.u32 %v472, 7
    %v474 = vsub.s32 0, %v473
    %v475 = vrot.slane %v470, %v474
    %v481 = vunpack.c.l.b16 %v465
    %v482 = vunpack.c.l.b16 %v466
    %v483 = vunpack.c.l.b16 %v467
    %v484 = vunpack.c.l.b16 %v468
    %v485 = vpack.c.b16 %v482, %v481
    %v486 = vpack.c.b16 %v484, %v483
    %489 = vmatprep.subr.bf16.mxu0 0
    %490 = vmatpush1.bf16.msra.mxu0 %v485
    %491 = vmatprep.subr.bf16.mxu0 0
    %492 = vmatpush1.bf16.msra.mxu0 %v486
    %493 = vmatprep.subr.bf16.mxu0 0
    %494 = vmatpush1.bf16.msra.mxu0 0
    %495 = vmatprep.subr.bf16.mxu0 0
    %496 = vmatpush1.bf16.msra.mxu0 0
    %497 = vmatprep.subr.bf16.mxu0 0
    %498 = vmatpush1.bf16.msra.mxu0 0
    %499 = vmatprep.subr.bf16.mxu0 0
    %500 = vmatpush1.bf16.msra.mxu0 0
    %501 = vmatprep.subr.bf16.mxu0 0
    %502 = vmatpush1.bf16.msra.mxu0 0
    %503 = vmatprep.subr.bf16.mxu0 0
    %504 = vmatpush1.bf16.msra.mxu0 0
    %505 = vmatprep.subr.bf16.mxu0 0
    %506 = vmatpush1.bf16.msra.mxu0 0
    %507 = vmatprep.subr.bf16.mxu0 0
    %508 = vmatpush1.bf16.msra.mxu0 0
    %509 = vmatprep.subr.bf16.mxu0 0
    %510 = vmatpush1.bf16.msra.mxu0 0
    %511 = vmatprep.subr.bf16.mxu0 0
    %512 = vmatpush1.bf16.msra.mxu0 0
    %513 = vmatprep.subr.bf16.mxu0 0
    %514 = vmatpush1.bf16.msra.mxu0 0
    %515 = vmatprep.subr.bf16.mxu0 0
    %516 = vmatpush1.bf16.msra.mxu0 0
    %517 = vmatprep.subr.bf16.mxu0 0
    %518 = vmatpush1.bf16.msra.mxu0 0
    %519 = vmatprep.subr.bf16.mxu0 0
    %520 = vmatpush1.bf16.msra.mxu0 0
    %521 = vmatprep.mubr.bf16.mxu0 0
    %522 = vmatmul.mubr.bf16.gmra.mrb[0].mxu0 %v357
    %v523 = vpop.f32.mrb[0].mxu0
    %v524 = vadd.f32 %v475, %v523
    %v525 = vpop.f32.mrb[0].mxu0
    %v526 = vpop.f32.mrb[0].mxu0
    %v527 = vpop.f32.mrb[0].mxu0
    %528 = vdwg.mxu0
    %v529 = vld [vmem:[#allocation2] sm:$0x3]
    %v530 = vadd.f32 %v529, %v394
    %v531 = vxor.u32 %v530, 2147483648
    %v532 = vmul.f32 %v531, 1.442695
    %v533 = vpow.pop %v532
    %v534 = vadd.f32 %v533, 1.0
    %v535 = vrcp.pop %v534
    %v536 = vmul.f32 1.0, %v535
    %v537 = vld [vmem:[#allocation3] sm:$0x3]
    %v538 = vadd.f32 %v537, %v459
    %v539 = vxor.u32 %v538, 2147483648
    %v540 = vmul.f32 %v539, 1.442695
    %v541 = vpow.pop %v540
    %v542 = vadd.f32 %v541, 1.0
    %v543 = vrcp.pop %v542
    %v544 = vmul.f32 1.0, %v543
    %v545 = vld [vmem:[#allocation4] sm:$0x3]
    %v546 = vmul.f32 %v536, %v524
    %v547 = vadd.f32 %v545, %v546
    %v548 = vtanh.pop %v547
    %v549 = vsub.f32 1.0, %v544
    %v550 = vmul.f32 %v549, %v548
    %v551 = vmul.f32 %v544, 0.0
    %v552 = vadd.f32 %v550, %v551
    %vm553 = vcmask 254976
    %554 = vst.msk [vmem:[#allocation17] sm:$0x3] %vm553, %v552
    %v555 = vpack.c.bf16 %v552, %v552
    %v556 = vld [vmem:[#allocation10] sm:$0xf]
    %v557 = vld [vmem:[#allocation10 + $0x4] sm:$0xf]
    %v558 = vld [vmem:[#allocation10 + $0x8] sm:$0xf]
    %v559 = vld [vmem:[#allocation10 + $0xc] sm:$0xf]
    %v560 = vld [vmem:[#allocation13] sm:$0x1]
    %v562 = vlaneseq
    %v563 = vshrl.u32 %v562, 7
    %v564 = vsub.s32 0, %v563
    %v565 = vrot.slane %v560, %v564
    %v571 = vunpack.c.l.b16 %v556
    %v572 = vunpack.c.l.b16 %v557
    %v573 = vunpack.c.l.b16 %v558
    %v574 = vunpack.c.l.b16 %v559
    %v575 = vpack.c.b16 %v572, %v571
    %v576 = vpack.c.b16 %v574, %v573
    %v580 = vsel %vm150, %v555, 0
    %582 = vmatprep.subr.bf16.mxu0 0
    %583 = vmatpush1.bf16.msra.mxu0 %v575
    %584 = vmatprep.subr.bf16.mxu0 0
    %585 = vmatpush1.bf16.msra.mxu0 %v576
    %586 = vmatprep.subr.bf16.mxu0 0
    %587 = vmatpush1.bf16.msra.mxu0 0
    %588 = vmatprep.subr.bf16.mxu0 0
    %589 = vmatpush1.bf16.msra.mxu0 0
    %590 = vmatprep.subr.bf16.mxu0 0
    %591 = vmatpush1.bf16.msra.mxu0 0
    %592 = vmatprep.subr.bf16.mxu0 0
    %593 = vmatpush1.bf16.msra.mxu0 0
    %594 = vmatprep.subr.bf16.mxu0 0
    %595 = vmatpush1.bf16.msra.mxu0 0
    %596 = vmatprep.subr.bf16.mxu0 0
    %597 = vmatpush1.bf16.msra.mxu0 0
    %598 = vmatprep.subr.bf16.mxu0 0
    %599 = vmatpush1.bf16.msra.mxu0 0
    %600 = vmatprep.subr.bf16.mxu0 0
    %601 = vmatpush1.bf16.msra.mxu0 0
    %602 = vmatprep.subr.bf16.mxu0 0
    %603 = vmatpush1.bf16.msra.mxu0 0
    %604 = vmatprep.subr.bf16.mxu0 0
    %605 = vmatpush1.bf16.msra.mxu0 0
    %606 = vmatprep.subr.bf16.mxu0 0
    %607 = vmatpush1.bf16.msra.mxu0 0
    %608 = vmatprep.subr.bf16.mxu0 0
    %609 = vmatpush1.bf16.msra.mxu0 0
    %610 = vmatprep.subr.bf16.mxu0 0
    %611 = vmatpush1.bf16.msra.mxu0 0
    %612 = vmatprep.subr.bf16.mxu0 0
    %613 = vmatpush1.bf16.msra.mxu0 0
    %614 = vmatprep.mubr.bf16.mxu0 0
    %615 = vmatmul.mubr.bf16.gmra.mrb[0].mxu0 %v580
    %v616 = vpop.f32.mrb[0].mxu0
    %v617 = vadd.f32 %v565, %v616
    %v618 = vpop.f32.mrb[0].mxu0
    %v619 = vpop.f32.mrb[0].mxu0
    %v620 = vpop.f32.mrb[0].mxu0
    %621 = vdwg.mxu0
    %v622 = vld [vmem:[%s399] sm:$0xf]
    %v623 = vld [vmem:[%s399 + $0x4] sm:$0xf]
    %v624 = vld [vmem:[%s399 + $0x8] sm:$0xf]
    %v625 = vld [vmem:[%s399 + $0xc] sm:$0xf]
    %v626 = vld [vmem:[%s404] sm:$0x1]
    %v628 = vlaneseq
    %v629 = vshrl.u32 %v628, 7
    %v630 = vsub.s32 0, %v629
    %v631 = vrot.slane %v626, %v630
    %v637 = vunpack.c.l.b16 %v622
    %v638 = vunpack.c.l.b16 %v623
    %v639 = vunpack.c.l.b16 %v624
    %v640 = vunpack.c.l.b16 %v625
    %v641 = vpack.c.b16 %v638, %v637
    %v642 = vpack.c.b16 %v640, %v639
    %645 = vmatprep.subr.bf16.mxu0 0
    %646 = vmatpush1.bf16.msra.mxu0 %v641
    %647 = vmatprep.subr.bf16.mxu0 0
    %648 = vmatpush1.bf16.msra.mxu0 %v642
    %649 = vmatprep.subr.bf16.mxu0 0
    %650 = vmatpush1.bf16.msra.mxu0 0
    %651 = vmatprep.subr.bf16.mxu0 0
    %652 = vmatpush1.bf16.msra.mxu0 0
    %653 = vmatprep.subr.bf16.mxu0 0
    %654 = vmatpush1.bf16.msra.mxu0 0
    %655 = vmatprep.subr.bf16.mxu0 0
    %656 = vmatpush1.bf16.msra.mxu0 0
    %657 = vmatprep.subr.bf16.mxu0 0
    %658 = vmatpush1.bf16.msra.mxu0 0
    %659 = vmatprep.subr.bf16.mxu0 0
    %660 = vmatpush1.bf16.msra.mxu0 0
    %661 = vmatprep.subr.bf16.mxu0 0
    %662 = vmatpush1.bf16.msra.mxu0 0
    %663 = vmatprep.subr.bf16.mxu0 0
    %664 = vmatpush1.bf16.msra.mxu0 0
    %665 = vmatprep.subr.bf16.mxu0 0
    %666 = vmatpush1.bf16.msra.mxu0 0
    %667 = vmatprep.subr.bf16.mxu0 0
    %668 = vmatpush1.bf16.msra.mxu0 0
    %669 = vmatprep.subr.bf16.mxu0 0
    %670 = vmatpush1.bf16.msra.mxu0 0
    %671 = vmatprep.subr.bf16.mxu0 0
    %672 = vmatpush1.bf16.msra.mxu0 0
    %673 = vmatprep.subr.bf16.mxu0 0
    %674 = vmatpush1.bf16.msra.mxu0 0
    %675 = vmatprep.subr.bf16.mxu0 0
    %676 = vmatpush1.bf16.msra.mxu0 0
    %677 = vmatprep.mubr.bf16.mxu0 0
    %678 = vmatmul.mubr.bf16.gmra.mrb[0].mxu0 %v580
    %v679 = vpop.f32.mrb[0].mxu0
    %v680 = vadd.f32 %v631, %v679
    %v681 = vpop.f32.mrb[0].mxu0
    %v682 = vpop.f32.mrb[0].mxu0
    %v683 = vpop.f32.mrb[0].mxu0
    %684 = vdwg.mxu0
    %v685 = vld [vmem:[%s464] sm:$0xf]
    %v686 = vld [vmem:[%s464 + $0x4] sm:$0xf]
    %v687 = vld [vmem:[%s464 + $0x8] sm:$0xf]
    %v688 = vld [vmem:[%s464 + $0xc] sm:$0xf]
    %v689 = vld [vmem:[%s469] sm:$0x1]
    %v691 = vlaneseq
    %v692 = vshrl.u32 %v691, 7
    %v693 = vsub.s32 0, %v692
    %v694 = vrot.slane %v689, %v693
    %v700 = vunpack.c.l.b16 %v685
    %v701 = vunpack.c.l.b16 %v686
    %v702 = vunpack.c.l.b16 %v687
    %v703 = vunpack.c.l.b16 %v688
    %v704 = vpack.c.b16 %v701, %v700
    %v705 = vpack.c.b16 %v703, %v702
    %708 = vmatprep.subr.bf16.mxu0 0
    %709 = vmatpush1.bf16.msra.mxu0 %v704
    %710 = vmatprep.subr.bf16.mxu0 0
    %711 = vmatpush1.bf16.msra.mxu0 %v705
    %712 = vmatprep.subr.bf16.mxu0 0
    %713 = vmatpush1.bf16.msra.mxu0 0
    %714 = vmatprep.subr.bf16.mxu0 0
    %715 = vmatpush1.bf16.msra.mxu0 0
    %716 = vmatprep.subr.bf16.mxu0 0
    %717 = vmatpush1.bf16.msra.mxu0 0
    %718 = vmatprep.subr.bf16.mxu0 0
    %719 = vmatpush1.bf16.msra.mxu0 0
    %720 = vmatprep.subr.bf16.mxu0 0
    %721 = vmatpush1.bf16.msra.mxu0 0
    %722 = vmatprep.subr.bf16.mxu0 0
    %723 = vmatpush1.bf16.msra.mxu0 0
    %724 = vmatprep.subr.bf16.mxu0 0
    %725 = vmatpush1.bf16.msra.mxu0 0
    %726 = vmatprep.subr.bf16.mxu0 0
    %727 = vmatpush1.bf16.msra.mxu0 0
    %728 = vmatprep.subr.bf16.mxu0 0
    %729 = vmatpush1.bf16.msra.mxu0 0
    %730 = vmatprep.subr.bf16.mxu0 0
    %731 = vmatpush1.bf16.msra.mxu0 0
    %732 = vmatprep.subr.bf16.mxu0 0
    %733 = vmatpush1.bf16.msra.mxu0 0
    %734 = vmatprep.subr.bf16.mxu0 0
    %735 = vmatpush1.bf16.msra.mxu0 0
    %736 = vmatprep.subr.bf16.mxu0 0
    %737 = vmatpush1.bf16.msra.mxu0 0
    %738 = vmatprep.subr.bf16.mxu0 0
    %739 = vmatpush1.bf16.msra.mxu0 0
    %740 = vmatprep.mubr.bf16.mxu0 0
    %741 = vmatmul.mubr.bf16.gmra.mrb[0].mxu0 %v580
    %v742 = vpop.f32.mrb[0].mxu0
    %v743 = vadd.f32 %v694, %v742
    %v744 = vpop.f32.mrb[0].mxu0
    %v745 = vpop.f32.mrb[0].mxu0
    %v746 = vpop.f32.mrb[0].mxu0
    %747 = vdwg.mxu0
    %v748 = vld [vmem:[#allocation2 + $0x2] sm:$0x3]
    %v749 = vadd.f32 %v748, %v617
    %v750 = vxor.u32 %v749, 2147483648
    %v751 = vmul.f32 %v750, 1.442695
    %v752 = vpow.pop %v751
    %v753 = vadd.f32 %v752, 1.0
    %v754 = vrcp.pop %v753
    %v755 = vmul.f32 1.0, %v754
    %v756 = vld [vmem:[#allocation3 + $0x2] sm:$0x3]
    %v757 = vadd.f32 %v756, %v680
    %v758 = vxor.u32 %v757, 2147483648
    %v759 = vmul.f32 %v758, 1.442695
    %v760 = vpow.pop %v759
    %v761 = vadd.f32 %v760, 1.0
    %v762 = vrcp.pop %v761
    %v763 = vmul.f32 1.0, %v762
    %v764 = vld [vmem:[#allocation4 + $0x2] sm:$0x3]
    %v765 = vmul.f32 %v755, %v743
    %v766 = vadd.f32 %v764, %v765
    %v767 = vtanh.pop %v766
    %v768 = vsub.f32 1.0, %v763
    %v769 = vmul.f32 %v768, %v767
    %v770 = vmul.f32 %v763, %v552
    %v771 = vadd.f32 %v769, %v770
    %772 = vst.msk [vmem:[#allocation17 + $0x2] sm:$0x3] %vm553, %v771
    %v773 = vpack.c.bf16 %v771, %v771
    %v774 = vld [vmem:[#allocation10] sm:$0xf]
    %v775 = vld [vmem:[#allocation10 + $0x4] sm:$0xf]
    %v776 = vld [vmem:[#allocation10 + $0x8] sm:$0xf]
    %v777 = vld [vmem:[#allocation10 + $0xc] sm:$0xf]
    %v778 = vld [vmem:[#allocation13] sm:$0x1]
    %v780 = vlaneseq
    %v781 = vshrl.u32 %v780, 7
    %v782 = vsub.s32 0, %v781
    %v783 = vrot.slane %v778, %v782
    %v789 = vunpack.c.l.b16 %v774
    %v790 = vunpack.c.l.b16 %v775
    %v791 = vunpack.c.l.b16 %v776
    %v792 = vunpack.c.l.b16 %v777
    %v793 = vpack.c.b16 %v790, %v789
    %v794 = vpack.c.b16 %v792, %v791
    %v798 = vsel %vm150, %v773, 0
    %800 = vmatprep.subr.bf16.mxu0 0
    %801 = vmatpush1.bf16.msra.mxu0 %v793
    %802 = vmatprep.subr.bf16.mxu0 0
    %803 = vmatpush1.bf16.msra.mxu0 %v794
    %804 = vmatprep.subr.bf16.mxu0 0
    %805 = vmatpush1.bf16.msra.mxu0 0
    %806 = vmatprep.subr.bf16.mxu0 0
    %807 = vmatpush1.bf16.msra.mxu0 0
    %808 = vmatprep.subr.bf16.mxu0 0
    %809 = vmatpush1.bf16.msra.mxu0 0
    %810 = vmatprep.subr.bf16.mxu0 0
    %811 = vmatpush1.bf16.msra.mxu0 0
    %812 = vmatprep.subr.bf16.mxu0 0
    %813 = vmatpush1.bf16.msra.mxu0 0
    %814 = vmatprep.subr.bf16.mxu0 0
    %815 = vmatpush1.bf16.msra.mxu0 0
    %816 = vmatprep.subr.bf16.mxu0 0
    %817 = vmatpush1.bf16.msra.mxu0 0
    %818 = vmatprep.subr.bf16.mxu0 0
    %819 = vmatpush1.bf16.msra.mxu0 0
    %820 = vmatprep.subr.bf16.mxu0 0
    %821 = vmatpush1.bf16.msra.mxu0 0
    %822 = vmatprep.subr.bf16.mxu0 0
    %823 = vmatpush1.bf16.msra.mxu0 0
    %824 = vmatprep.subr.bf16.mxu0 0
    %825 = vmatpush1.bf16.msra.mxu0 0
    %826 = vmatprep.subr.bf16.mxu0 0
    %827 = vmatpush1.bf16.msra.mxu0 0
    %828 = vmatprep.subr.bf16.mxu0 0
    %829 = vmatpush1.bf16.msra.mxu0 0
    %830 = vmatprep.subr.bf16.mxu0 0
    %831 = vmatpush1.bf16.msra.mxu0 0
    %832 = vmatprep.mubr.bf16.mxu0 0
    %833 = vmatmul.mubr.bf16.gmra.mrb[0].mxu0 %v798
    %v834 = vpop.f32.mrb[0].mxu0
    %v835 = vadd.f32 %v783, %v834
    %v836 = vpop.f32.mrb[0].mxu0
    %v837 = vpop.f32.mrb[0].mxu0
    %v838 = vpop.f32.mrb[0].mxu0
    %839 = vdwg.mxu0
    %v840 = vld [vmem:[%s399] sm:$0xf]
    %v841 = vld [vmem:[%s399 + $0x4] sm:$0xf]
    %v842 = vld [vmem:[%s399 + $0x8] sm:$0xf]
    %v843 = vld [vmem:[%s399 + $0xc] sm:$0xf]
    %v844 = vld [vmem:[%s404] sm:$0x1]
    %v846 = vlaneseq
    %v847 = vshrl.u32 %v846, 7
    %v848 = vsub.s32 0, %v847
    %v849 = vrot.slane %v844, %v848
    %v855 = vunpack.c.l.b16 %v840
    %v856 = vunpack.c.l.b16 %v841
    %v857 = vunpack.c.l.b16 %v842
    %v858 = vunpack.c.l.b16 %v843
    %v859 = vpack.c.b16 %v856, %v855
    %v860 = vpack.c.b16 %v858, %v857
    %863 = vmatprep.subr.bf16.mxu0 0
    %864 = vmatpush1.bf16.msra.mxu0 %v859
    %865 = vmatprep.subr.bf16.mxu0 0
    %866 = vmatpush1.bf16.msra.mxu0 %v860
    %867 = vmatprep.subr.bf16.mxu0 0
    %868 = vmatpush1.bf16.msra.mxu0 0
    %869 = vmatprep.subr.bf16.mxu0 0
    %870 = vmatpush1.bf16.msra.mxu0 0
    %871 = vmatprep.subr.bf16.mxu0 0
    %872 = vmatpush1.bf16.msra.mxu0 0
    %873 = vmatprep.subr.bf16.mxu0 0
    %874 = vmatpush1.bf16.msra.mxu0 0
    %875 = vmatprep.subr.bf16.mxu0 0
    %876 = vmatpush1.bf16.msra.mxu0 0
    %877 = vmatprep.subr.bf16.mxu0 0
    %878 = vmatpush1.bf16.msra.mxu0 0
    %879 = vmatprep.subr.bf16.mxu0 0
    %880 = vmatpush1.bf16.msra.mxu0 0
    %881 = vmatprep.subr.bf16.mxu0 0
    %882 = vmatpush1.bf16.msra.mxu0 0
    %883 = vmatprep.subr.bf16.mxu0 0
    %884 = vmatpush1.bf16.msra.mxu0 0
    %885 = vmatprep.subr.bf16.mxu0 0
    %886 = vmatpush1.bf16.msra.mxu0 0
    %887 = vmatprep.subr.bf16.mxu0 0
    %888 = vmatpush1.bf16.msra.mxu0 0
    %889 = vmatprep.subr.bf16.mxu0 0
    %890 = vmatpush1.bf16.msra.mxu0 0
    %891 = vmatprep.subr.bf16.mxu0 0
    %892 = vmatpush1.bf16.msra.mxu0 0
    %893 = vmatprep.subr.bf16.mxu0 0
    %894 = vmatpush1.bf16.msra.mxu0 0
    %895 = vmatprep.mubr.bf16.mxu0 0
    %896 = vmatmul.mubr.bf16.gmra.mrb[0].mxu0 %v798
    %v897 = vpop.f32.mrb[0].mxu0
    %v898 = vadd.f32 %v849, %v897
    %v899 = vpop.f32.mrb[0].mxu0
    %v900 = vpop.f32.mrb[0].mxu0
    %v901 = vpop.f32.mrb[0].mxu0
    %902 = vdwg.mxu0
    %v903 = vld [vmem:[%s464] sm:$0xf]
    %v904 = vld [vmem:[%s464 + $0x4] sm:$0xf]
    %v905 = vld [vmem:[%s464 + $0x8] sm:$0xf]
    %v906 = vld [vmem:[%s464 + $0xc] sm:$0xf]
    %v907 = vld [vmem:[%s469] sm:$0x1]
    %v909 = vlaneseq
    %v910 = vshrl.u32 %v909, 7
    %v911 = vsub.s32 0, %v910
    %v912 = vrot.slane %v907, %v911
    %v918 = vunpack.c.l.b16 %v903
    %v919 = vunpack.c.l.b16 %v904
    %v920 = vunpack.c.l.b16 %v905
    %v921 = vunpack.c.l.b16 %v906
    %v922 = vpack.c.b16 %v919, %v918
    %v923 = vpack.c.b16 %v921, %v920
    %926 = vmatprep.subr.bf16.mxu0 0
    %927 = vmatpush1.bf16.msra.mxu0 %v922
    %928 = vmatprep.subr.bf16.mxu0 0
    %929 = vmatpush1.bf16.msra.mxu0 %v923
    %930 = vmatprep.subr.bf16.mxu0 0
    %931 = vmatpush1.bf16.msra.mxu0 0
    %932 = vmatprep.subr.bf16.mxu0 0
    %933 = vmatpush1.bf16.msra.mxu0 0
    %934 = vmatprep.subr.bf16.mxu0 0
    %935 = vmatpush1.bf16.msra.mxu0 0
    %936 = vmatprep.subr.bf16.mxu0 0
    %937 = vmatpush1.bf16.msra.mxu0 0
    %938 = vmatprep.subr.bf16.mxu0 0
    %939 = vmatpush1.bf16.msra.mxu0 0
    %940 = vmatprep.subr.bf16.mxu0 0
    %941 = vmatpush1.bf16.msra.mxu0 0
    %942 = vmatprep.subr.bf16.mxu0 0
    %943 = vmatpush1.bf16.msra.mxu0 0
    %944 = vmatprep.subr.bf16.mxu0 0
    %945 = vmatpush1.bf16.msra.mxu0 0
    %946 = vmatprep.subr.bf16.mxu0 0
    %947 = vmatpush1.bf16.msra.mxu0 0
    %948 = vmatprep.subr.bf16.mxu0 0
    %949 = vmatpush1.bf16.msra.mxu0 0
    %950 = vmatprep.subr.bf16.mxu0 0
    %951 = vmatpush1.bf16.msra.mxu0 0
    %952 = vmatprep.subr.bf16.mxu0 0
    %953 = vmatpush1.bf16.msra.mxu0 0
    %954 = vmatprep.subr.bf16.mxu0 0
    %955 = vmatpush1.bf16.msra.mxu0 0
    %956 = vmatprep.subr.bf16.mxu0 0
    %957 = vmatpush1.bf16.msra.mxu0 0
    %958 = vmatprep.mubr.bf16.mxu0 0
    %959 = vmatmul.mubr.bf16.gmra.mrb[0].mxu0 %v798
    %v960 = vpop.f32.mrb[0].mxu0
    %v961 = vadd.f32 %v912, %v960
    %v962 = vpop.f32.mrb[0].mxu0
    %v963 = vpop.f32.mrb[0].mxu0
    %v964 = vpop.f32.mrb[0].mxu0
    %965 = vdwg.mxu0
    %v966 = vld [vmem:[#allocation2 + $0x4] sm:$0x3]
    %v967 = vadd.f32 %v966, %v835
    %v968 = vxor.u32 %v967, 2147483648
    %v969 = vmul.f32 %v968, 1.442695
    %v970 = vpow.pop %v969
    %v971 = vadd.f32 %v970, 1.0
    %v972 = vrcp.pop %v971
    %v973 = vmul.f32 1.0, %v972
    %v974 = vld [vmem:[#allocation3 + $0x4] sm:$0x3]
    %v975 = vadd.f32 %v974, %v898
    %v976 = vxor.u32 %v975, 2147483648
    %v977 = vmul.f32 %v976, 1.442695
    %v978 = vpow.pop %v977
    %v979 = vadd.f32 %v978, 1.0
    %v980 = vrcp.pop %v979
    %v981 = vmul.f32 1.0, %v980
    %v982 = vld [vmem:[#allocation4 + $0x4] sm:$0x3]
    %v983 = vmul.f32 %v973, %v961
    %v984 = vadd.f32 %v982, %v983
    %v985 = vtanh.pop %v984
    %v986 = vsub.f32 1.0, %v981
    %v987 = vmul.f32 %v986, %v985
    %v988 = vmul.f32 %v981, %v771
    %v989 = vadd.f32 %v987, %v988
    %990 = vst.msk [vmem:[#allocation17 + $0x4] sm:$0x3] %vm553, %v989
    %v991 = vpack.c.bf16 %v989, %v989
    %v992 = vld [vmem:[#allocation10] sm:$0xf]
    %v993 = vld [vmem:[#allocation10 + $0x4] sm:$0xf]
    %v994 = vld [vmem:[#allocation10 + $0x8] sm:$0xf]
    %v995 = vld [vmem:[#allocation10 + $0xc] sm:$0xf]
    %v996 = vld [vmem:[#allocation13] sm:$0x1]
    %v998 = vlaneseq
    %v999 = vshrl.u32 %v998, 7
    %v1000 = vsub.s32 0, %v999
    %v1001 = vrot.slane %v996, %v1000
    %v1007 = vunpack.c.l.b16 %v992
    %v1008 = vunpack.c.l.b16 %v993
    %v1009 = vunpack.c.l.b16 %v994
    %v1010 = vunpack.c.l.b16 %v995
    %v1011 = vpack.c.b16 %v1008, %v1007
    %v1012 = vpack.c.b16 %v1010, %v1009
    %v1016 = vsel %vm150, %v991, 0
    %1018 = vmatprep.subr.bf16.mxu0 0
    %1019 = vmatpush1.bf16.msra.mxu0 %v1011
    %1020 = vmatprep.subr.bf16.mxu0 0
    %1021 = vmatpush1.bf16.msra.mxu0 %v1012
    %1022 = vmatprep.subr.bf16.mxu0 0
    %1023 = vmatpush1.bf16.msra.mxu0 0
    %1024 = vmatprep.subr.bf16.mxu0 0
    %1025 = vmatpush1.bf16.msra.mxu0 0
    %1026 = vmatprep.subr.bf16.mxu0 0
    %1027 = vmatpush1.bf16.msra.mxu0 0
    %1028 = vmatprep.subr.bf16.mxu0 0
    %1029 = vmatpush1.bf16.msra.mxu0 0
    %1030 = vmatprep.subr.bf16.mxu0 0
    %1031 = vmatpush1.bf16.msra.mxu0 0
    %1032 = vmatprep.subr.bf16.mxu0 0
    %1033 = vmatpush1.bf16.msra.mxu0 0
    %1034 = vmatprep.subr.bf16.mxu0 0
    %1035 = vmatpush1.bf16.msra.mxu0 0
    %1036 = vmatprep.subr.bf16.mxu0 0
    %1037 = vmatpush1.bf16.msra.mxu0 0
    %1038 = vmatprep.subr.bf16.mxu0 0
    %1039 = vmatpush1.bf16.msra.mxu0 0
    %1040 = vmatprep.subr.bf16.mxu0 0
    %1041 = vmatpush1.bf16.msra.mxu0 0
    %1042 = vmatprep.subr.bf16.mxu0 0
    %1043 = vmatpush1.bf16.msra.mxu0 0
    %1044 = vmatprep.subr.bf16.mxu0 0
    %1045 = vmatpush1.bf16.msra.mxu0 0
    %1046 = vmatprep.subr.bf16.mxu0 0
    %1047 = vmatpush1.bf16.msra.mxu0 0
    %1048 = vmatprep.subr.bf16.mxu0 0
    %1049 = vmatpush1.bf16.msra.mxu0 0
    %1050 = vmatprep.mubr.bf16.mxu0 0
    %1051 = vmatmul.mubr.bf16.gmra.mrb[0].mxu0 %v1016
    %v1052 = vpop.f32.mrb[0].mxu0
    %v1053 = vadd.f32 %v1001, %v1052
    %v1054 = vpop.f32.mrb[0].mxu0
    %v1055 = vpop.f32.mrb[0].mxu0
    %v1056 = vpop.f32.mrb[0].mxu0
    %1057 = vdwg.mxu0
    %v1058 = vld [vmem:[%s399] sm:$0xf]
    %v1059 = vld [vmem:[%s399 + $0x4] sm:$0xf]
    %v1060 = vld [vmem:[%s399 + $0x8] sm:$0xf]
    %v1061 = vld [vmem:[%s399 + $0xc] sm:$0xf]
    %v1062 = vld [vmem:[%s404] sm:$0x1]
    %v1064 = vlaneseq
    %v1065 = vshrl.u32 %v1064, 7
    %v1066 = vsub.s32 0, %v1065
    %v1067 = vrot.slane %v1062, %v1066
    %v1073 = vunpack.c.l.b16 %v1058
    %v1074 = vunpack.c.l.b16 %v1059
    %v1075 = vunpack.c.l.b16 %v1060
    %v1076 = vunpack.c.l.b16 %v1061
    %v1077 = vpack.c.b16 %v1074, %v1073
    %v1078 = vpack.c.b16 %v1076, %v1075
    %1081 = vmatprep.subr.bf16.mxu0 0
    %1082 = vmatpush1.bf16.msra.mxu0 %v1077
    %1083 = vmatprep.subr.bf16.mxu0 0
    %1084 = vmatpush1.bf16.msra.mxu0 %v1078
    %1085 = vmatprep.subr.bf16.mxu0 0
    %1086 = vmatpush1.bf16.msra.mxu0 0
    %1087 = vmatprep.subr.bf16.mxu0 0
    %1088 = vmatpush1.bf16.msra.mxu0 0
    %1089 = vmatprep.subr.bf16.mxu0 0
    %1090 = vmatpush1.bf16.msra.mxu0 0
    %1091 = vmatprep.subr.bf16.mxu0 0
    %1092 = vmatpush1.bf16.msra.mxu0 0
    %1093 = vmatprep.subr.bf16.mxu0 0
    %1094 = vmatpush1.bf16.msra.mxu0 0
    %1095 = vmatprep.subr.bf16.mxu0 0
    %1096 = vmatpush1.bf16.msra.mxu0 0
    %1097 = vmatprep.subr.bf16.mxu0 0
    %1098 = vmatpush1.bf16.msra.mxu0 0
    %1099 = vmatprep.subr.bf16.mxu0 0
    %1100 = vmatpush1.bf16.msra.mxu0 0
    %1101 = vmatprep.subr.bf16.mxu0 0
    %1102 = vmatpush1.bf16.msra.mxu0 0
    %1103 = vmatprep.subr.bf16.mxu0 0
    %1104 = vmatpush1.bf16.msra.mxu0 0
    %1105 = vmatprep.subr.bf16.mxu0 0
    %1106 = vmatpush1.bf16.msra.mxu0 0
    %1107 = vmatprep.subr.bf16.mxu0 0
    %1108 = vmatpush1.bf16.msra.mxu0 0
    %1109 = vmatprep.subr.bf16.mxu0 0
    %1110 = vmatpush1.bf16.msra.mxu0 0
    %1111 = vmatprep.subr.bf16.mxu0 0
    %1112 = vmatpush1.bf16.msra.mxu0 0
    %1113 = vmatprep.mubr.bf16.mxu0 0
    %1114 = vmatmul.mubr.bf16.gmra.mrb[0].mxu0 %v1016
    %v1115 = vpop.f32.mrb[0].mxu0
    %v1116 = vadd.f32 %v1067, %v1115
    %v1117 = vpop.f32.mrb[0].mxu0
    %v1118 = vpop.f32.mrb[0].mxu0
    %v1119 = vpop.f32.mrb[0].mxu0
    %1120 = vdwg.mxu0
    %v1121 = vld [vmem:[%s464] sm:$0xf]
    %v1122 = vld [vmem:[%s464 + $0x4] sm:$0xf]
    %v1123 = vld [vmem:[%s464 + $0x8] sm:$0xf]
    %v1124 = vld [vmem:[%s464 + $0xc] sm:$0xf]
    %v1125 = vld [vmem:[%s469] sm:$0x1]
    %v1127 = vlaneseq
    %v1128 = vshrl.u32 %v1127, 7
    %v1129 = vsub.s32 0, %v1128
    %v1130 = vrot.slane %v1125, %v1129
    %v1136 = vunpack.c.l.b16 %v1121
    %v1137 = vunpack.c.l.b16 %v1122
    %v1138 = vunpack.c.l.b16 %v1123
    %v1139 = vunpack.c.l.b16 %v1124
    %v1140 = vpack.c.b16 %v1137, %v1136
    %v1141 = vpack.c.b16 %v1139, %v1138
    %1144 = vmatprep.subr.bf16.mxu0 0
    %1145 = vmatpush1.bf16.msra.mxu0 %v1140
    %1146 = vmatprep.subr.bf16.mxu0 0
    %1147 = vmatpush1.bf16.msra.mxu0 %v1141
    %1148 = vmatprep.subr.bf16.mxu0 0
    %1149 = vmatpush1.bf16.msra.mxu0 0
    %1150 = vmatprep.subr.bf16.mxu0 0
    %1151 = vmatpush1.bf16.msra.mxu0 0
    %1152 = vmatprep.subr.bf16.mxu0 0
    %1153 = vmatpush1.bf16.msra.mxu0 0
    %1154 = vmatprep.subr.bf16.mxu0 0
    %1155 = vmatpush1.bf16.msra.mxu0 0
    %1156 = vmatprep.subr.bf16.mxu0 0
    %1157 = vmatpush1.bf16.msra.mxu0 0
    %1158 = vmatprep.subr.bf16.mxu0 0
    %1159 = vmatpush1.bf16.msra.mxu0 0
    %1160 = vmatprep.subr.bf16.mxu0 0
    %1161 = vmatpush1.bf16.msra.mxu0 0
    %1162 = vmatprep.subr.bf16.mxu0 0
    %1163 = vmatpush1.bf16.msra.mxu0 0
    %1164 = vmatprep.subr.bf16.mxu0 0
    %1165 = vmatpush1.bf16.msra.mxu0 0
    %1166 = vmatprep.subr.bf16.mxu0 0
    %1167 = vmatpush1.bf16.msra.mxu0 0
    %1168 = vmatprep.subr.bf16.mxu0 0
    %1169 = vmatpush1.bf16.msra.mxu0 0
    %1170 = vmatprep.subr.bf16.mxu0 0
    %1171 = vmatpush1.bf16.msra.mxu0 0
    %1172 = vmatprep.subr.bf16.mxu0 0
    %1173 = vmatpush1.bf16.msra.mxu0 0
    %1174 = vmatprep.subr.bf16.mxu0 0
    %1175 = vmatpush1.bf16.msra.mxu0 0
    %1176 = vmatprep.mubr.bf16.mxu0 0
    %1177 = vmatmul.mubr.bf16.gmra.mrb[0].mxu0 %v1016
    %v1178 = vpop.f32.mrb[0].mxu0
    %v1179 = vadd.f32 %v1130, %v1178
    %v1180 = vpop.f32.mrb[0].mxu0
    %v1181 = vpop.f32.mrb[0].mxu0
    %v1182 = vpop.f32.mrb[0].mxu0
    %1183 = vdwg.mxu0
    %v1184 = vld [vmem:[#allocation2 + $0x6] sm:$0x3]
    %v1185 = vadd.f32 %v1184, %v1053
    %v1186 = vxor.u32 %v1185, 2147483648
    %v1187 = vmul.f32 %v1186, 1.442695
    %v1188 = vpow.pop %v1187
    %v1189 = vadd.f32 %v1188, 1.0
    %v1190 = vrcp.pop %v1189
    %v1191 = vmul.f32 1.0, %v1190
    %v1192 = vld [vmem:[#allocation3 + $0x6] sm:$0x3]
    %v1193 = vadd.f32 %v1192, %v1116
    %v1194 = vxor.u32 %v1193, 2147483648
    %v1195 = vmul.f32 %v1194, 1.442695
    %v1196 = vpow.pop %v1195
    %v1197 = vadd.f32 %v1196, 1.0
    %v1198 = vrcp.pop %v1197
    %v1199 = vmul.f32 1.0, %v1198
    %v1200 = vld [vmem:[#allocation4 + $0x6] sm:$0x3]
    %v1201 = vmul.f32 %v1191, %v1179
    %v1202 = vadd.f32 %v1200, %v1201
    %v1203 = vtanh.pop %v1202
    %v1204 = vsub.f32 1.0, %v1199
    %v1205 = vmul.f32 %v1204, %v1203
    %v1206 = vmul.f32 %v1199, %v989
    %v1207 = vadd.f32 %v1205, %v1206
    %1208 = vst.msk [vmem:[#allocation17 + $0x6] sm:$0x3] %vm553, %v1207
    %v1209 = vpack.c.bf16 %v1207, %v1207
    %v1210 = vld [vmem:[#allocation10] sm:$0xf]
    %v1211 = vld [vmem:[#allocation10 + $0x4] sm:$0xf]
    %v1212 = vld [vmem:[#allocation10 + $0x8] sm:$0xf]
    %v1213 = vld [vmem:[#allocation10 + $0xc] sm:$0xf]
    %v1214 = vld [vmem:[#allocation13] sm:$0x1]
    %v1216 = vlaneseq
    %v1217 = vshrl.u32 %v1216, 7
    %v1218 = vsub.s32 0, %v1217
    %v1219 = vrot.slane %v1214, %v1218
    %v1225 = vunpack.c.l.b16 %v1210
    %v1226 = vunpack.c.l.b16 %v1211
    %v1227 = vunpack.c.l.b16 %v1212
    %v1228 = vunpack.c.l.b16 %v1213
    %v1229 = vpack.c.b16 %v1226, %v1225
    %v1230 = vpack.c.b16 %v1228, %v1227
    %v1234 = vsel %vm150, %v1209, 0
    %1236 = vmatprep.subr.bf16.mxu0 0
    %1237 = vmatpush1.bf16.msra.mxu0 %v1229
    %1238 = vmatprep.subr.bf16.mxu0 0
    %1239 = vmatpush1.bf16.msra.mxu0 %v1230
    %1240 = vmatprep.subr.bf16.mxu0 0
    %1241 = vmatpush1.bf16.msra.mxu0 0
    %1242 = vmatprep.subr.bf16.mxu0 0
    %1243 = vmatpush1.bf16.msra.mxu0 0
    %1244 = vmatprep.subr.bf16.mxu0 0
    %1245 = vmatpush1.bf16.msra.mxu0 0
    %1246 = vmatprep.subr.bf16.mxu0 0
    %1247 = vmatpush1.bf16.msra.mxu0 0
    %1248 = vmatprep.subr.bf16.mxu0 0
    %1249 = vmatpush1.bf16.msra.mxu0 0
    %1250 = vmatprep.subr.bf16.mxu0 0
    %1251 = vmatpush1.bf16.msra.mxu0 0
    %1252 = vmatprep.subr.bf16.mxu0 0
    %1253 = vmatpush1.bf16.msra.mxu0 0
    %1254 = vmatprep.subr.bf16.mxu0 0
    %1255 = vmatpush1.bf16.msra.mxu0 0
    %1256 = vmatprep.subr.bf16.mxu0 0
    %1257 = vmatpush1.bf16.msra.mxu0 0
    %1258 = vmatprep.subr.bf16.mxu0 0
    %1259 = vmatpush1.bf16.msra.mxu0 0
    %1260 = vmatprep.subr.bf16.mxu0 0
    %1261 = vmatpush1.bf16.msra.mxu0 0
    %1262 = vmatprep.subr.bf16.mxu0 0
    %1263 = vmatpush1.bf16.msra.mxu0 0
    %1264 = vmatprep.subr.bf16.mxu0 0
    %1265 = vmatpush1.bf16.msra.mxu0 0
    %1266 = vmatprep.subr.bf16.mxu0 0
    %1267 = vmatpush1.bf16.msra.mxu0 0
    %1268 = vmatprep.mubr.bf16.mxu0 0
    %1269 = vmatmul.mubr.bf16.gmra.mrb[0].mxu0 %v1234
    %v1270 = vpop.f32.mrb[0].mxu0
    %v1271 = vadd.f32 %v1219, %v1270
    %v1272 = vpop.f32.mrb[0].mxu0
    %v1273 = vpop.f32.mrb[0].mxu0
    %v1274 = vpop.f32.mrb[0].mxu0
    %1275 = vdwg.mxu0
    %v1276 = vld [vmem:[%s399] sm:$0xf]
    %v1277 = vld [vmem:[%s399 + $0x4] sm:$0xf]
    %v1278 = vld [vmem:[%s399 + $0x8] sm:$0xf]
    %v1279 = vld [vmem:[%s399 + $0xc] sm:$0xf]
    %v1280 = vld [vmem:[%s404] sm:$0x1]
    %v1282 = vlaneseq
    %v1283 = vshrl.u32 %v1282, 7
    %v1284 = vsub.s32 0, %v1283
    %v1285 = vrot.slane %v1280, %v1284
    %v1291 = vunpack.c.l.b16 %v1276
    %v1292 = vunpack.c.l.b16 %v1277
    %v1293 = vunpack.c.l.b16 %v1278
    %v1294 = vunpack.c.l.b16 %v1279
    %v1295 = vpack.c.b16 %v1292, %v1291
    %v1296 = vpack.c.b16 %v1294, %v1293
    %1299 = vmatprep.subr.bf16.mxu0 0
    %1300 = vmatpush1.bf16.msra.mxu0 %v1295
    %1301 = vmatprep.subr.bf16.mxu0 0
    %1302 = vmatpush1.bf16.msra.mxu0 %v1296
    %1303 = vmatprep.subr.bf16.mxu0 0
    %1304 = vmatpush1.bf16.msra.mxu0 0
    %1305 = vmatprep.subr.bf16.mxu0 0
    %1306 = vmatpush1.bf16.msra.mxu0 0
    %1307 = vmatprep.subr.bf16.mxu0 0
    %1308 = vmatpush1.bf16.msra.mxu0 0
    %1309 = vmatprep.subr.bf16.mxu0 0
    %1310 = vmatpush1.bf16.msra.mxu0 0
    %1311 = vmatprep.subr.bf16.mxu0 0
    %1312 = vmatpush1.bf16.msra.mxu0 0
    %1313 = vmatprep.subr.bf16.mxu0 0
    %1314 = vmatpush1.bf16.msra.mxu0 0
    %1315 = vmatprep.subr.bf16.mxu0 0
    %1316 = vmatpush1.bf16.msra.mxu0 0
    %1317 = vmatprep.subr.bf16.mxu0 0
    %1318 = vmatpush1.bf16.msra.mxu0 0
    %1319 = vmatprep.subr.bf16.mxu0 0
    %1320 = vmatpush1.bf16.msra.mxu0 0
    %1321 = vmatprep.subr.bf16.mxu0 0
    %1322 = vmatpush1.bf16.msra.mxu0 0
    %1323 = vmatprep.subr.bf16.mxu0 0
    %1324 = vmatpush1.bf16.msra.mxu0 0
    %1325 = vmatprep.subr.bf16.mxu0 0
    %1326 = vmatpush1.bf16.msra.mxu0 0
    %1327 = vmatprep.subr.bf16.mxu0 0
    %1328 = vmatpush1.bf16.msra.mxu0 0
    %1329 = vmatprep.subr.bf16.mxu0 0
    %1330 = vmatpush1.bf16.msra.mxu0 0
    %1331 = vmatprep.mubr.bf16.mxu0 0
    %1332 = vmatmul.mubr.bf16.gmra.mrb[0].mxu0 %v1234
    %v1333 = vpop.f32.mrb[0].mxu0
    %v1334 = vadd.f32 %v1285, %v1333
    %v1335 = vpop.f32.mrb[0].mxu0
    %v1336 = vpop.f32.mrb[0].mxu0
    %v1337 = vpop.f32.mrb[0].mxu0
    %1338 = vdwg.mxu0
    %v1339 = vld [vmem:[%s464] sm:$0xf]
    %v1340 = vld [vmem:[%s464 + $0x4] sm:$0xf]
    %v1341 = vld [vmem:[%s464 + $0x8] sm:$0xf]
    %v1342 = vld [vmem:[%s464 + $0xc] sm:$0xf]
    %v1343 = vld [vmem:[%s469] sm:$0x1]
    %v1345 = vlaneseq
    %v1346 = vshrl.u32 %v1345, 7
    %v1347 = vsub.s32 0, %v1346
    %v1348 = vrot.slane %v1343, %v1347
    %v1354 = vunpack.c.l.b16 %v1339
    %v1355 = vunpack.c.l.b16 %v1340
    %v1356 = vunpack.c.l.b16 %v1341
    %v1357 = vunpack.c.l.b16 %v1342
    %v1358 = vpack.c.b16 %v1355, %v1354
    %v1359 = vpack.c.b16 %v1357, %v1356
    %1362 = vmatprep.subr.bf16.mxu0 0
    %1363 = vmatpush1.bf16.msra.mxu0 %v1358
    %1364 = vmatprep.subr.bf16.mxu0 0
    %1365 = vmatpush1.bf16.msra.mxu0 %v1359
    %1366 = vmatprep.subr.bf16.mxu0 0
    %1367 = vmatpush1.bf16.msra.mxu0 0
    %1368 = vmatprep.subr.bf16.mxu0 0
    %1369 = vmatpush1.bf16.msra.mxu0 0
    %1370 = vmatprep.subr.bf16.mxu0 0
    %1371 = vmatpush1.bf16.msra.mxu0 0
    %1372 = vmatprep.subr.bf16.mxu0 0
    %1373 = vmatpush1.bf16.msra.mxu0 0
    %1374 = vmatprep.subr.bf16.mxu0 0
    %1375 = vmatpush1.bf16.msra.mxu0 0
    %1376 = vmatprep.subr.bf16.mxu0 0
    %1377 = vmatpush1.bf16.msra.mxu0 0
    %1378 = vmatprep.subr.bf16.mxu0 0
    %1379 = vmatpush1.bf16.msra.mxu0 0
    %1380 = vmatprep.subr.bf16.mxu0 0
    %1381 = vmatpush1.bf16.msra.mxu0 0
    %1382 = vmatprep.subr.bf16.mxu0 0
    %1383 = vmatpush1.bf16.msra.mxu0 0
    %1384 = vmatprep.subr.bf16.mxu0 0
    %1385 = vmatpush1.bf16.msra.mxu0 0
    %1386 = vmatprep.subr.bf16.mxu0 0
    %1387 = vmatpush1.bf16.msra.mxu0 0
    %1388 = vmatprep.subr.bf16.mxu0 0
    %1389 = vmatpush1.bf16.msra.mxu0 0
    %1390 = vmatprep.subr.bf16.mxu0 0
    %1391 = vmatpush1.bf16.msra.mxu0 0
    %1392 = vmatprep.subr.bf16.mxu0 0
    %1393 = vmatpush1.bf16.msra.mxu0 0
    %1394 = vmatprep.mubr.bf16.mxu0 0
    %1395 = vmatmul.mubr.bf16.gmra.mrb[0].mxu0 %v1234
    %v1396 = vpop.f32.mrb[0].mxu0
    %v1397 = vadd.f32 %v1348, %v1396
    %v1398 = vpop.f32.mrb[0].mxu0
    %v1399 = vpop.f32.mrb[0].mxu0
    %v1400 = vpop.f32.mrb[0].mxu0
    %1401 = vdwg.mxu0
    %v1402 = vld [vmem:[#allocation2 + $0x8] sm:$0x3]
    %v1403 = vadd.f32 %v1402, %v1271
    %v1404 = vxor.u32 %v1403, 2147483648
    %v1405 = vmul.f32 %v1404, 1.442695
    %v1406 = vpow.pop %v1405
    %v1407 = vadd.f32 %v1406, 1.0
    %v1408 = vrcp.pop %v1407
    %v1409 = vmul.f32 1.0, %v1408
    %v1410 = vld [vmem:[#allocation3 + $0x8] sm:$0x3]
    %v1411 = vadd.f32 %v1410, %v1334
    %v1412 = vxor.u32 %v1411, 2147483648
    %v1413 = vmul.f32 %v1412, 1.442695
    %v1414 = vpow.pop %v1413
    %v1415 = vadd.f32 %v1414, 1.0
    %v1416 = vrcp.pop %v1415
    %v1417 = vmul.f32 1.0, %v1416
    %v1418 = vld [vmem:[#allocation4 + $0x8] sm:$0x3]
    %v1419 = vmul.f32 %v1409, %v1397
    %v1420 = vadd.f32 %v1418, %v1419
    %v1421 = vtanh.pop %v1420
    %v1422 = vsub.f32 1.0, %v1417
    %v1423 = vmul.f32 %v1422, %v1421
    %v1424 = vmul.f32 %v1417, %v1207
    %v1425 = vadd.f32 %v1423, %v1424
    %1426 = vst.msk [vmem:[#allocation17 + $0x8] sm:$0x3] %vm553, %v1425
    %v1427 = vpack.c.bf16 %v1425, %v1425
    %v1428 = vld [vmem:[#allocation10] sm:$0xf]
    %v1429 = vld [vmem:[#allocation10 + $0x4] sm:$0xf]
    %v1430 = vld [vmem:[#allocation10 + $0x8] sm:$0xf]
    %v1431 = vld [vmem:[#allocation10 + $0xc] sm:$0xf]
    %v1432 = vld [vmem:[#allocation13] sm:$0x1]
    %v1434 = vlaneseq
    %v1435 = vshrl.u32 %v1434, 7
    %v1436 = vsub.s32 0, %v1435
    %v1437 = vrot.slane %v1432, %v1436
    %v1443 = vunpack.c.l.b16 %v1428
    %v1444 = vunpack.c.l.b16 %v1429
    %v1445 = vunpack.c.l.b16 %v1430
    %v1446 = vunpack.c.l.b16 %v1431
    %v1447 = vpack.c.b16 %v1444, %v1443
    %v1448 = vpack.c.b16 %v1446, %v1445
    %v1452 = vsel %vm150, %v1427, 0
    %1454 = vmatprep.subr.bf16.mxu0 0
    %1455 = vmatpush1.bf16.msra.mxu0 %v1447
    %1456 = vmatprep.subr.bf16.mxu0 0
    %1457 = vmatpush1.bf16.msra.mxu0 %v1448
    %1458 = vmatprep.subr.bf16.mxu0 0
    %1459 = vmatpush1.bf16.msra.mxu0 0
    %1460 = vmatprep.subr.bf16.mxu0 0
    %1461 = vmatpush1.bf16.msra.mxu0 0
    %1462 = vmatprep.subr.bf16.mxu0 0
    %1463 = vmatpush1.bf16.msra.mxu0 0
    %1464 = vmatprep.subr.bf16.mxu0 0
    %1465 = vmatpush1.bf16.msra.mxu0 0
    %1466 = vmatprep.subr.bf16.mxu0 0
    %1467 = vmatpush1.bf16.msra.mxu0 0
    %1468 = vmatprep.subr.bf16.mxu0 0
    %1469 = vmatpush1.bf16.msra.mxu0 0
    %1470 = vmatprep.subr.bf16.mxu0 0
    %1471 = vmatpush1.bf16.msra.mxu0 0
    %1472 = vmatprep.subr.bf16.mxu0 0
    %1473 = vmatpush1.bf16.msra.mxu0 0
    %1474 = vmatprep.subr.bf16.mxu0 0
    %1475 = vmatpush1.bf16.msra.mxu0 0
    %1476 = vmatprep.subr.bf16.mxu0 0
    %1477 = vmatpush1.bf16.msra.mxu0 0
    %1478 = vmatprep.subr.bf16.mxu0 0
    %1479 = vmatpush1.bf16.msra.mxu0 0
    %1480 = vmatprep.subr.bf16.mxu0 0
    %1481 = vmatpush1.bf16.msra.mxu0 0
    %1482 = vmatprep.subr.bf16.mxu0 0
    %1483 = vmatpush1.bf16.msra.mxu0 0
    %1484 = vmatprep.subr.bf16.mxu0 0
    %1485 = vmatpush1.bf16.msra.mxu0 0
    %1486 = vmatprep.mubr.bf16.mxu0 0
    %1487 = vmatmul.mubr.bf16.gmra.mrb[0].mxu0 %v1452
    %v1488 = vpop.f32.mrb[0].mxu0
    %v1489 = vadd.f32 %v1437, %v1488
    %v1490 = vpop.f32.mrb[0].mxu0
    %v1491 = vpop.f32.mrb[0].mxu0
    %v1492 = vpop.f32.mrb[0].mxu0
    %1493 = vdwg.mxu0
    %v1494 = vld [vmem:[%s399] sm:$0xf]
    %v1495 = vld [vmem:[%s399 + $0x4] sm:$0xf]
    %v1496 = vld [vmem:[%s399 + $0x8] sm:$0xf]
    %v1497 = vld [vmem:[%s399 + $0xc] sm:$0xf]
    %v1498 = vld [vmem:[%s404] sm:$0x1]
    %v1500 = vlaneseq
    %v1501 = vshrl.u32 %v1500, 7
    %v1502 = vsub.s32 0, %v1501
    %v1503 = vrot.slane %v1498, %v1502
    %v1509 = vunpack.c.l.b16 %v1494
    %v1510 = vunpack.c.l.b16 %v1495
    %v1511 = vunpack.c.l.b16 %v1496
    %v1512 = vunpack.c.l.b16 %v1497
    %v1513 = vpack.c.b16 %v1510, %v1509
    %v1514 = vpack.c.b16 %v1512, %v1511
    %1517 = vmatprep.subr.bf16.mxu0 0
    %1518 = vmatpush1.bf16.msra.mxu0 %v1513
    %1519 = vmatprep.subr.bf16.mxu0 0
    %1520 = vmatpush1.bf16.msra.mxu0 %v1514
    %1521 = vmatprep.subr.bf16.mxu0 0
    %1522 = vmatpush1.bf16.msra.mxu0 0
    %1523 = vmatprep.subr.bf16.mxu0 0
    %1524 = vmatpush1.bf16.msra.mxu0 0
    %1525 = vmatprep.subr.bf16.mxu0 0
    %1526 = vmatpush1.bf16.msra.mxu0 0
    %1527 = vmatprep.subr.bf16.mxu0 0
    %1528 = vmatpush1.bf16.msra.mxu0 0
    %1529 = vmatprep.subr.bf16.mxu0 0
    %1530 = vmatpush1.bf16.msra.mxu0 0
    %1531 = vmatprep.subr.bf16.mxu0 0
    %1532 = vmatpush1.bf16.msra.mxu0 0
    %1533 = vmatprep.subr.bf16.mxu0 0
    %1534 = vmatpush1.bf16.msra.mxu0 0
    %1535 = vmatprep.subr.bf16.mxu0 0
    %1536 = vmatpush1.bf16.msra.mxu0 0
    %1537 = vmatprep.subr.bf16.mxu0 0
    %1538 = vmatpush1.bf16.msra.mxu0 0
    %1539 = vmatprep.subr.bf16.mxu0 0
    %1540 = vmatpush1.bf16.msra.mxu0 0
    %1541 = vmatprep.subr.bf16.mxu0 0
    %1542 = vmatpush1.bf16.msra.mxu0 0
    %1543 = vmatprep.subr.bf16.mxu0 0
    %1544 = vmatpush1.bf16.msra.mxu0 0
    %1545 = vmatprep.subr.bf16.mxu0 0
    %1546 = vmatpush1.bf16.msra.mxu0 0
    %1547 = vmatprep.subr.bf16.mxu0 0
    %1548 = vmatpush1.bf16.msra.mxu0 0
    %1549 = vmatprep.mubr.bf16.mxu0 0
    %1550 = vmatmul.mubr.bf16.gmra.mrb[0].mxu0 %v1452
    %v1551 = vpop.f32.mrb[0].mxu0
    %v1552 = vadd.f32 %v1503, %v1551
    %v1553 = vpop.f32.mrb[0].mxu0
    %v1554 = vpop.f32.mrb[0].mxu0
    %v1555 = vpop.f32.mrb[0].mxu0
    %1556 = vdwg.mxu0
    %v1557 = vld [vmem:[%s464] sm:$0xf]
    %v1558 = vld [vmem:[%s464 + $0x4] sm:$0xf]
    %v1559 = vld [vmem:[%s464 + $0x8] sm:$0xf]
    %v1560 = vld [vmem:[%s464 + $0xc] sm:$0xf]
    %v1561 = vld [vmem:[%s469] sm:$0x1]
    %v1563 = vlaneseq
    %v1564 = vshrl.u32 %v1563, 7
    %v1565 = vsub.s32 0, %v1564
    %v1566 = vrot.slane %v1561, %v1565
    %v1572 = vunpack.c.l.b16 %v1557
    %v1573 = vunpack.c.l.b16 %v1558
    %v1574 = vunpack.c.l.b16 %v1559
    %v1575 = vunpack.c.l.b16 %v1560
    %v1576 = vpack.c.b16 %v1573, %v1572
    %v1577 = vpack.c.b16 %v1575, %v1574
    %1580 = vmatprep.subr.bf16.mxu0 0
    %1581 = vmatpush1.bf16.msra.mxu0 %v1576
    %1582 = vmatprep.subr.bf16.mxu0 0
    %1583 = vmatpush1.bf16.msra.mxu0 %v1577
    %1584 = vmatprep.subr.bf16.mxu0 0
    %1585 = vmatpush1.bf16.msra.mxu0 0
    %1586 = vmatprep.subr.bf16.mxu0 0
    %1587 = vmatpush1.bf16.msra.mxu0 0
    %1588 = vmatprep.subr.bf16.mxu0 0
    %1589 = vmatpush1.bf16.msra.mxu0 0
    %1590 = vmatprep.subr.bf16.mxu0 0
    %1591 = vmatpush1.bf16.msra.mxu0 0
    %1592 = vmatprep.subr.bf16.mxu0 0
    %1593 = vmatpush1.bf16.msra.mxu0 0
    %1594 = vmatprep.subr.bf16.mxu0 0
    %1595 = vmatpush1.bf16.msra.mxu0 0
    %1596 = vmatprep.subr.bf16.mxu0 0
    %1597 = vmatpush1.bf16.msra.mxu0 0
    %1598 = vmatprep.subr.bf16.mxu0 0
    %1599 = vmatpush1.bf16.msra.mxu0 0
    %1600 = vmatprep.subr.bf16.mxu0 0
    %1601 = vmatpush1.bf16.msra.mxu0 0
    %1602 = vmatprep.subr.bf16.mxu0 0
    %1603 = vmatpush1.bf16.msra.mxu0 0
    %1604 = vmatprep.subr.bf16.mxu0 0
    %1605 = vmatpush1.bf16.msra.mxu0 0
    %1606 = vmatprep.subr.bf16.mxu0 0
    %1607 = vmatpush1.bf16.msra.mxu0 0
    %1608 = vmatprep.subr.bf16.mxu0 0
    %1609 = vmatpush1.bf16.msra.mxu0 0
    %1610 = vmatprep.subr.bf16.mxu0 0
    %1611 = vmatpush1.bf16.msra.mxu0 0
    %1612 = vmatprep.mubr.bf16.mxu0 0
    %1613 = vmatmul.mubr.bf16.gmra.mrb[0].mxu0 %v1452
    %v1614 = vpop.f32.mrb[0].mxu0
    %v1615 = vadd.f32 %v1566, %v1614
    %v1616 = vpop.f32.mrb[0].mxu0
    %v1617 = vpop.f32.mrb[0].mxu0
    %v1618 = vpop.f32.mrb[0].mxu0
    %1619 = vdwg.mxu0
    %v1620 = vld [vmem:[#allocation2 + $0xa] sm:$0x3]
    %v1621 = vadd.f32 %v1620, %v1489
    %v1622 = vxor.u32 %v1621, 2147483648
    %v1623 = vmul.f32 %v1622, 1.442695
    %v1624 = vpow.pop %v1623
    %v1625 = vadd.f32 %v1624, 1.0
    %v1626 = vrcp.pop %v1625
    %v1627 = vmul.f32 1.0, %v1626
    %v1628 = vld [vmem:[#allocation3 + $0xa] sm:$0x3]
    %v1629 = vadd.f32 %v1628, %v1552
    %v1630 = vxor.u32 %v1629, 2147483648
    %v1631 = vmul.f32 %v1630, 1.442695
    %v1632 = vpow.pop %v1631
    %v1633 = vadd.f32 %v1632, 1.0
    %v1634 = vrcp.pop %v1633
    %v1635 = vmul.f32 1.0, %v1634
    %v1636 = vld [vmem:[#allocation4 + $0xa] sm:$0x3]
    %v1637 = vmul.f32 %v1627, %v1615
    %v1638 = vadd.f32 %v1636, %v1637
    %v1639 = vtanh.pop %v1638
    %v1640 = vsub.f32 1.0, %v1635
    %v1641 = vmul.f32 %v1640, %v1639
    %v1642 = vmul.f32 %v1635, %v1425
    %v1643 = vadd.f32 %v1641, %v1642
    %1644 = vst.msk [vmem:[#allocation17 + $0xa] sm:$0x3] %vm553, %v1643
    %v1645 = vpack.c.bf16 %v1643, %v1643
    %v1646 = vld [vmem:[#allocation10] sm:$0xf]
    %v1647 = vld [vmem:[#allocation10 + $0x4] sm:$0xf]
    %v1648 = vld [vmem:[#allocation10 + $0x8] sm:$0xf]
    %v1649 = vld [vmem:[#allocation10 + $0xc] sm:$0xf]
    %v1650 = vld [vmem:[#allocation13] sm:$0x1]
    %v1652 = vlaneseq
    %v1653 = vshrl.u32 %v1652, 7
    %v1654 = vsub.s32 0, %v1653
    %v1655 = vrot.slane %v1650, %v1654
    %v1661 = vunpack.c.l.b16 %v1646
    %v1662 = vunpack.c.l.b16 %v1647
    %v1663 = vunpack.c.l.b16 %v1648
    %v1664 = vunpack.c.l.b16 %v1649
    %v1665 = vpack.c.b16 %v1662, %v1661
    %v1666 = vpack.c.b16 %v1664, %v1663
    %v1670 = vsel %vm150, %v1645, 0
    %1672 = vmatprep.subr.bf16.mxu0 0
    %1673 = vmatpush1.bf16.msra.mxu0 %v1665
    %1674 = vmatprep.subr.bf16.mxu0 0
    %1675 = vmatpush1.bf16.msra.mxu0 %v1666
    %1676 = vmatprep.subr.bf16.mxu0 0
    %1677 = vmatpush1.bf16.msra.mxu0 0
    %1678 = vmatprep.subr.bf16.mxu0 0
    %1679 = vmatpush1.bf16.msra.mxu0 0
    %1680 = vmatprep.subr.bf16.mxu0 0
    %1681 = vmatpush1.bf16.msra.mxu0 0
    %1682 = vmatprep.subr.bf16.mxu0 0
    %1683 = vmatpush1.bf16.msra.mxu0 0
    %1684 = vmatprep.subr.bf16.mxu0 0
    %1685 = vmatpush1.bf16.msra.mxu0 0
    %1686 = vmatprep.subr.bf16.mxu0 0
    %1687 = vmatpush1.bf16.msra.mxu0 0
    %1688 = vmatprep.subr.bf16.mxu0 0
    %1689 = vmatpush1.bf16.msra.mxu0 0
    %1690 = vmatprep.subr.bf16.mxu0 0
    %1691 = vmatpush1.bf16.msra.mxu0 0
    %1692 = vmatprep.subr.bf16.mxu0 0
    %1693 = vmatpush1.bf16.msra.mxu0 0
    %1694 = vmatprep.subr.bf16.mxu0 0
    %1695 = vmatpush1.bf16.msra.mxu0 0
    %1696 = vmatprep.subr.bf16.mxu0 0
    %1697 = vmatpush1.bf16.msra.mxu0 0
    %1698 = vmatprep.subr.bf16.mxu0 0
    %1699 = vmatpush1.bf16.msra.mxu0 0
    %1700 = vmatprep.subr.bf16.mxu0 0
    %1701 = vmatpush1.bf16.msra.mxu0 0
    %1702 = vmatprep.subr.bf16.mxu0 0
    %1703 = vmatpush1.bf16.msra.mxu0 0
    %1704 = vmatprep.mubr.bf16.mxu0 0
    %1705 = vmatmul.mubr.bf16.gmra.mrb[0].mxu0 %v1670
    %v1706 = vpop.f32.mrb[0].mxu0
    %v1707 = vadd.f32 %v1655, %v1706
    %v1708 = vpop.f32.mrb[0].mxu0
    %v1709 = vpop.f32.mrb[0].mxu0
    %v1710 = vpop.f32.mrb[0].mxu0
    %1711 = vdwg.mxu0
    %v1712 = vld [vmem:[%s399] sm:$0xf]
    %v1713 = vld [vmem:[%s399 + $0x4] sm:$0xf]
    %v1714 = vld [vmem:[%s399 + $0x8] sm:$0xf]
    %v1715 = vld [vmem:[%s399 + $0xc] sm:$0xf]
    %v1716 = vld [vmem:[%s404] sm:$0x1]
    %v1718 = vlaneseq
    %v1719 = vshrl.u32 %v1718, 7
    %v1720 = vsub.s32 0, %v1719
    %v1721 = vrot.slane %v1716, %v1720
    %v1727 = vunpack.c.l.b16 %v1712
    %v1728 = vunpack.c.l.b16 %v1713
    %v1729 = vunpack.c.l.b16 %v1714
    %v1730 = vunpack.c.l.b16 %v1715
    %v1731 = vpack.c.b16 %v1728, %v1727
    %v1732 = vpack.c.b16 %v1730, %v1729
    %1735 = vmatprep.subr.bf16.mxu0 0
    %1736 = vmatpush1.bf16.msra.mxu0 %v1731
    %1737 = vmatprep.subr.bf16.mxu0 0
    %1738 = vmatpush1.bf16.msra.mxu0 %v1732
    %1739 = vmatprep.subr.bf16.mxu0 0
    %1740 = vmatpush1.bf16.msra.mxu0 0
    %1741 = vmatprep.subr.bf16.mxu0 0
    %1742 = vmatpush1.bf16.msra.mxu0 0
    %1743 = vmatprep.subr.bf16.mxu0 0
    %1744 = vmatpush1.bf16.msra.mxu0 0
    %1745 = vmatprep.subr.bf16.mxu0 0
    %1746 = vmatpush1.bf16.msra.mxu0 0
    %1747 = vmatprep.subr.bf16.mxu0 0
    %1748 = vmatpush1.bf16.msra.mxu0 0
    %1749 = vmatprep.subr.bf16.mxu0 0
    %1750 = vmatpush1.bf16.msra.mxu0 0
    %1751 = vmatprep.subr.bf16.mxu0 0
    %1752 = vmatpush1.bf16.msra.mxu0 0
    %1753 = vmatprep.subr.bf16.mxu0 0
    %1754 = vmatpush1.bf16.msra.mxu0 0
    %1755 = vmatprep.subr.bf16.mxu0 0
    %1756 = vmatpush1.bf16.msra.mxu0 0
    %1757 = vmatprep.subr.bf16.mxu0 0
    %1758 = vmatpush1.bf16.msra.mxu0 0
    %1759 = vmatprep.subr.bf16.mxu0 0
    %1760 = vmatpush1.bf16.msra.mxu0 0
    %1761 = vmatprep.subr.bf16.mxu0 0
    %1762 = vmatpush1.bf16.msra.mxu0 0
    %1763 = vmatprep.subr.bf16.mxu0 0
    %1764 = vmatpush1.bf16.msra.mxu0 0
    %1765 = vmatprep.subr.bf16.mxu0 0
    %1766 = vmatpush1.bf16.msra.mxu0 0
    %1767 = vmatprep.mubr.bf16.mxu0 0
    %1768 = vmatmul.mubr.bf16.gmra.mrb[0].mxu0 %v1670
    %v1769 = vpop.f32.mrb[0].mxu0
    %v1770 = vadd.f32 %v1721, %v1769
    %v1771 = vpop.f32.mrb[0].mxu0
    %v1772 = vpop.f32.mrb[0].mxu0
    %v1773 = vpop.f32.mrb[0].mxu0
    %1774 = vdwg.mxu0
    %v1775 = vld [vmem:[%s464] sm:$0xf]
    %v1776 = vld [vmem:[%s464 + $0x4] sm:$0xf]
    %v1777 = vld [vmem:[%s464 + $0x8] sm:$0xf]
    %v1778 = vld [vmem:[%s464 + $0xc] sm:$0xf]
    %v1779 = vld [vmem:[%s469] sm:$0x1]
    %v1781 = vlaneseq
    %v1782 = vshrl.u32 %v1781, 7
    %v1783 = vsub.s32 0, %v1782
    %v1784 = vrot.slane %v1779, %v1783
    %v1790 = vunpack.c.l.b16 %v1775
    %v1791 = vunpack.c.l.b16 %v1776
    %v1792 = vunpack.c.l.b16 %v1777
    %v1793 = vunpack.c.l.b16 %v1778
    %v1794 = vpack.c.b16 %v1791, %v1790
    %v1795 = vpack.c.b16 %v1793, %v1792
    %1798 = vmatprep.subr.bf16.mxu0 0
    %1799 = vmatpush1.bf16.msra.mxu0 %v1794
    %1800 = vmatprep.subr.bf16.mxu0 0
    %1801 = vmatpush1.bf16.msra.mxu0 %v1795
    %1802 = vmatprep.subr.bf16.mxu0 0
    %1803 = vmatpush1.bf16.msra.mxu0 0
    %1804 = vmatprep.subr.bf16.mxu0 0
    %1805 = vmatpush1.bf16.msra.mxu0 0
    %1806 = vmatprep.subr.bf16.mxu0 0
    %1807 = vmatpush1.bf16.msra.mxu0 0
    %1808 = vmatprep.subr.bf16.mxu0 0
    %1809 = vmatpush1.bf16.msra.mxu0 0
    %1810 = vmatprep.subr.bf16.mxu0 0
    %1811 = vmatpush1.bf16.msra.mxu0 0
    %1812 = vmatprep.subr.bf16.mxu0 0
    %1813 = vmatpush1.bf16.msra.mxu0 0
    %1814 = vmatprep.subr.bf16.mxu0 0
    %1815 = vmatpush1.bf16.msra.mxu0 0
    %1816 = vmatprep.subr.bf16.mxu0 0
    %1817 = vmatpush1.bf16.msra.mxu0 0
    %1818 = vmatprep.subr.bf16.mxu0 0
    %1819 = vmatpush1.bf16.msra.mxu0 0
    %1820 = vmatprep.subr.bf16.mxu0 0
    %1821 = vmatpush1.bf16.msra.mxu0 0
    %1822 = vmatprep.subr.bf16.mxu0 0
    %1823 = vmatpush1.bf16.msra.mxu0 0
    %1824 = vmatprep.subr.bf16.mxu0 0
    %1825 = vmatpush1.bf16.msra.mxu0 0
    %1826 = vmatprep.subr.bf16.mxu0 0
    %1827 = vmatpush1.bf16.msra.mxu0 0
    %1828 = vmatprep.subr.bf16.mxu0 0
    %1829 = vmatpush1.bf16.msra.mxu0 0
    %1830 = vmatprep.mubr.bf16.mxu0 0
    %1831 = vmatmul.mubr.bf16.gmra.mrb[0].mxu0 %v1670
    %v1832 = vpop.f32.mrb[0].mxu0
    %v1833 = vadd.f32 %v1784, %v1832
    %v1834 = vpop.f32.mrb[0].mxu0
    %v1835 = vpop.f32.mrb[0].mxu0
    %v1836 = vpop.f32.mrb[0].mxu0
    %1837 = vdwg.mxu0
    %v1838 = vld [vmem:[#allocation2 + $0xc] sm:$0x3]
    %v1839 = vadd.f32 %v1838, %v1707
    %v1840 = vxor.u32 %v1839, 2147483648
    %v1841 = vmul.f32 %v1840, 1.442695
    %v1842 = vpow.pop %v1841
    %v1843 = vadd.f32 %v1842, 1.0
    %v1844 = vrcp.pop %v1843
    %v1845 = vmul.f32 1.0, %v1844
    %v1846 = vld [vmem:[#allocation3 + $0xc] sm:$0x3]
    %v1847 = vadd.f32 %v1846, %v1770
    %v1848 = vxor.u32 %v1847, 2147483648
    %v1849 = vmul.f32 %v1848, 1.442695
    %v1850 = vpow.pop %v1849
    %v1851 = vadd.f32 %v1850, 1.0
    %v1852 = vrcp.pop %v1851
    %v1853 = vmul.f32 1.0, %v1852
    %v1854 = vld [vmem:[#allocation4 + $0xc] sm:$0x3]
    %v1855 = vmul.f32 %v1845, %v1833
    %v1856 = vadd.f32 %v1854, %v1855
    %v1857 = vtanh.pop %v1856
    %v1858 = vsub.f32 1.0, %v1853
    %v1859 = vmul.f32 %v1858, %v1857
    %v1860 = vmul.f32 %v1853, %v1643
    %v1861 = vadd.f32 %v1859, %v1860
    %1862 = vst.msk [vmem:[#allocation17 + $0xc] sm:$0x3] %vm553, %v1861
    %v1863 = vpack.c.bf16 %v1861, %v1861
    %v1864 = vld [vmem:[#allocation10] sm:$0xf]
    %v1865 = vld [vmem:[#allocation10 + $0x4] sm:$0xf]
    %v1866 = vld [vmem:[#allocation10 + $0x8] sm:$0xf]
    %v1867 = vld [vmem:[#allocation10 + $0xc] sm:$0xf]
    %v1868 = vld [vmem:[#allocation13] sm:$0x1]
    %v1870 = vlaneseq
    %v1871 = vshrl.u32 %v1870, 7
    %v1872 = vsub.s32 0, %v1871
    %v1873 = vrot.slane %v1868, %v1872
    %v1879 = vunpack.c.l.b16 %v1864
    %v1880 = vunpack.c.l.b16 %v1865
    %v1881 = vunpack.c.l.b16 %v1866
    %v1882 = vunpack.c.l.b16 %v1867
    %v1883 = vpack.c.b16 %v1880, %v1879
    %v1884 = vpack.c.b16 %v1882, %v1881
    %v1888 = vsel %vm150, %v1863, 0
    %1890 = vmatprep.subr.bf16.mxu0 0
    %1891 = vmatpush1.bf16.msra.mxu0 %v1883
    %1892 = vmatprep.subr.bf16.mxu0 0
    %1893 = vmatpush1.bf16.msra.mxu0 %v1884
    %1894 = vmatprep.subr.bf16.mxu0 0
    %1895 = vmatpush1.bf16.msra.mxu0 0
    %1896 = vmatprep.subr.bf16.mxu0 0
    %1897 = vmatpush1.bf16.msra.mxu0 0
    %1898 = vmatprep.subr.bf16.mxu0 0
    %1899 = vmatpush1.bf16.msra.mxu0 0
    %1900 = vmatprep.subr.bf16.mxu0 0
    %1901 = vmatpush1.bf16.msra.mxu0 0
    %1902 = vmatprep.subr.bf16.mxu0 0
    %1903 = vmatpush1.bf16.msra.mxu0 0
    %1904 = vmatprep.subr.bf16.mxu0 0
    %1905 = vmatpush1.bf16.msra.mxu0 0
    %1906 = vmatprep.subr.bf16.mxu0 0
    %1907 = vmatpush1.bf16.msra.mxu0 0
    %1908 = vmatprep.subr.bf16.mxu0 0
    %1909 = vmatpush1.bf16.msra.mxu0 0
    %1910 = vmatprep.subr.bf16.mxu0 0
    %1911 = vmatpush1.bf16.msra.mxu0 0
    %1912 = vmatprep.subr.bf16.mxu0 0
    %1913 = vmatpush1.bf16.msra.mxu0 0
    %1914 = vmatprep.subr.bf16.mxu0 0
    %1915 = vmatpush1.bf16.msra.mxu0 0
    %1916 = vmatprep.subr.bf16.mxu0 0
    %1917 = vmatpush1.bf16.msra.mxu0 0
    %1918 = vmatprep.subr.bf16.mxu0 0
    %1919 = vmatpush1.bf16.msra.mxu0 0
    %1920 = vmatprep.subr.bf16.mxu0 0
    %1921 = vmatpush1.bf16.msra.mxu0 0
    %1922 = vmatprep.mubr.bf16.mxu0 0
    %1923 = vmatmul.mubr.bf16.gmra.mrb[0].mxu0 %v1888
    %v1924 = vpop.f32.mrb[0].mxu0
    %v1925 = vadd.f32 %v1873, %v1924
    %v1926 = vpop.f32.mrb[0].mxu0
    %v1927 = vpop.f32.mrb[0].mxu0
    %v1928 = vpop.f32.mrb[0].mxu0
    %1929 = vdwg.mxu0
    %v1930 = vld [vmem:[%s399] sm:$0xf]
    %v1931 = vld [vmem:[%s399 + $0x4] sm:$0xf]
    %v1932 = vld [vmem:[%s399 + $0x8] sm:$0xf]
    %v1933 = vld [vmem:[%s399 + $0xc] sm:$0xf]
    %v1934 = vld [vmem:[%s404] sm:$0x1]
    %v1936 = vlaneseq
    %v1937 = vshrl.u32 %v1936, 7
    %v1938 = vsub.s32 0, %v1937
    %v1939 = vrot.slane %v1934, %v1938
    %v1945 = vunpack.c.l.b16 %v1930
    %v1946 = vunpack.c.l.b16 %v1931
    %v1947 = vunpack.c.l.b16 %v1932
    %v1948 = vunpack.c.l.b16 %v1933
    %v1949 = vpack.c.b16 %v1946, %v1945
    %v1950 = vpack.c.b16 %v1948, %v1947
    %1953 = vmatprep.subr.bf16.mxu0 0
    %1954 = vmatpush1.bf16.msra.mxu0 %v1949
    %1955 = vmatprep.subr.bf16.mxu0 0
    %1956 = vmatpush1.bf16.msra.mxu0 %v1950
    %1957 = vmatprep.subr.bf16.mxu0 0
    %1958 = vmatpush1.bf16.msra.mxu0 0
    %1959 = vmatprep.subr.bf16.mxu0 0
    %1960 = vmatpush1.bf16.msra.mxu0 0
    %1961 = vmatprep.subr.bf16.mxu0 0
    %1962 = vmatpush1.bf16.msra.mxu0 0
    %1963 = vmatprep.subr.bf16.mxu0 0
    %1964 = vmatpush1.bf16.msra.mxu0 0
    %1965 = vmatprep.subr.bf16.mxu0 0
    %1966 = vmatpush1.bf16.msra.mxu0 0
    %1967 = vmatprep.subr.bf16.mxu0 0
    %1968 = vmatpush1.bf16.msra.mxu0 0
    %1969 = vmatprep.subr.bf16.mxu0 0
    %1970 = vmatpush1.bf16.msra.mxu0 0
    %1971 = vmatprep.subr.bf16.mxu0 0
    %1972 = vmatpush1.bf16.msra.mxu0 0
    %1973 = vmatprep.subr.bf16.mxu0 0
    %1974 = vmatpush1.bf16.msra.mxu0 0
    %1975 = vmatprep.subr.bf16.mxu0 0
    %1976 = vmatpush1.bf16.msra.mxu0 0
    %1977 = vmatprep.subr.bf16.mxu0 0
    %1978 = vmatpush1.bf16.msra.mxu0 0
    %1979 = vmatprep.subr.bf16.mxu0 0
    %1980 = vmatpush1.bf16.msra.mxu0 0
    %1981 = vmatprep.subr.bf16.mxu0 0
    %1982 = vmatpush1.bf16.msra.mxu0 0
    %1983 = vmatprep.subr.bf16.mxu0 0
    %1984 = vmatpush1.bf16.msra.mxu0 0
    %1985 = vmatprep.mubr.bf16.mxu0 0
    %1986 = vmatmul.mubr.bf16.gmra.mrb[0].mxu0 %v1888
    %v1987 = vpop.f32.mrb[0].mxu0
    %v1988 = vadd.f32 %v1939, %v1987
    %v1989 = vpop.f32.mrb[0].mxu0
    %v1990 = vpop.f32.mrb[0].mxu0
    %v1991 = vpop.f32.mrb[0].mxu0
    %1992 = vdwg.mxu0
    %v1993 = vld [vmem:[%s464] sm:$0xf]
    %v1994 = vld [vmem:[%s464 + $0x4] sm:$0xf]
    %v1995 = vld [vmem:[%s464 + $0x8] sm:$0xf]
    %v1996 = vld [vmem:[%s464 + $0xc] sm:$0xf]
    %v1997 = vld [vmem:[%s469] sm:$0x1]
    %v1999 = vlaneseq
    %v2000 = vshrl.u32 %v1999, 7
    %v2001 = vsub.s32 0, %v2000
    %v2002 = vrot.slane %v1997, %v2001
    %v2008 = vunpack.c.l.b16 %v1993
    %v2009 = vunpack.c.l.b16 %v1994
    %v2010 = vunpack.c.l.b16 %v1995
    %v2011 = vunpack.c.l.b16 %v1996
    %v2012 = vpack.c.b16 %v2009, %v2008
    %v2013 = vpack.c.b16 %v2011, %v2010
    %2016 = vmatprep.subr.bf16.mxu0 0
    %2017 = vmatpush1.bf16.msra.mxu0 %v2012
    %2018 = vmatprep.subr.bf16.mxu0 0
    %2019 = vmatpush1.bf16.msra.mxu0 %v2013
    %2020 = vmatprep.subr.bf16.mxu0 0
    %2021 = vmatpush1.bf16.msra.mxu0 0
    %2022 = vmatprep.subr.bf16.mxu0 0
    %2023 = vmatpush1.bf16.msra.mxu0 0
    %2024 = vmatprep.subr.bf16.mxu0 0
    %2025 = vmatpush1.bf16.msra.mxu0 0
    %2026 = vmatprep.subr.bf16.mxu0 0
    %2027 = vmatpush1.bf16.msra.mxu0 0
    %2028 = vmatprep.subr.bf16.mxu0 0
    %2029 = vmatpush1.bf16.msra.mxu0 0
    %2030 = vmatprep.subr.bf16.mxu0 0
    %2031 = vmatpush1.bf16.msra.mxu0 0
    %2032 = vmatprep.subr.bf16.mxu0 0
    %2033 = vmatpush1.bf16.msra.mxu0 0
    %2034 = vmatprep.subr.bf16.mxu0 0
    %2035 = vmatpush1.bf16.msra.mxu0 0
    %2036 = vmatprep.subr.bf16.mxu0 0
    %2037 = vmatpush1.bf16.msra.mxu0 0
    %2038 = vmatprep.subr.bf16.mxu0 0
    %2039 = vmatpush1.bf16.msra.mxu0 0
    %2040 = vmatprep.subr.bf16.mxu0 0
    %2041 = vmatpush1.bf16.msra.mxu0 0
    %2042 = vmatprep.subr.bf16.mxu0 0
    %2043 = vmatpush1.bf16.msra.mxu0 0
    %2044 = vmatprep.subr.bf16.mxu0 0
    %2045 = vmatpush1.bf16.msra.mxu0 0
    %2046 = vmatprep.subr.bf16.mxu0 0
    %2047 = vmatpush1.bf16.msra.mxu0 0
    %2048 = vmatprep.mubr.bf16.mxu0 0
    %2049 = vmatmul.mubr.bf16.gmra.mrb[0].mxu0 %v1888
    %v2050 = vpop.f32.mrb[0].mxu0
    %v2051 = vadd.f32 %v2002, %v2050
    %v2052 = vpop.f32.mrb[0].mxu0
    %v2053 = vpop.f32.mrb[0].mxu0
    %v2054 = vpop.f32.mrb[0].mxu0
    %2055 = vdwg.mxu0
    %v2056 = vld [vmem:[#allocation2 + $0xe] sm:$0x3]
    %v2057 = vadd.f32 %v2056, %v1925
    %v2058 = vxor.u32 %v2057, 2147483648
    %v2059 = vmul.f32 %v2058, 1.442695
    %v2060 = vpow.pop %v2059
    %v2061 = vadd.f32 %v2060, 1.0
    %v2062 = vrcp.pop %v2061
    %v2063 = vmul.f32 1.0, %v2062
    %v2064 = vld [vmem:[#allocation3 + $0xe] sm:$0x3]
    %v2065 = vadd.f32 %v2064, %v1988
    %v2066 = vxor.u32 %v2065, 2147483648
    %v2067 = vmul.f32 %v2066, 1.442695
    %v2068 = vpow.pop %v2067
    %v2069 = vadd.f32 %v2068, 1.0
    %v2070 = vrcp.pop %v2069
    %v2071 = vmul.f32 1.0, %v2070
    %v2072 = vld [vmem:[#allocation4 + $0xe] sm:$0x3]
    %v2073 = vmul.f32 %v2063, %v2051
    %v2074 = vadd.f32 %v2072, %v2073
    %v2075 = vtanh.pop %v2074
    %v2076 = vsub.f32 1.0, %v2071
    %v2077 = vmul.f32 %v2076, %v2075
    %v2078 = vmul.f32 %v2071, %v1861
    %v2079 = vadd.f32 %v2077, %v2078
    %2080 = vst.msk [vmem:[#allocation17 + $0xe] sm:$0x3] %vm553, %v2079
    %v2081 = vld [vmem:[#allocation17] sm:$0xff]
    %v2082 = vld [vmem:[#allocation17 + $0x8] sm:$0xff]
    %v2083 = vpack.c.bf16 %v2082, %v2081
    %v2084 = vld [vmem:[#allocation14] sm:$0xf]
    %v2085 = vld [vmem:[#allocation14 + $0x4] sm:$0xf]
    %v2086 = vld [vmem:[#allocation14 + $0x8] sm:$0xf]
    %v2087 = vld [vmem:[#allocation14 + $0xc] sm:$0xf]
    %v2088 = vld [vmem:[#allocation16] sm:$0x1]
    %v2090 = vlaneseq
    %v2091 = vshrl.u32 %v2090, 7
    %v2092 = vsub.s32 0, %v2091
    %v2093 = vrot.slane %v2088, %v2092
    %v2099 = vunpack.c.l.b16 %v2084
    %v2100 = vunpack.c.l.b16 %v2085
    %v2101 = vunpack.c.l.b16 %v2086
    %v2102 = vunpack.c.l.b16 %v2087
    %v2103 = vpack.c.b16 %v2100, %v2099
    %v2104 = vpack.c.b16 %v2102, %v2101
    %v2108 = vsel %vm150, %v2083, 0
    %2110 = vmatprep.subr.bf16.mxu0 0
    %2111 = vmatpush1.bf16.msra.mxu0 %v2103
    %2112 = vmatprep.subr.bf16.mxu0 0
    %2113 = vmatpush1.bf16.msra.mxu0 %v2104
    %2114 = vmatprep.subr.bf16.mxu0 0
    %2115 = vmatpush1.bf16.msra.mxu0 0
    %2116 = vmatprep.subr.bf16.mxu0 0
    %2117 = vmatpush1.bf16.msra.mxu0 0
    %2118 = vmatprep.subr.bf16.mxu0 0
    %2119 = vmatpush1.bf16.msra.mxu0 0
    %2120 = vmatprep.subr.bf16.mxu0 0
    %2121 = vmatpush1.bf16.msra.mxu0 0
    %2122 = vmatprep.subr.bf16.mxu0 0
    %2123 = vmatpush1.bf16.msra.mxu0 0
    %2124 = vmatprep.subr.bf16.mxu0 0
    %2125 = vmatpush1.bf16.msra.mxu0 0
    %2126 = vmatprep.subr.bf16.mxu0 0
    %2127 = vmatpush1.bf16.msra.mxu0 0
    %2128 = vmatprep.subr.bf16.mxu0 0
    %2129 = vmatpush1.bf16.msra.mxu0 0
    %2130 = vmatprep.subr.bf16.mxu0 0
    %2131 = vmatpush1.bf16.msra.mxu0 0
    %2132 = vmatprep.subr.bf16.mxu0 0
    %2133 = vmatpush1.bf16.msra.mxu0 0
    %2134 = vmatprep.subr.bf16.mxu0 0
    %2135 = vmatpush1.bf16.msra.mxu0 0
    %2136 = vmatprep.subr.bf16.mxu0 0
    %2137 = vmatpush1.bf16.msra.mxu0 0
    %2138 = vmatprep.subr.bf16.mxu0 0
    %2139 = vmatpush1.bf16.msra.mxu0 0
    %2140 = vmatprep.subr.bf16.mxu0 0
    %2141 = vmatpush1.bf16.msra.mxu0 0
    %2142 = vmatprep.mubr.bf16.mxu0 0
    %2143 = vmatmul.mubr.bf16.gmra.mrb[0].mxu0 %v2108
    %v2144 = vpop.f32.mrb[0].mxu0
    %v2145 = vadd.f32 %v2093, %v2144
    %v2146 = vpop.f32.mrb[0].mxu0
    %v2147 = vpop.f32.mrb[0].mxu0
    %v2148 = vadd.f32 %v2093, %v2147
    %v2149 = vpop.f32.mrb[0].mxu0
    %2150 = vdwg.mxu0
    %2151 = vst [vmem:[#allocation18] sm:$0xff] %v2145
    %2152 = vst [vmem:[#allocation18 + $0x8] sm:$0xff] %v2148
    // Predicated region
    $region58: #{decoder_forward.3} parent=1 // pred_check
      _
    $region59: #{decoder_forward.3} parent=1 // pred_check_branch
      %2154 = sbr.rel (0) target = $region61
    $region60: #{decoder_forward.3} parent=1 // pred_region
      %s2156 = ssub.s32 256, 256
      %2157 = vsyncadd [#allocation7], %s2156
      %s2158 = sshll.u32 [#allocation17], 4
      %s2159 = int_to_ptr.vmem [resolvable:$true] %s2158
      %2164 = dma.vmem_to_hbm [thread:$0]  %s2159, 256, %s7, [#allocation7], 128, 128, 8
    $region61: #{decoder_forward.3} parent=1 // pred_fallthru
      _
    // Predicated region
    $region62: #{decoder_forward.3} parent=1 // pred_check
      _
    $region63: #{decoder_forward.3} parent=1 // pred_check_branch
      %2166 = sbr.rel (0) target = $region65
    $region64: #{decoder_forward.3} parent=1 // pred_region
      %s2168 = ssub.s32 256, 256
      %2169 = vsyncadd [#allocation19], %s2168
      %s2170 = sshll.u32 [#allocation18], 4
      %s2171 = int_to_ptr.vmem [resolvable:$true] %s2170
      %2176 = dma.vmem_to_hbm [thread:$0]  %s2171, 256, %s8, [#allocation19], 128, 128, 8
    $region65: #{decoder_forward.3} parent=1 // pred_fallthru
      _
    // Predicated region
    $region66: #{decoder_forward.3} parent=1 // pred_check
      _
    $region67: #{decoder_forward.3} parent=1 // pred_check_branch
      %2178 = sbr.rel (0) target = $region69
    $region68: #{decoder_forward.3} parent=1 // pred_region
      %2179 = dma.done [#allocation7], 256
    $region69: #{decoder_forward.3} parent=1 // pred_fallthru
      _
    // Predicated region
    $region70: #{decoder_forward.3} parent=1 // pred_check
      _
    $region71: #{decoder_forward.3} parent=1 // pred_check_branch
      %2181 = sbr.rel (0) target = $region73
    $region72: #{decoder_forward.3} parent=1 // pred_region
      %2182 = dma.done [#allocation19], 256
    $region73: #{decoder_forward.3} parent=1 // pred_fallthru
      _
    %2183 = vsyncpa [#allocation6], 1
    %2184 = vsyncpa [#allocation9], 1
    %2185 = vsyncpa [#allocation12], 1
    %2186 = vsyncpa [#allocation15], 1
    %2187 = vsyncpa [#allocation7], 1
    %2188 = vsyncpa [#allocation19], 1

</llo_original>
